<compile_context>
chip_gen: v5e
topology: v5e:2x2
jax: 0.10.0
libtpu: 0.0.40
codegen_flags: <defaults>
</compile_context>

<pallas_src>
import functools

import jax
import jax.numpy as jnp
from jax.experimental import pallas as pl
from jax.experimental.pallas import tpu as pltpu

KH, KW, PAD = 5, 5, 2        # both convs in the reference: Conv2d(k=5, s=1, p=2)
MAX_SAMPLES_PER_STEP = 32    # per-step batching ceiling (VMEM is a non-issue here)


# ----------------------------- fused Pallas kernel -----------------------------

def fused_cnn_kernel(p_ref, w1_ref, b1_ref, w2_ref, b2_ref, v2_ref, bo_ref,
                     o_ref, xp1_ref, *, kh, kw):
    # p_ref : (B, k*k, kh*kw) bf16   phase-row-ordered im2col patches of input
    # w1_ref: (kh*kw, c1)     bf16   conv1 weight
    # b1_ref: (1, c1)         f32
    # w2_ref: (kh*kw*c1, c2)  bf16   conv2 weight, im2col-flattened (di,dj,c)->c2
    # b2_ref: (1, c2)         f32
    # v2_ref: (s2, s1, c2)    f32    masked / permuted Linear weight slab
    # bo_ref: (1, 1)          f32    Linear bias
    # o_ref : (1, 1, B)       f32    per-step lane-dense output row
    # xp1_ref: VMEM (B, s1+2p, s1+2p, c1) f32 padded pool1 map (scratch)
    pad = (kh - 1) // 2
    B, kk, taps = p_ref.shape
    c1 = w1_ref.shape[1]
    c2 = w2_ref.shape[1]
    s1 = xp1_ref.shape[1] - 2 * pad        # spatial after pool1 (k/2)
    s2 = s1 // 2                           # spatial after pool2 (k/4)
    q = s1 * s1                            # pool1 pixels per sample
    phases = kk // q                       # 4 (the 2x2 pooling phases)

    # ---- conv1 + ReLU: one (B*k*k, 25) x (25, c1) bf16 MXU matmul, f32 acc --
    a1 = jnp.dot(p_ref[...].reshape(B * kk, taps), w1_ref[...],
                 preferred_element_type=jnp.float32)
    a1 = jnp.maximum(a1 + b1_ref[...], 0.0)                      # (B*kk, c1)

    # ---- maxpool1: rows are (sample, phase, ho, wo) -> max of 4 row blocks --
    a1 = a1.reshape(B, phases, q, c1)
    p1 = jnp.maximum(jnp.maximum(a1[:, 0], a1[:, 1]),
                     jnp.maximum(a1[:, 2], a1[:, 3]))             # (B, q, c1)
    p1 = p1.reshape(B, s1, s1, c1)

    # ---- padded pool1 map: ONE full-buffer store (halo zeros via concat) ----
    zr = jnp.zeros((B, pad, s1, c1), jnp.float32)
    zc = jnp.zeros((B, s1 + 2 * pad, pad, c1), jnp.float32)
    xp1_ref[...] = jnp.concatenate(
        [zc, jnp.concatenate([zr, p1, zr], axis=1), zc], axis=2)

    # ---- conv2 + ReLU: single im2col matmul (B*q, kh*kw*c1) x (..., c2) -----
    cols = [xp1_ref[:, di:di + s1, dj:dj + s1, :]
            for di in range(kh) for dj in range(kw)]
    col = jnp.concatenate(cols, axis=-1)                          # (B,s1,s1,25*c1)
    col = col.reshape(B * q, kh * kw * c1).astype(w2_ref.dtype)
    a2 = jnp.dot(col, w2_ref[...], preferred_element_type=jnp.float32)
    a2 = jnp.maximum(a2 + b2_ref[...], 0.0)                       # (B*q, c2)

    # ---- maxpool2, rows: split h into (s2, 2) on a major axis ---------------
    a2 = a2.reshape(B, s2, 2, s1, c2)
    m = jnp.maximum(a2[:, :, 0], a2[:, :, 1])                     # (B,s2,s1,c2)

    # ---- maxpool2, cols: neighbour max via XLU sublane roll; odd columns
    #      (including the wrapped-around one) are zero-weighted in v2, so no
    #      compaction of the pooled map is ever needed.
    mm = jnp.maximum(m, pltpu.roll(m, shift=s1 - 1, axis=2))      # (B,s2,s1,c2)

    # ---- Linear(32*s2*s2 -> 1) fused as a masked weighted reduction ---------
    prod = mm * v2_ref[...][None]                                 # (B,s2,s1,c2)
    r = jnp.sum(jnp.sum(jnp.sum(prod, axis=3), axis=2), axis=1)   # (B,)
    o_ref[...] = r.reshape(1, 1, B) + bo_ref[...]


# ------------------------ wrapper-side layout plumbing -------------------------

def _phase_ordered_patches(x, kh, kw):
    """im2col for the 1-channel conv1 (built from the raw input), rows ordered
    (pool-phase a*2+b, ho, wo) so the in-kernel 2x2 max-pool is a max of four
    contiguous row blocks.  x: (N, H, W) -> (N, H*W, kh*kw)."""
    n, h, w = x.shape
    pad = (kh - 1) // 2
    xp = jnp.pad(x, ((0, 0), (pad, pad), (pad, pad)))
    cols = [xp[:, i:i + h, j:j + w] for i in range(kh) for j in range(kw)]
    pat = jnp.stack(cols, axis=-1)                       # (N, H, W, kh*kw)
    pat = pat.reshape(n, h // 2, 2, w // 2, 2, kh * kw)  # (N, ho, a, wo, b, t)
    pat = pat.transpose(0, 2, 4, 1, 3, 5)                # (N, a, b, ho, wo, t)
    return pat.reshape(n, h * w, kh * kw)


def _masked_linear_weight(w_out, c2, s2, s1):
    """PyTorch Linear weight (1, c2*s2*s2), NCHW-flatten order -> (s2, s1, c2)
    slab matching the kernel's pre-compaction pool2 layout: entry
    [ho, 2*wo, c] = w[c*s2*s2 + ho*s2 + wo]; odd columns are zero."""
    w = w_out.reshape(c2, s2, s2).transpose(1, 2, 0)     # (ho, wo, c)
    v2 = jnp.zeros((s2, s1, c2), jnp.float32)
    return v2.at[:, 0::2, :].set(w.astype(jnp.float32))


def init_params(k, key):
    """Deterministic synthetic parameters in PyTorch layouts:
    conv1: (16,1,5,5)+(16,), conv2: (32,16,5,5)+(32,), out: (1, 32*(k/4)^2)+(1,)."""
    k1, k2, k3, k4, k5, k6 = jax.random.split(key, 6)
    d_lin = int(32 * k / 4 * k / 4)
    f32 = jnp.float32
    return {
        "conv1_w": jax.random.normal(k1, (16, 1, 5, 5), f32) * 0.1,
        "conv1_b": jax.random.normal(k2, (16,), f32) * 0.01,
        "conv2_w": jax.random.normal(k3, (32, 16, 5, 5), f32) * 0.05,
        "conv2_b": jax.random.normal(k4, (32,), f32) * 0.01,
        "out_w":   jax.random.normal(k5, (1, d_lin), f32) * 0.05,
        "out_b":   jax.random.normal(k6, (1,), f32) * 0.01,
    }


def prepare_params(params):
    """One-time (outside jit) weight relayouts into kernel-ready layouts."""
    c1, _, kh, kw = params["conv1_w"].shape
    c2 = params["conv2_w"].shape[0]
    d_lin = params["out_w"].shape[1]
    s2 = int(round((d_lin / c2) ** 0.5))
    s1 = 2 * s2
    w2c = jnp.transpose(params["conv2_w"], (2, 3, 1, 0)).reshape(
        kh * kw * c1, c2).astype(jnp.bfloat16)
    return {
        "w1": params["conv1_w"].reshape(c1, kh * kw).T.astype(jnp.bfloat16),
        "b1": params["conv1_b"].reshape(1, c1).astype(jnp.float32),
        "w2": w2c,
        "b2": params["conv2_b"].reshape(1, c2).astype(jnp.float32),
        "v2": _masked_linear_weight(params["out_w"], c2, s2, s1),
        "bo": params["out_b"].reshape(1, 1).astype(jnp.float32),
    }


# ----------------------------------- model -------------------------------------

@jax.jit
def cnn_forward(x_nchw, prep):
    n, _, k, _ = x_nchw.shape
    c1 = prep["w1"].shape[1]
    c2 = prep["w2"].shape[1]
    s1, s2 = k // 2, k // 4

    # Samples per grid step: one big step amortizes per-step overhead; larger N
    # naturally yields a multi-step "parallel" grid (sharded on v7x's 2 TCs).
    bs = min(n, MAX_SAMPLES_PER_STEP)
    steps = -(-n // bs)

    # Only input-dependent plumbing stays in the jitted path.
    patches = _phase_ordered_patches(x_nchw[:, 0], KH, KW).astype(jnp.bfloat16)
    if steps * bs != n:
        patches = jnp.pad(patches, ((0, steps * bs - n), (0, 0), (0, 0)))

    out = pl.pallas_call(
        functools.partial(fused_cnn_kernel, kh=KH, kw=KW),
        out_shape=jax.ShapeDtypeStruct((steps, 1, bs), jnp.float32),
        grid=(steps,),
        in_specs=[
            pl.BlockSpec((bs, k * k, KH * KW), lambda i: (i, 0, 0)),
            pl.BlockSpec((KH * KW, c1), lambda i: (0, 0)),
            pl.BlockSpec((1, c1), lambda i: (0, 0)),
            pl.BlockSpec((KH * KW * c1, c2), lambda i: (0, 0)),
            pl.BlockSpec((1, c2), lambda i: (0, 0)),
            pl.BlockSpec((s2, s1, c2), lambda i: (0, 0, 0)),
            pl.BlockSpec((1, 1), lambda i: (0, 0)),
        ],
        out_specs=pl.BlockSpec((1, 1, bs), lambda i: (i, 0, 0)),
        scratch_shapes=[
            pltpu.VMEM((bs, s1 + 2 * PAD, s1 + 2 * PAD, c1), jnp.float32),
        ],
        compiler_params=pltpu.CompilerParams(
            dimension_semantics=("parallel",)),
    )(patches, prep["w1"], prep["b1"], prep["w2"], prep["b2"],
      prep["v2"], prep["bo"])
    return out.reshape(steps * bs, 1)[:n]


if __name__ == "__main__":
    key = jax.random.PRNGKey(0)
    kp, kx = jax.random.split(key)
    k = 16                                     # spatial size (multiple of 4)
    params = init_params(k, kp)
    prep = prepare_params(params)              # one-time weight plumbing
    x = jax.random.normal(kx, (2, 1, k, k), jnp.float32)   # NCHW input
    out = cnn_forward(x, prep)
    jax.block_until_ready(out)
    assert out.shape == (2, 1) and out.dtype == jnp.float32
    print("KERNEL_OK")
</pallas_src>

<mosaic_0001>
module attributes {stable_mosaic.version = 11 : i64} {
  func.func @fused_cnn_kernel(%arg0: i32, %arg1: memref<2x256x25xbf16, #tpu.memory_space<vmem>>, %arg2: memref<25x16xbf16, #tpu.memory_space<vmem>>, %arg3: memref<1x16xf32, #tpu.memory_space<vmem>>, %arg4: memref<400x32xbf16, #tpu.memory_space<vmem>>, %arg5: memref<1x32xf32, #tpu.memory_space<vmem>>, %arg6: memref<4x8x32xf32, #tpu.memory_space<vmem>>, %arg7: memref<1x1xf32, #tpu.memory_space<vmem>>, %arg8: memref<1x1x2xf32, #tpu.memory_space<vmem>>, %arg9: memref<2x12x12x16xf32, #tpu.memory_space<vmem>>) attributes {dimension_semantics = [#tpu.dimension_semantics<parallel>], iteration_bounds = array<i64: 1>, scalar_prefetch = 0 : i64, scratch_operands = 1 : i64, tpu.core_type = #tpu.core_type<tc>, window_params = [{transform_indices = @transform_0, window_bounds = array<i64: 2, 256, 25>}, {pipeline_mode = #tpu.pipeline_mode<synchronous>, transform_indices = @transform_1, window_bounds = array<i64: 25, 16>}, {pipeline_mode = #tpu.pipeline_mode<synchronous>, transform_indices = @transform_2, window_bounds = array<i64: 1, 16>}, {pipeline_mode = #tpu.pipeline_mode<synchronous>, transform_indices = @transform_3, window_bounds = array<i64: 400, 32>}, {pipeline_mode = #tpu.pipeline_mode<synchronous>, transform_indices = @transform_4, window_bounds = array<i64: 1, 32>}, {pipeline_mode = #tpu.pipeline_mode<synchronous>, transform_indices = @transform_5, window_bounds = array<i64: 4, 8, 32>}, {pipeline_mode = #tpu.pipeline_mode<synchronous>, transform_indices = @transform_6, window_bounds = array<i64: 1, 1>}, {transform_indices = @transform_7, window_bounds = array<i64: 1, 1, 2>}]} {
    %c0 = arith.constant 0 : index
    %c0_0 = arith.constant 0 : index
    %c0_1 = arith.constant 0 : index
    %0 = vector.load %arg1[%c0, %c0_0, %c0_1] : memref<2x256x25xbf16, #tpu.memory_space<vmem>>, vector<2x256x25xbf16>
    %1 = vector.shape_cast %0 : vector<2x256x25xbf16> to vector<512x25xbf16>
    %c0_2 = arith.constant 0 : index
    %c0_3 = arith.constant 0 : index
    %2 = vector.load %arg2[%c0_2, %c0_3] : memref<25x16xbf16, #tpu.memory_space<vmem>>, vector<25x16xbf16>
    %cst = arith.constant dense<0.000000e+00> : vector<512x16xf32>
    %3 = tpu.matmul %1, %2, %cst {dimension_numbers = #tpu.dot_dimension_numbers<[1], [0], [0], [1], [0, 0, 1, 1], [], []>} : vector<512x25xbf16>, vector<25x16xbf16>, vector<512x16xf32> -> vector<512x16xf32>
    %c0_4 = arith.constant 0 : index
    %c0_5 = arith.constant 0 : index
    %4 = vector.load %arg3[%c0_4, %c0_5] : memref<1x16xf32, #tpu.memory_space<vmem>>, vector<1x16xf32>
    %5 = vector.broadcast %4 : vector<1x16xf32> to vector<512x16xf32>
    %6 = arith.addf %3, %5 : vector<512x16xf32>
    %cst_6 = arith.constant 0.000000e+00 : f32
    %7 = vector.broadcast %cst_6 : f32 to vector<512x16xf32>
    %8 = arith.maximumf %6, %7 : vector<512x16xf32>
    %9 = vector.shape_cast %8 : vector<512x16xf32> to vector<2x4x64x16xf32>
    %10 = vector.extract_strided_slice %9 {offsets = [0, 0, 0, 0], sizes = [2, 1, 64, 16], strides = [1, 1, 1, 1]} : vector<2x4x64x16xf32> to vector<2x1x64x16xf32>
    %11 = vector.shape_cast %10 : vector<2x1x64x16xf32> to vector<2x64x16xf32>
    %12 = vector.extract_strided_slice %9 {offsets = [0, 1, 0, 0], sizes = [2, 1, 64, 16], strides = [1, 1, 1, 1]} : vector<2x4x64x16xf32> to vector<2x1x64x16xf32>
    %13 = vector.shape_cast %12 : vector<2x1x64x16xf32> to vector<2x64x16xf32>
    %14 = arith.maximumf %11, %13 : vector<2x64x16xf32>
    %15 = vector.extract_strided_slice %9 {offsets = [0, 2, 0, 0], sizes = [2, 1, 64, 16], strides = [1, 1, 1, 1]} : vector<2x4x64x16xf32> to vector<2x1x64x16xf32>
    %16 = vector.shape_cast %15 : vector<2x1x64x16xf32> to vector<2x64x16xf32>
    %17 = vector.extract_strided_slice %9 {offsets = [0, 3, 0, 0], sizes = [2, 1, 64, 16], strides = [1, 1, 1, 1]} : vector<2x4x64x16xf32> to vector<2x1x64x16xf32>
    %18 = vector.shape_cast %17 : vector<2x1x64x16xf32> to vector<2x64x16xf32>
    %19 = arith.maximumf %16, %18 : vector<2x64x16xf32>
    %20 = arith.maximumf %14, %19 : vector<2x64x16xf32>
    %21 = vector.shape_cast %20 : vector<2x64x16xf32> to vector<2x8x8x16xf32>
    %cst_7 = arith.constant 0.000000e+00 : f32
    %22 = vector.broadcast %cst_7 : f32 to vector<2x2x8x16xf32>
    %cst_8 = arith.constant 0.000000e+00 : f32
    %23 = vector.broadcast %cst_8 : f32 to vector<2x12x2x16xf32>
    %24 = tpu.concatenate %22, %21, %22 in 1 : vector<2x2x8x16xf32>, vector<2x8x8x16xf32>, vector<2x2x8x16xf32> -> vector<2x12x8x16xf32>
    %25 = tpu.concatenate %23, %24, %23 in 2 : vector<2x12x2x16xf32>, vector<2x12x8x16xf32>, vector<2x12x2x16xf32> -> vector<2x12x12x16xf32>
    %c0_9 = arith.constant 0 : index
    %c0_10 = arith.constant 0 : index
    %c0_11 = arith.constant 0 : index
    %c0_12 = arith.constant 0 : index
    %26 = vector.load %arg9[%c0_9, %c0_10, %c0_11, %c0_12] : memref<2x12x12x16xf32, #tpu.memory_space<vmem>>, vector<2x12x12x16xf32>
    tpu.vector_store %arg9[%c0_9, %c0_10, %c0_11, %c0_12], %25 {strides = array<i32>} : memref<2x12x12x16xf32, #tpu.memory_space<vmem>>, vector<2x12x12x16xf32>,
    %c0_13 = arith.constant 0 : index
    %c0_14 = arith.constant 0 : index
    %c0_15 = arith.constant 0 : index
    %c0_16 = arith.constant 0 : index
    %27 = vector.load %arg9[%c0_13, %c0_14, %c0_15, %c0_16] : memref<2x12x12x16xf32, #tpu.memory_space<vmem>>, vector<2x8x8x16xf32>
    %c0_17 = arith.constant 0 : index
    %c0_18 = arith.constant 0 : index
    %c1 = arith.constant 1 : index
    %c0_19 = arith.constant 0 : index
    %28 = vector.load %arg9[%c0_17, %c0_18, %c1, %c0_19] : memref<2x12x12x16xf32, #tpu.memory_space<vmem>>, vector<2x8x8x16xf32>
    %c0_20 = arith.constant 0 : index
    %c0_21 = arith.constant 0 : index
    %c2 = arith.constant 2 : index
    %c0_22 = arith.constant 0 : index
    %29 = vector.load %arg9[%c0_20, %c0_21, %c2, %c0_22] : memref<2x12x12x16xf32, #tpu.memory_space<vmem>>, vector<2x8x8x16xf32>
    %c0_23 = arith.constant 0 : index
    %c0_24 = arith.constant 0 : index
    %c3 = arith.constant 3 : index
    %c0_25 = arith.constant 0 : index
    %30 = vector.load %arg9[%c0_23, %c0_24, %c3, %c0_25] : memref<2x12x12x16xf32, #tpu.memory_space<vmem>>, vector<2x8x8x16xf32>
    %c0_26 = arith.constant 0 : index
    %c0_27 = arith.constant 0 : index
    %c4 = arith.constant 4 : index
    %c0_28 = arith.constant 0 : index
    %31 = vector.load %arg9[%c0_26, %c0_27, %c4, %c0_28] : memref<2x12x12x16xf32, #tpu.memory_space<vmem>>, vector<2x8x8x16xf32>
    %c0_29 = arith.constant 0 : index
    %c1_30 = arith.constant 1 : index
    %c0_31 = arith.constant 0 : index
    %c0_32 = arith.constant 0 : index
    %32 = vector.load %arg9[%c0_29, %c1_30, %c0_31, %c0_32] : memref<2x12x12x16xf32, #tpu.memory_space<vmem>>, vector<2x8x8x16xf32>
    %c0_33 = arith.constant 0 : index
    %c1_34 = arith.constant 1 : index
    %c1_35 = arith.constant 1 : index
    %c0_36 = arith.constant 0 : index
    %33 = vector.load %arg9[%c0_33, %c1_34, %c1_35, %c0_36] : memref<2x12x12x16xf32, #tpu.memory_space<vmem>>, vector<2x8x8x16xf32>
    %c0_37 = arith.constant 0 : index
    %c1_38 = arith.constant 1 : index
    %c2_39 = arith.constant 2 : index
    %c0_40 = arith.constant 0 : index
    %34 = vector.load %arg9[%c0_37, %c1_38, %c2_39, %c0_40] : memref<2x12x12x16xf32, #tpu.memory_space<vmem>>, vector<2x8x8x16xf32>
    %c0_41 = arith.constant 0 : index
    %c1_42 = arith.constant 1 : index
    %c3_43 = arith.constant 3 : index
    %c0_44 = arith.constant 0 : index
    %35 = vector.load %arg9[%c0_41, %c1_42, %c3_43, %c0_44] : memref<2x12x12x16xf32, #tpu.memory_space<vmem>>, vector<2x8x8x16xf32>
    %c0_45 = arith.constant 0 : index
    %c1_46 = arith.constant 1 : index
    %c4_47 = arith.constant 4 : index
    %c0_48 = arith.constant 0 : index
    %36 = vector.load %arg9[%c0_45, %c1_46, %c4_47, %c0_48] : memref<2x12x12x16xf32, #tpu.memory_space<vmem>>, vector<2x8x8x16xf32>
    %c0_49 = arith.constant 0 : index
    %c2_50 = arith.constant 2 : index
    %c0_51 = arith.constant 0 : index
    %c0_52 = arith.constant 0 : index
    %37 = vector.load %arg9[%c0_49, %c2_50, %c0_51, %c0_52] : memref<2x12x12x16xf32, #tpu.memory_space<vmem>>, vector<2x8x8x16xf32>
    %c0_53 = arith.constant 0 : index
    %c2_54 = arith.constant 2 : index
    %c1_55 = arith.constant 1 : index
    %c0_56 = arith.constant 0 : index
    %38 = vector.load %arg9[%c0_53, %c2_54, %c1_55, %c0_56] : memref<2x12x12x16xf32, #tpu.memory_space<vmem>>, vector<2x8x8x16xf32>
    %c0_57 = arith.constant 0 : index
    %c2_58 = arith.constant 2 : index
    %c2_59 = arith.constant 2 : index
    %c0_60 = arith.constant 0 : index
    %39 = vector.load %arg9[%c0_57, %c2_58, %c2_59, %c0_60] : memref<2x12x12x16xf32, #tpu.memory_space<vmem>>, vector<2x8x8x16xf32>
    %c0_61 = arith.constant 0 : index
    %c2_62 = arith.constant 2 : index
    %c3_63 = arith.constant 3 : index
    %c0_64 = arith.constant 0 : index
    %40 = vector.load %arg9[%c0_61, %c2_62, %c3_63, %c0_64] : memref<2x12x12x16xf32, #tpu.memory_space<vmem>>, vector<2x8x8x16xf32>
    %c0_65 = arith.constant 0 : index
    %c2_66 = arith.constant 2 : index
    %c4_67 = arith.constant 4 : index
    %c0_68 = arith.constant 0 : index
    %41 = vector.load %arg9[%c0_65, %c2_66, %c4_67, %c0_68] : memref<2x12x12x16xf32, #tpu.memory_space<vmem>>, vector<2x8x8x16xf32>
    %c0_69 = arith.constant 0 : index
    %c3_70 = arith.constant 3 : index
    %c0_71 = arith.constant 0 : index
    %c0_72 = arith.constant 0 : index
    %42 = vector.load %arg9[%c0_69, %c3_70, %c0_71, %c0_72] : memref<2x12x12x16xf32, #tpu.memory_space<vmem>>, vector<2x8x8x16xf32>
    %c0_73 = arith.constant 0 : index
    %c3_74 = arith.constant 3 : index
    %c1_75 = arith.constant 1 : index
    %c0_76 = arith.constant 0 : index
    %43 = vector.load %arg9[%c0_73, %c3_74, %c1_75, %c0_76] : memref<2x12x12x16xf32, #tpu.memory_space<vmem>>, vector<2x8x8x16xf32>
    %c0_77 = arith.constant 0 : index
    %c3_78 = arith.constant 3 : index
    %c2_79 = arith.constant 2 : index
    %c0_80 = arith.constant 0 : index
    %44 = vector.load %arg9[%c0_77, %c3_78, %c2_79, %c0_80] : memref<2x12x12x16xf32, #tpu.memory_space<vmem>>, vector<2x8x8x16xf32>
    %c0_81 = arith.constant 0 : index
    %c3_82 = arith.constant 3 : index
    %c3_83 = arith.constant 3 : index
    %c0_84 = arith.constant 0 : index
    %45 = vector.load %arg9[%c0_81, %c3_82, %c3_83, %c0_84] : memref<2x12x12x16xf32, #tpu.memory_space<vmem>>, vector<2x8x8x16xf32>
    %c0_85 = arith.constant 0 : index
    %c3_86 = arith.constant 3 : index
    %c4_87 = arith.constant 4 : index
    %c0_88 = arith.constant 0 : index
    %46 = vector.load %arg9[%c0_85, %c3_86, %c4_87, %c0_88] : memref<2x12x12x16xf32, #tpu.memory_space<vmem>>, vector<2x8x8x16xf32>
    %c0_89 = arith.constant 0 : index
    %c4_90 = arith.constant 4 : index
    %c0_91 = arith.constant 0 : index
    %c0_92 = arith.constant 0 : index
    %47 = vector.load %arg9[%c0_89, %c4_90, %c0_91, %c0_92] : memref<2x12x12x16xf32, #tpu.memory_space<vmem>>, vector<2x8x8x16xf32>
    %c0_93 = arith.constant 0 : index
    %c4_94 = arith.constant 4 : index
    %c1_95 = arith.constant 1 : index
    %c0_96 = arith.constant 0 : index
    %48 = vector.load %arg9[%c0_93, %c4_94, %c1_95, %c0_96] : memref<2x12x12x16xf32, #tpu.memory_space<vmem>>, vector<2x8x8x16xf32>
    %c0_97 = arith.constant 0 : index
    %c4_98 = arith.constant 4 : index
    %c2_99 = arith.constant 2 : index
    %c0_100 = arith.constant 0 : index
    %49 = vector.load %arg9[%c0_97, %c4_98, %c2_99, %c0_100] : memref<2x12x12x16xf32, #tpu.memory_space<vmem>>, vector<2x8x8x16xf32>
    %c0_101 = arith.constant 0 : index
    %c4_102 = arith.constant 4 : index
    %c3_103 = arith.constant 3 : index
    %c0_104 = arith.constant 0 : index
    %50 = vector.load %arg9[%c0_101, %c4_102, %c3_103, %c0_104] : memref<2x12x12x16xf32, #tpu.memory_space<vmem>>, vector<2x8x8x16xf32>
    %c0_105 = arith.constant 0 : index
    %c4_106 = arith.constant 4 : index
    %c4_107 = arith.constant 4 : index
    %c0_108 = arith.constant 0 : index
    %51 = vector.load %arg9[%c0_105, %c4_106, %c4_107, %c0_108] : memref<2x12x12x16xf32, #tpu.memory_space<vmem>>, vector<2x8x8x16xf32>
    %52 = tpu.concatenate %27, %28, %29, %30, %31, %32, %33, %34, %35, %36, %37, %38, %39, %40, %41, %42 in 3 : vector<2x8x8x16xf32>, vector<2x8x8x16xf32>, vector<2x8x8x16xf32>, vector<2x8x8x16xf32>, vector<2x8x8x16xf32>, vector<2x8x8x16xf32>, vector<2x8x8x16xf32>, vector<2x8x8x16xf32>, vector<2x8x8x16xf32>, vector<2x8x8x16xf32>, vector<2x8x8x16xf32>, vector<2x8x8x16xf32>, vector<2x8x8x16xf32>, vector<2x8x8x16xf32>, vector<2x8x8x16xf32>, vector<2x8x8x16xf32> -> vector<2x8x8x256xf32>
    %53 = tpu.concatenate %43, %44, %45, %46, %47, %48, %49, %50, %51 in 3 : vector<2x8x8x16xf32>, vector<2x8x8x16xf32>, vector<2x8x8x16xf32>, vector<2x8x8x16xf32>, vector<2x8x8x16xf32>, vector<2x8x8x16xf32>, vector<2x8x8x16xf32>, vector<2x8x8x16xf32>, vector<2x8x8x16xf32> -> vector<2x8x8x144xf32>
    %54 = tpu.concatenate %52, %53 in 3 : vector<2x8x8x256xf32>, vector<2x8x8x144xf32> -> vector<2x8x8x400xf32>
    %55 = vector.shape_cast %54 : vector<2x8x8x400xf32> to vector<128x400xf32>
    %56 = arith.truncf %55 : vector<128x400xf32> to vector<128x400xbf16>
    %c0_109 = arith.constant 0 : index
    %c0_110 = arith.constant 0 : index
    %57 = vector.load %arg4[%c0_109, %c0_110] : memref<400x32xbf16, #tpu.memory_space<vmem>>, vector<400x32xbf16>
    %cst_111 = arith.constant dense<0.000000e+00> : vector<128x32xf32>
    %58 = tpu.matmul %56, %57, %cst_111 {dimension_numbers = #tpu.dot_dimension_numbers<[1], [0], [0], [1], [0, 0, 1, 1], [], []>} : vector<128x400xbf16>, vector<400x32xbf16>, vector<128x32xf32> -> vector<128x32xf32>
    %c0_112 = arith.constant 0 : index
    %c0_113 = arith.constant 0 : index
    %59 = vector.load %arg5[%c0_112, %c0_113] : memref<1x32xf32, #tpu.memory_space<vmem>>, vector<1x32xf32>
    %60 = vector.broadcast %59 : vector<1x32xf32> to vector<128x32xf32>
    %61 = arith.addf %58, %60 : vector<128x32xf32>
    %cst_114 = arith.constant 0.000000e+00 : f32
    %62 = vector.broadcast %cst_114 : f32 to vector<128x32xf32>
    %63 = arith.maximumf %61, %62 : vector<128x32xf32>
    %64 = vector.shape_cast %63 : vector<128x32xf32> to vector<2x4x2x8x32xf32>
    %65 = vector.extract_strided_slice %64 {offsets = [0, 0, 0, 0, 0], sizes = [2, 4, 1, 8, 32], strides = [1, 1, 1, 1, 1]} : vector<2x4x2x8x32xf32> to vector<2x4x1x8x32xf32>
    %66 = vector.shape_cast %65 : vector<2x4x1x8x32xf32> to vector<2x4x8x32xf32>
    %67 = vector.extract_strided_slice %64 {offsets = [0, 0, 1, 0, 0], sizes = [2, 4, 1, 8, 32], strides = [1, 1, 1, 1, 1]} : vector<2x4x2x8x32xf32> to vector<2x4x1x8x32xf32>
    %68 = vector.shape_cast %67 : vector<2x4x1x8x32xf32> to vector<2x4x8x32xf32>
    %69 = arith.maximumf %66, %68 : vector<2x4x8x32xf32>
    %c7_i32 = arith.constant 7 : i32
    %70 = tpu.dynamic_rotate %69 by %c7_i32 dim 2 : vector<2x4x8x32xf32>, i32 -> vector<2x4x8x32xf32>
    %71 = arith.maximumf %69, %70 : vector<2x4x8x32xf32>
    %c0_115 = arith.constant 0 : index
    %c0_116 = arith.constant 0 : index
    %c0_117 = arith.constant 0 : index
    %72 = vector.load %arg6[%c0_115, %c0_116, %c0_117] : memref<4x8x32xf32, #tpu.memory_space<vmem>>, vector<4x8x32xf32>
    %73 = vector.shape_cast %72 : vector<4x8x32xf32> to vector<1x4x8x32xf32>
    %74 = vector.broadcast %73 : vector<1x4x8x32xf32> to vector<2x4x8x32xf32>
    %75 = arith.mulf %71, %74 : vector<2x4x8x32xf32>
    %cst_118 = arith.constant dense<0.000000e+00> : vector<2x4x8xf32>
    %76 = vector.multi_reduction <add>, %75, %cst_118 [3] : vector<2x4x8x32xf32> to vector<2x4x8xf32>
    %cst_119 = arith.constant dense<0.000000e+00> : vector<2x4xf32>
    %77 = vector.multi_reduction <add>, %76, %cst_119 [2] : vector<2x4x8xf32> to vector<2x4xf32>
    %cst_120 = arith.constant dense<0.000000e+00> : vector<2xf32>
    %78 = vector.multi_reduction <add>, %77, %cst_120 [1] : vector<2x4xf32> to vector<2xf32>
    %79 = vector.shape_cast %78 : vector<2xf32> to vector<1x1x2xf32>
    %c0_121 = arith.constant 0 : index
    %c0_122 = arith.constant 0 : index
    %80 = vector.load %arg7[%c0_121, %c0_122] : memref<1x1xf32, #tpu.memory_space<vmem>>, vector<1x1xf32>
    %81 = vector.shape_cast %80 : vector<1x1xf32> to vector<1x1x1xf32>
    %82 = vector.broadcast %81 : vector<1x1x1xf32> to vector<1x1x2xf32>
    %83 = arith.addf %79, %82 : vector<1x1x2xf32>
    %c0_123 = arith.constant 0 : index
    %c0_124 = arith.constant 0 : index
    %c0_125 = arith.constant 0 : index
    %84 = vector.load %arg8[%c0_123, %c0_124, %c0_125] : memref<1x1x2xf32, #tpu.memory_space<vmem>>, vector<1x1x2xf32>
    tpu.vector_store %arg8[%c0_123, %c0_124, %c0_125], %83 {strides = array<i32>} : memref<1x1x2xf32, #tpu.memory_space<vmem>>, vector<1x1x2xf32>,
    return
  }
  func.func @transform_0(%arg0: i32) -> (i32, i32, i32) {
    %c0_i32 = arith.constant 0 : i32
    %c0_i32_0 = arith.constant 0 : i32
    %c0_i32_1 = arith.constant 0 : i32
    return %arg0, %c0_i32, %c0_i32_0 : i32, i32, i32
  }
  func.func @transform_1(%arg0: i32) -> (i32, i32) {
    %c0_i32 = arith.constant 0 : i32
    %c0_i32_0 = arith.constant 0 : i32
    %c0_i32_1 = arith.constant 0 : i32
    return %c0_i32, %c0_i32_0 : i32, i32
  }
  func.func @transform_2(%arg0: i32) -> (i32, i32) {
    %c0_i32 = arith.constant 0 : i32
    %c0_i32_0 = arith.constant 0 : i32
    %c0_i32_1 = arith.constant 0 : i32
    return %c0_i32, %c0_i32_0 : i32, i32
  }
  func.func @transform_3(%arg0: i32) -> (i32, i32) {
    %c0_i32 = arith.constant 0 : i32
    %c0_i32_0 = arith.constant 0 : i32
    %c0_i32_1 = arith.constant 0 : i32
    return %c0_i32, %c0_i32_0 : i32, i32
  }
  func.func @transform_4(%arg0: i32) -> (i32, i32) {
    %c0_i32 = arith.constant 0 : i32
    %c0_i32_0 = arith.constant 0 : i32
    %c0_i32_1 = arith.constant 0 : i32
    return %c0_i32, %c0_i32_0 : i32, i32
  }
  func.func @transform_5(%arg0: i32) -> (i32, i32, i32) {
    %c0_i32 = arith.constant 0 : i32
    %c0_i32_0 = arith.constant 0 : i32
    %c0_i32_1 = arith.constant 0 : i32
    %c0_i32_2 = arith.constant 0 : i32
    return %c0_i32, %c0_i32_0, %c0_i32_1 : i32, i32, i32
  }
  func.func @transform_6(%arg0: i32) -> (i32, i32) {
    %c0_i32 = arith.constant 0 : i32
    %c0_i32_0 = arith.constant 0 : i32
    %c0_i32_1 = arith.constant 0 : i32
    return %c0_i32, %c0_i32_0 : i32, i32
  }
  func.func @transform_7(%arg0: i32) -> (i32, i32, i32) {
    %c0_i32 = arith.constant 0 : i32
    %c0_i32_0 = arith.constant 0 : i32
    %c0_i32_1 = arith.constant 0 : i32
    return %arg0, %c0_i32, %c0_i32_0 : i32, i32, i32
  }
}

</mosaic_0001>

<llo_original>
// kernel: cnn_forward.1
$region0: #{cnn_forward.1}
  #allocation0 [shape = 'u32[]', space=smem, size = 0x4, offset = 0x4, fixed_abs, tag = 'smem constant byte address 0x4 - core index']
  #allocation1 [shape = 'u32[72,128]{1,0:T(1,128)}', space=vmem, size = 0x9000, scoped, tag = 'internal scratch']
  #allocation2 [shape = 'f32[2,12,12,16]{3,2,1,0:T(8,128)}', space=vmem, size = 0x30000, scoped, tag = 'scratch operand']
  #allocation3 [shape = 'f32[1,1]{1,0:T(1,128)S(1)}', space=vmem, size = 0x200, scoped, tag = 'scoped memory for cnn_forward.1']
  %s0 = inlined_call_operand.vmem [shape: bf16[2,256,25], index: 0, kind: input, shape index: {}]
  %s1 = inlined_call_operand.vmem [shape: bf16[25,16], index: 1, kind: input, shape index: {}]
  %s2 = inlined_call_operand.vmem [shape: f32[1,16], index: 2, kind: input, shape index: {}]
  %s3 = inlined_call_operand.vmem [shape: bf16[400,32], index: 3, kind: input, shape index: {}]
  %s4 = inlined_call_operand.vmem [shape: f32[1,32], index: 4, kind: input, shape index: {}]
  %s5 = inlined_call_operand.vmem [shape: f32[4,8,32], index: 5, kind: input, shape index: {}]
  %s6 = inlined_call_operand.<no memory space> [shape: f32[1,1], index: 6, kind: input, shape index: {}]
  %s7 = inlined_call_operand.hbm [shape: f32[1,1,2], index: 7, kind: output, shape index: {}]
  %s8 = sld [smem:[#allocation0]]
  $region38: #{cnn_forward.1} parent=0
    _
  %s10 = ssub.s32 1, %s8
  %s11 = scalar_select 0, %s10, %s8
  %v12 = vstv %s6
  %13 = vst [vmem:[#allocation3] sm:$0x1] %v12
  $region1: #{cnn_forward.1} parent=0
    #allocation4 [shape = 'u8[512]{0}', space=vmem, size = 0x400, scoped, tag = 'output window, operand 0, single buffered']
    #allocation5 [shape = 's32[1]{0}', space=sflag, size = 0x4, scoped, tag = 'scoped memory for cnn_forward.1']
    %14 = vsyncpa [#allocation5], 0
    // Predicated region
    $region2: #{cnn_forward.1} parent=1 // pred_check
      _
    $region3: #{cnn_forward.1} parent=1 // pred_check_branch
      %16 = sbr.rel (0) target = $region5
    $region4: #{cnn_forward.1} parent=1 // pred_region
      _
    $region5: #{cnn_forward.1} parent=1 // pred_fallthru
      _
    // Predicated region
    $region6: #{cnn_forward.1} parent=1 // pred_check
      _
    $region7: #{cnn_forward.1} parent=1 // pred_check_branch
      %18 = sbr.rel (0) target = $region9
    $region8: #{cnn_forward.1} parent=1 // pred_region
      _
    $region9: #{cnn_forward.1} parent=1 // pred_fallthru
      _
    // Predicated region
    $region10: #{cnn_forward.1} parent=1 // pred_check
      _
    $region11: #{cnn_forward.1} parent=1 // pred_check_branch
      %20 = sbr.rel (0) target = $region13
    $region12: #{cnn_forward.1} parent=1 // pred_region
      _
    $region13: #{cnn_forward.1} parent=1 // pred_fallthru
      _
    // Predicated region
    $region14: #{cnn_forward.1} parent=1 // pred_check
      _
    $region15: #{cnn_forward.1} parent=1 // pred_check_branch
      %22 = sbr.rel (0) target = $region17
    $region16: #{cnn_forward.1} parent=1 // pred_region
      _
    $region17: #{cnn_forward.1} parent=1 // pred_fallthru
      _
    // Predicated region
    $region18: #{cnn_forward.1} parent=1 // pred_check
      _
    $region19: #{cnn_forward.1} parent=1 // pred_check_branch
      %24 = sbr.rel (0) target = $region21
    $region20: #{cnn_forward.1} parent=1 // pred_region
      _
    $region21: #{cnn_forward.1} parent=1 // pred_fallthru
      _
    // Predicated region
    $region22: #{cnn_forward.1} parent=1 // pred_check
      _
    $region23: #{cnn_forward.1} parent=1 // pred_check_branch
      %26 = sbr.rel (0) target = $region25
    $region24: #{cnn_forward.1} parent=1 // pred_region
      _
    $region25: #{cnn_forward.1} parent=1 // pred_fallthru
      _
    // Predicated region
    $region26: #{cnn_forward.1} parent=1 // pred_check
      _
    $region27: #{cnn_forward.1} parent=1 // pred_check_branch
      %28 = sbr.rel (0) target = $region29
    $region28: #{cnn_forward.1} parent=1 // pred_region
      _
    $region29: #{cnn_forward.1} parent=1 // pred_fallthru
      _
    %v30 = vld [vmem:[%s0] sm:$0xf]
    %v31 = vld [vmem:[%s0 + $0x4] sm:$0xf]
    %v32 = vld [vmem:[%s0 + $0x8] sm:$0xf]
    %v33 = vld [vmem:[%s0 + $0xc] sm:$0xf]
    %v34 = vld [vmem:[%s0 + $0x10] sm:$0xf]
    %v35 = vld [vmem:[%s0 + $0x14] sm:$0xf]
    %v36 = vld [vmem:[%s0 + $0x18] sm:$0xf]
    %v37 = vld [vmem:[%s0 + $0x1c] sm:$0xf]
    %v38 = vld [vmem:[%s0 + $0x20] sm:$0xf]
    %v39 = vld [vmem:[%s0 + $0x24] sm:$0xf]
    %v40 = vld [vmem:[%s0 + $0x28] sm:$0xf]
    %v41 = vld [vmem:[%s0 + $0x2c] sm:$0xf]
    %v42 = vld [vmem:[%s0 + $0x30] sm:$0xf]
    %v43 = vld [vmem:[%s0 + $0x34] sm:$0xf]
    %v44 = vld [vmem:[%s0 + $0x38] sm:$0xf]
    %v45 = vld [vmem:[%s0 + $0x3c] sm:$0xf]
    %v46 = vld [vmem:[%s0 + $0x40] sm:$0xf]
    %v47 = vld [vmem:[%s0 + $0x44] sm:$0xf]
    %v48 = vld [vmem:[%s0 + $0x48] sm:$0xf]
    %v49 = vld [vmem:[%s0 + $0x4c] sm:$0xf]
    %v50 = vld [vmem:[%s0 + $0x50] sm:$0xf]
    %v51 = vld [vmem:[%s0 + $0x54] sm:$0xf]
    %v52 = vld [vmem:[%s0 + $0x58] sm:$0xf]
    %v53 = vld [vmem:[%s0 + $0x5c] sm:$0xf]
    %v54 = vld [vmem:[%s0 + $0x60] sm:$0xf]
    %v55 = vld [vmem:[%s0 + $0x64] sm:$0xf]
    %v56 = vld [vmem:[%s0 + $0x68] sm:$0xf]
    %v57 = vld [vmem:[%s0 + $0x6c] sm:$0xf]
    %v58 = vld [vmem:[%s0 + $0x70] sm:$0xf]
    %v59 = vld [vmem:[%s0 + $0x74] sm:$0xf]
    %v60 = vld [vmem:[%s0 + $0x78] sm:$0xf]
    %v61 = vld [vmem:[%s0 + $0x7c] sm:$0xf]
    %v62 = vld [vmem:[%s0 + $0x80] sm:$0xf]
    %v63 = vld [vmem:[%s0 + $0x84] sm:$0xf]
    %v64 = vld [vmem:[%s0 + $0x88] sm:$0xf]
    %v65 = vld [vmem:[%s0 + $0x8c] sm:$0xf]
    %v66 = vld [vmem:[%s0 + $0x90] sm:$0xf]
    %v67 = vld [vmem:[%s0 + $0x94] sm:$0xf]
    %v68 = vld [vmem:[%s0 + $0x98] sm:$0xf]
    %v69 = vld [vmem:[%s0 + $0x9c] sm:$0xf]
    %v70 = vld [vmem:[%s0 + $0xa0] sm:$0xf]
    %v71 = vld [vmem:[%s0 + $0xa4] sm:$0xf]
    %v72 = vld [vmem:[%s0 + $0xa8] sm:$0xf]
    %v73 = vld [vmem:[%s0 + $0xac] sm:$0xf]
    %v74 = vld [vmem:[%s0 + $0xb0] sm:$0xf]
    %v75 = vld [vmem:[%s0 + $0xb4] sm:$0xf]
    %v76 = vld [vmem:[%s0 + $0xb8] sm:$0xf]
    %v77 = vld [vmem:[%s0 + $0xbc] sm:$0xf]
    %v78 = vld [vmem:[%s0 + $0xc0] sm:$0xf]
    %v79 = vld [vmem:[%s0 + $0xc4] sm:$0xf]
    %v80 = vld [vmem:[%s0 + $0xc8] sm:$0xf]
    %v81 = vld [vmem:[%s0 + $0xcc] sm:$0xf]
    %v82 = vld [vmem:[%s0 + $0xd0] sm:$0xf]
    %v83 = vld [vmem:[%s0 + $0xd4] sm:$0xf]
    %v84 = vld [vmem:[%s0 + $0xd8] sm:$0xf]
    %v85 = vld [vmem:[%s0 + $0xdc] sm:$0xf]
    %v86 = vld [vmem:[%s0 + $0xe0] sm:$0xf]
    %v87 = vld [vmem:[%s0 + $0xe4] sm:$0xf]
    %v88 = vld [vmem:[%s0 + $0xe8] sm:$0xf]
    %v89 = vld [vmem:[%s0 + $0xec] sm:$0xf]
    %v90 = vld [vmem:[%s0 + $0xf0] sm:$0xf]
    %v91 = vld [vmem:[%s0 + $0xf4] sm:$0xf]
    %v92 = vld [vmem:[%s0 + $0xf8] sm:$0xf]
    %v93 = vld [vmem:[%s0 + $0xfc] sm:$0xf]
    %v94 = vld [vmem:[%s1] sm:$0xf]
    %v95 = vld [vmem:[%s1 + $0x4] sm:$0xf]
    %v96 = vld [vmem:[%s1 + $0x8] sm:$0xf]
    %v97 = vld [vmem:[%s1 + $0xc] sm:$0x1]
    %v98 = vld [vmem:[%s2] sm:$0x1]
    %v100 = vperm.slane %v98, 0
    %v166 = vunpack.c.l.b16 %v30
    %v167 = vunpack.c.l.b16 %v31
    %v168 = vunpack.c.l.b16 %v32
    %v169 = vunpack.c.l.b16 %v33
    %v170 = vunpack.c.l.b16 %v34
    %v171 = vunpack.c.l.b16 %v35
    %v172 = vunpack.c.l.b16 %v36
    %v173 = vunpack.c.l.b16 %v37
    %v174 = vunpack.c.l.b16 %v38
    %v175 = vunpack.c.l.b16 %v39
    %v176 = vunpack.c.l.b16 %v40
    %v177 = vunpack.c.l.b16 %v41
    %v178 = vunpack.c.l.b16 %v42
    %v179 = vunpack.c.l.b16 %v43
    %v180 = vunpack.c.l.b16 %v44
    %v181 = vunpack.c.l.b16 %v45
    %v182 = vunpack.c.l.b16 %v46
    %v183 = vunpack.c.l.b16 %v47
    %v184 = vunpack.c.l.b16 %v48
    %v185 = vunpack.c.l.b16 %v49
    %v186 = vunpack.c.l.b16 %v50
    %v187 = vunpack.c.l.b16 %v51
    %v188 = vunpack.c.l.b16 %v52
    %v189 = vunpack.c.l.b16 %v53
    %v190 = vunpack.c.l.b16 %v54
    %v191 = vunpack.c.l.b16 %v55
    %v192 = vunpack.c.l.b16 %v56
    %v193 = vunpack.c.l.b16 %v57
    %v194 = vunpack.c.l.b16 %v58
    %v195 = vunpack.c.l.b16 %v59
    %v196 = vunpack.c.l.b16 %v60
    %v197 = vunpack.c.l.b16 %v61
    %v198 = vunpack.c.l.b16 %v62
    %v199 = vunpack.c.l.b16 %v63
    %v200 = vunpack.c.l.b16 %v64
    %v201 = vunpack.c.l.b16 %v65
    %v202 = vunpack.c.l.b16 %v66
    %v203 = vunpack.c.l.b16 %v67
    %v204 = vunpack.c.l.b16 %v68
    %v205 = vunpack.c.l.b16 %v69
    %v206 = vunpack.c.l.b16 %v70
    %v207 = vunpack.c.l.b16 %v71
    %v208 = vunpack.c.l.b16 %v72
    %v209 = vunpack.c.l.b16 %v73
    %v210 = vunpack.c.l.b16 %v74
    %v211 = vunpack.c.l.b16 %v75
    %v212 = vunpack.c.l.b16 %v76
    %v213 = vunpack.c.l.b16 %v77
    %v214 = vunpack.c.l.b16 %v78
    %v215 = vunpack.c.l.b16 %v79
    %v216 = vunpack.c.l.b16 %v80
    %v217 = vunpack.c.l.b16 %v81
    %v218 = vunpack.c.l.b16 %v82
    %v219 = vunpack.c.l.b16 %v83
    %v220 = vunpack.c.l.b16 %v84
    %v221 = vunpack.c.l.b16 %v85
    %v222 = vunpack.c.l.b16 %v86
    %v223 = vunpack.c.l.b16 %v87
    %v224 = vunpack.c.l.b16 %v88
    %v225 = vunpack.c.l.b16 %v89
    %v226 = vunpack.c.l.b16 %v90
    %v227 = vunpack.c.l.b16 %v91
    %v228 = vunpack.c.l.b16 %v92
    %v229 = vunpack.c.l.b16 %v93
    %v230 = vpack.c.b16 %v167, %v166
    %v231 = vpack.c.b16 %v169, %v168
    %v232 = vpack.c.b16 %v171, %v170
    %v233 = vpack.c.b16 %v173, %v172
    %v234 = vpack.c.b16 %v175, %v174
    %v235 = vpack.c.b16 %v177, %v176
    %v236 = vpack.c.b16 %v179, %v178
    %v237 = vpack.c.b16 %v181, %v180
    %v238 = vpack.c.b16 %v183, %v182
    %v239 = vpack.c.b16 %v185, %v184
    %v240 = vpack.c.b16 %v187, %v186
    %v241 = vpack.c.b16 %v189, %v188
    %v242 = vpack.c.b16 %v191, %v190
    %v243 = vpack.c.b16 %v193, %v192
    %v244 = vpack.c.b16 %v195, %v194
    %v245 = vpack.c.b16 %v197, %v196
    %v246 = vpack.c.b16 %v199, %v198
    %v247 = vpack.c.b16 %v201, %v200
    %v248 = vpack.c.b16 %v203, %v202
    %v249 = vpack.c.b16 %v205, %v204
    %v250 = vpack.c.b16 %v207, %v206
    %v251 = vpack.c.b16 %v209, %v208
    %v252 = vpack.c.b16 %v211, %v210
    %v253 = vpack.c.b16 %v213, %v212
    %v254 = vpack.c.b16 %v215, %v214
    %v255 = vpack.c.b16 %v217, %v216
    %v256 = vpack.c.b16 %v219, %v218
    %v257 = vpack.c.b16 %v221, %v220
    %v258 = vpack.c.b16 %v223, %v222
    %v259 = vpack.c.b16 %v225, %v224
    %v260 = vpack.c.b16 %v227, %v226
    %v261 = vpack.c.b16 %v229, %v228
    %v266 = vunpack.c.l.b16 %v94
    %v267 = vunpack.c.l.b16 %v95
    %v268 = vunpack.c.l.b16 %v96
    %v269 = vunpack.c.l.b16 %v97
    %v270 = vpack.c.b16 %v267, %v266
    %v271 = vpack.c.b16 %v269, %v268
    %vm273 = vcmask 203776
    %v275 = vsel %vm273, %v230, 0
    %v278 = vsel %vm273, %v231, 0
    %v281 = vsel %vm273, %v232, 0
    %v284 = vsel %vm273, %v233, 0
    %v287 = vsel %vm273, %v234, 0
    %v290 = vsel %vm273, %v235, 0
    %v293 = vsel %vm273, %v236, 0
    %v296 = vsel %vm273, %v237, 0
    %v299 = vsel %vm273, %v238, 0
    %v302 = vsel %vm273, %v239, 0
    %v305 = vsel %vm273, %v240, 0
    %v308 = vsel %vm273, %v241, 0
    %v311 = vsel %vm273, %v242, 0
    %v314 = vsel %vm273, %v243, 0
    %v317 = vsel %vm273, %v244, 0
    %v320 = vsel %vm273, %v245, 0
    %v323 = vsel %vm273, %v246, 0
    %v326 = vsel %vm273, %v247, 0
    %v329 = vsel %vm273, %v248, 0
    %v332 = vsel %vm273, %v249, 0
    %v335 = vsel %vm273, %v250, 0
    %v338 = vsel %vm273, %v251, 0
    %v341 = vsel %vm273, %v252, 0
    %v344 = vsel %vm273, %v253, 0
    %v347 = vsel %vm273, %v254, 0
    %v350 = vsel %vm273, %v255, 0
    %v353 = vsel %vm273, %v256, 0
    %v356 = vsel %vm273, %v257, 0
    %v359 = vsel %vm273, %v258, 0
    %v362 = vsel %vm273, %v259, 0
    %v365 = vsel %vm273, %v260, 0
    %v368 = vsel %vm273, %v261, 0
    %vm370 = vcmask 1043456
    %vm371 = vcmask 1044480
    %v372 = vsel %vm370, 4294967295, 65535
    %v373 = vsel %vm371, %v372, 0
    %v375 = vand.u32 %v271, %v373
    %377 = vmatpush.bf16.msra.mxu0 0
    %378 = vmatpush.bf16.msra.mxu0 0
    %379 = vmatpush.bf16.msra.mxu0 0
    %380 = vmatpush.bf16.msra.mxu0 0
    %381 = vmatpush.bf16.msra.mxu0 0
    %382 = vmatpush.bf16.msra.mxu0 0
    %383 = vmatpush.bf16.msra.mxu0 %v375
    %384 = vmatpush.bf16.msra.mxu0 %v270
    %385 = vmatmul.bf16.gmra.mxu0 %v275
    %v386 = vpop.f32.mrf.mxu0
    %v387 = vadd.f32 %v100, %v386
    %v388 = vpop.f32.mrf.mxu0
    %v389 = vadd.f32 %v100, %v388
    %390 = vmatmul.bf16.gmra.mxu0 %v278
    %v391 = vpop.f32.mrf.mxu0
    %v392 = vadd.f32 %v100, %v391
    %v393 = vpop.f32.mrf.mxu0
    %v394 = vadd.f32 %v100, %v393
    %395 = vmatmul.bf16.gmra.mxu0 %v281
    %v396 = vpop.f32.mrf.mxu0
    %v397 = vadd.f32 %v100, %v396
    %v398 = vpop.f32.mrf.mxu0
    %v399 = vadd.f32 %v100, %v398
    %400 = vmatmul.bf16.gmra.mxu0 %v284
    %v401 = vpop.f32.mrf.mxu0
    %v402 = vadd.f32 %v100, %v401
    %v403 = vpop.f32.mrf.mxu0
    %v404 = vadd.f32 %v100, %v403
    %405 = vmatmul.bf16.gmra.mxu0 %v287
    %v406 = vpop.f32.mrf.mxu0
    %v407 = vadd.f32 %v100, %v406
    %v408 = vpop.f32.mrf.mxu0
    %v409 = vadd.f32 %v100, %v408
    %410 = vmatmul.bf16.gmra.mxu0 %v290
    %v411 = vpop.f32.mrf.mxu0
    %v412 = vadd.f32 %v100, %v411
    %v413 = vpop.f32.mrf.mxu0
    %v414 = vadd.f32 %v100, %v413
    %415 = vmatmul.bf16.gmra.mxu0 %v293
    %v416 = vpop.f32.mrf.mxu0
    %v417 = vadd.f32 %v100, %v416
    %v418 = vpop.f32.mrf.mxu0
    %v419 = vadd.f32 %v100, %v418
    %420 = vmatmul.bf16.gmra.mxu0 %v296
    %v421 = vpop.f32.mrf.mxu0
    %v422 = vadd.f32 %v100, %v421
    %v423 = vpop.f32.mrf.mxu0
    %v424 = vadd.f32 %v100, %v423
    %425 = vmatmul.bf16.gmra.mxu0 %v299
    %v426 = vpop.f32.mrf.mxu0
    %v427 = vadd.f32 %v100, %v426
    %v428 = vpop.f32.mrf.mxu0
    %v429 = vadd.f32 %v100, %v428
    %430 = vmatmul.bf16.gmra.mxu0 %v302
    %v431 = vpop.f32.mrf.mxu0
    %v432 = vadd.f32 %v100, %v431
    %v433 = vpop.f32.mrf.mxu0
    %v434 = vadd.f32 %v100, %v433
    %435 = vmatmul.bf16.gmra.mxu0 %v305
    %v436 = vpop.f32.mrf.mxu0
    %v437 = vadd.f32 %v100, %v436
    %v438 = vpop.f32.mrf.mxu0
    %v439 = vadd.f32 %v100, %v438
    %440 = vmatmul.bf16.gmra.mxu0 %v308
    %v441 = vpop.f32.mrf.mxu0
    %v442 = vadd.f32 %v100, %v441
    %v443 = vpop.f32.mrf.mxu0
    %v444 = vadd.f32 %v100, %v443
    %445 = vmatmul.bf16.gmra.mxu0 %v311
    %v446 = vpop.f32.mrf.mxu0
    %v447 = vadd.f32 %v100, %v446
    %v448 = vpop.f32.mrf.mxu0
    %v449 = vadd.f32 %v100, %v448
    %450 = vmatmul.bf16.gmra.mxu0 %v314
    %v451 = vpop.f32.mrf.mxu0
    %v452 = vadd.f32 %v100, %v451
    %v453 = vpop.f32.mrf.mxu0
    %v454 = vadd.f32 %v100, %v453
    %455 = vmatmul.bf16.gmra.mxu0 %v317
    %v456 = vpop.f32.mrf.mxu0
    %v457 = vadd.f32 %v100, %v456
    %v458 = vpop.f32.mrf.mxu0
    %v459 = vadd.f32 %v100, %v458
    %460 = vmatmul.bf16.gmra.mxu0 %v320
    %v461 = vpop.f32.mrf.mxu0
    %v462 = vadd.f32 %v100, %v461
    %v463 = vpop.f32.mrf.mxu0
    %v464 = vadd.f32 %v100, %v463
    %465 = vmatmul.bf16.gmra.mxu0 %v323
    %v466 = vpop.f32.mrf.mxu0
    %v467 = vadd.f32 %v100, %v466
    %v468 = vpop.f32.mrf.mxu0
    %v469 = vadd.f32 %v100, %v468
    %470 = vmatmul.bf16.gmra.mxu0 %v326
    %v471 = vpop.f32.mrf.mxu0
    %v472 = vadd.f32 %v100, %v471
    %v473 = vpop.f32.mrf.mxu0
    %v474 = vadd.f32 %v100, %v473
    %475 = vmatmul.bf16.gmra.mxu0 %v329
    %v476 = vpop.f32.mrf.mxu0
    %v477 = vadd.f32 %v100, %v476
    %v478 = vpop.f32.mrf.mxu0
    %v479 = vadd.f32 %v100, %v478
    %480 = vmatmul.bf16.gmra.mxu0 %v332
    %v481 = vpop.f32.mrf.mxu0
    %v482 = vadd.f32 %v100, %v481
    %v483 = vpop.f32.mrf.mxu0
    %v484 = vadd.f32 %v100, %v483
    %485 = vmatmul.bf16.gmra.mxu0 %v335
    %v486 = vpop.f32.mrf.mxu0
    %v487 = vadd.f32 %v100, %v486
    %v488 = vpop.f32.mrf.mxu0
    %v489 = vadd.f32 %v100, %v488
    %490 = vmatmul.bf16.gmra.mxu0 %v338
    %v491 = vpop.f32.mrf.mxu0
    %v492 = vadd.f32 %v100, %v491
    %v493 = vpop.f32.mrf.mxu0
    %v494 = vadd.f32 %v100, %v493
    %495 = vmatmul.bf16.gmra.mxu0 %v341
    %v496 = vpop.f32.mrf.mxu0
    %v497 = vadd.f32 %v100, %v496
    %v498 = vpop.f32.mrf.mxu0
    %v499 = vadd.f32 %v100, %v498
    %500 = vmatmul.bf16.gmra.mxu0 %v344
    %v501 = vpop.f32.mrf.mxu0
    %v502 = vadd.f32 %v100, %v501
    %v503 = vpop.f32.mrf.mxu0
    %v504 = vadd.f32 %v100, %v503
    %505 = vmatmul.bf16.gmra.mxu0 %v347
    %v506 = vpop.f32.mrf.mxu0
    %v507 = vadd.f32 %v100, %v506
    %v508 = vpop.f32.mrf.mxu0
    %v509 = vadd.f32 %v100, %v508
    %510 = vmatmul.bf16.gmra.mxu0 %v350
    %v511 = vpop.f32.mrf.mxu0
    %v512 = vadd.f32 %v100, %v511
    %v513 = vpop.f32.mrf.mxu0
    %v514 = vadd.f32 %v100, %v513
    %515 = vmatmul.bf16.gmra.mxu0 %v353
    %v516 = vpop.f32.mrf.mxu0
    %v517 = vadd.f32 %v100, %v516
    %v518 = vpop.f32.mrf.mxu0
    %v519 = vadd.f32 %v100, %v518
    %520 = vmatmul.bf16.gmra.mxu0 %v356
    %v521 = vpop.f32.mrf.mxu0
    %v522 = vadd.f32 %v100, %v521
    %v523 = vpop.f32.mrf.mxu0
    %v524 = vadd.f32 %v100, %v523
    %525 = vmatmul.bf16.gmra.mxu0 %v359
    %v526 = vpop.f32.mrf.mxu0
    %v527 = vadd.f32 %v100, %v526
    %v528 = vpop.f32.mrf.mxu0
    %v529 = vadd.f32 %v100, %v528
    %530 = vmatmul.bf16.gmra.mxu0 %v362
    %v531 = vpop.f32.mrf.mxu0
    %v532 = vadd.f32 %v100, %v531
    %v533 = vpop.f32.mrf.mxu0
    %v534 = vadd.f32 %v100, %v533
    %535 = vmatmul.bf16.gmra.mxu0 %v365
    %v536 = vpop.f32.mrf.mxu0
    %v537 = vadd.f32 %v100, %v536
    %v538 = vpop.f32.mrf.mxu0
    %v539 = vadd.f32 %v100, %v538
    %540 = vmatmul.bf16.gmra.mxu0 %v368
    %v541 = vpop.f32.mrf.mxu0
    %v542 = vadd.f32 %v100, %v541
    %v543 = vpop.f32.mrf.mxu0
    %v544 = vadd.f32 %v100, %v543
    %545 = vdwg.mxu0
    %v546 = vmax.f32 %v387, 0.0
    %v547 = vmax.f32 %v389, 0.0
    %v548 = vmax.f32 %v392, 0.0
    %v549 = vmax.f32 %v394, 0.0
    %v550 = vmax.f32 %v397, 0.0
    %v551 = vmax.f32 %v399, 0.0
    %v552 = vmax.f32 %v402, 0.0
    %v553 = vmax.f32 %v404, 0.0
    %v554 = vmax.f32 %v407, 0.0
    %v555 = vmax.f32 %v409, 0.0
    %v556 = vmax.f32 %v412, 0.0
    %v557 = vmax.f32 %v414, 0.0
    %v558 = vmax.f32 %v417, 0.0
    %v559 = vmax.f32 %v419, 0.0
    %v560 = vmax.f32 %v422, 0.0
    %v561 = vmax.f32 %v424, 0.0
    %v562 = vmax.f32 %v427, 0.0
    %v563 = vmax.f32 %v429, 0.0
    %v564 = vmax.f32 %v432, 0.0
    %v565 = vmax.f32 %v434, 0.0
    %v566 = vmax.f32 %v437, 0.0
    %v567 = vmax.f32 %v439, 0.0
    %v568 = vmax.f32 %v442, 0.0
    %v569 = vmax.f32 %v444, 0.0
    %v570 = vmax.f32 %v447, 0.0
    %v571 = vmax.f32 %v449, 0.0
    %v572 = vmax.f32 %v452, 0.0
    %v573 = vmax.f32 %v454, 0.0
    %v574 = vmax.f32 %v457, 0.0
    %v575 = vmax.f32 %v459, 0.0
    %v576 = vmax.f32 %v462, 0.0
    %v577 = vmax.f32 %v464, 0.0
    %v578 = vmax.f32 %v467, 0.0
    %v579 = vmax.f32 %v469, 0.0
    %v580 = vmax.f32 %v472, 0.0
    %v581 = vmax.f32 %v474, 0.0
    %v582 = vmax.f32 %v477, 0.0
    %v583 = vmax.f32 %v479, 0.0
    %v584 = vmax.f32 %v482, 0.0
    %v585 = vmax.f32 %v484, 0.0
    %v586 = vmax.f32 %v487, 0.0
    %v587 = vmax.f32 %v489, 0.0
    %v588 = vmax.f32 %v492, 0.0
    %v589 = vmax.f32 %v494, 0.0
    %v590 = vmax.f32 %v497, 0.0
    %v591 = vmax.f32 %v499, 0.0
    %v592 = vmax.f32 %v502, 0.0
    %v593 = vmax.f32 %v504, 0.0
    %v594 = vmax.f32 %v507, 0.0
    %v595 = vmax.f32 %v509, 0.0
    %v596 = vmax.f32 %v512, 0.0
    %v597 = vmax.f32 %v514, 0.0
    %v598 = vmax.f32 %v517, 0.0
    %v599 = vmax.f32 %v519, 0.0
    %v600 = vmax.f32 %v522, 0.0
    %v601 = vmax.f32 %v524, 0.0
    %v602 = vmax.f32 %v527, 0.0
    %v603 = vmax.f32 %v529, 0.0
    %v604 = vmax.f32 %v532, 0.0
    %v605 = vmax.f32 %v534, 0.0
    %v606 = vmax.f32 %v537, 0.0
    %v607 = vmax.f32 %v539, 0.0
    %v608 = vmax.f32 %v542, 0.0
    %v609 = vmax.f32 %v544, 0.0
    %v610 = vmax.f32 %v546, %v554
    %v611 = vmax.f32 %v547, %v555
    %v612 = vmax.f32 %v548, %v556
    %v613 = vmax.f32 %v549, %v557
    %v614 = vmax.f32 %v550, %v558
    %v615 = vmax.f32 %v551, %v559
    %v616 = vmax.f32 %v552, %v560
    %v617 = vmax.f32 %v553, %v561
    %v618 = vmax.f32 %v578, %v586
    %v619 = vmax.f32 %v579, %v587
    %v620 = vmax.f32 %v580, %v588
    %v621 = vmax.f32 %v581, %v589
    %v622 = vmax.f32 %v582, %v590
    %v623 = vmax.f32 %v583, %v591
    %v624 = vmax.f32 %v584, %v592
    %v625 = vmax.f32 %v585, %v593
    %v626 = vmax.f32 %v562, %v570
    %v627 = vmax.f32 %v563, %v571
    %v628 = vmax.f32 %v564, %v572
    %v629 = vmax.f32 %v565, %v573
    %v630 = vmax.f32 %v566, %v574
    %v631 = vmax.f32 %v567, %v575
    %v632 = vmax.f32 %v568, %v576
    %v633 = vmax.f32 %v569, %v577
    %v634 = vmax.f32 %v594, %v602
    %v635 = vmax.f32 %v595, %v603
    %v636 = vmax.f32 %v596, %v604
    %v637 = vmax.f32 %v597, %v605
    %v638 = vmax.f32 %v598, %v606
    %v639 = vmax.f32 %v599, %v607
    %v640 = vmax.f32 %v600, %v608
    %v641 = vmax.f32 %v601, %v609
    %v642 = vmax.f32 %v610, %v626
    %v643 = vmax.f32 %v611, %v627
    %v644 = vmax.f32 %v612, %v628
    %v645 = vmax.f32 %v613, %v629
    %v646 = vmax.f32 %v614, %v630
    %v647 = vmax.f32 %v615, %v631
    %v648 = vmax.f32 %v616, %v632
    %v649 = vmax.f32 %v617, %v633
    %v650 = vmax.f32 %v618, %v634
    %v651 = vmax.f32 %v619, %v635
    %v652 = vmax.f32 %v620, %v636
    %v653 = vmax.f32 %v621, %v637
    %v654 = vmax.f32 %v622, %v638
    %v655 = vmax.f32 %v623, %v639
    %v656 = vmax.f32 %v624, %v640
    %v657 = vmax.f32 %v625, %v641
    %v675 = vrot.slane 0.0, 6
    %v676 = vrot.slane %v642, 6
    %v677 = vrot.slane %v643, 6
    %v678 = vrot.slane %v644, 6
    %v679 = vrot.slane %v645, 6
    %v680 = vrot.slane %v646, 6
    %v681 = vrot.slane %v647, 6
    %v682 = vrot.slane %v648, 6
    %v683 = vrot.slane %v649, 6
    %v684 = vrot.slane %v650, 6
    %v685 = vrot.slane %v651, 6
    %v686 = vrot.slane %v652, 6
    %v687 = vrot.slane %v653, 6
    %v688 = vrot.slane %v654, 6
    %v689 = vrot.slane %v655, 6
    %v690 = vrot.slane %v656, 6
    %v691 = vrot.slane %v657, 6
    %vm709 = vcmask 1041408
    %v710 = vsel %vm709, 0.0, %v675
    %v711 = vsel %vm709, 0.0, %v676
    %v712 = vsel %vm709, 0.0, %v677
    %v713 = vsel %vm709, 0.0, %v678
    %v714 = vsel %vm709, 0.0, %v679
    %v715 = vsel %vm709, 0.0, %v680
    %v716 = vsel %vm709, 0.0, %v681
    %v717 = vsel %vm709, 0.0, %v682
    %v718 = vsel %vm709, 0.0, %v683
    %v719 = vsel %vm709, 0.0, %v684
    %v720 = vsel %vm709, 0.0, %v685
    %v721 = vsel %vm709, 0.0, %v686
    %v722 = vsel %vm709, 0.0, %v687
    %v723 = vsel %vm709, 0.0, %v688
    %v724 = vsel %vm709, 0.0, %v689
    %v725 = vsel %vm709, 0.0, %v690
    %v726 = vsel %vm709, 0.0, %v691
    %v727 = vsel %vm709, %v675, 0.0
    %v728 = vsel %vm709, %v676, 0.0
    %v729 = vsel %vm709, %v677, 0.0
    %v730 = vsel %vm709, %v678, 0.0
    %v731 = vsel %vm709, %v679, 0.0
    %v732 = vsel %vm709, %v680, 0.0
    %v733 = vsel %vm709, %v681, 0.0
    %v734 = vsel %vm709, %v682, 0.0
    %v735 = vsel %vm709, %v683, 0.0
    %v736 = vsel %vm709, %v684, 0.0
    %v737 = vsel %vm709, %v685, 0.0
    %v738 = vsel %vm709, %v686, 0.0
    %v739 = vsel %vm709, %v687, 0.0
    %v740 = vsel %vm709, %v688, 0.0
    %v741 = vsel %vm709, %v689, 0.0
    %v742 = vsel %vm709, %v690, 0.0
    %v743 = vsel %vm709, %v691, 0.0
    %vm744 = vcmask 130048
    %745 = vst.msk [vmem:[#allocation2] sm:$0xff] %vm744, %v710
    %vm746 = vcmask 125952
    %747 = vst.msk [vmem:[#allocation2 + $0x8] sm:$0xf] %vm746, %v727
    %748 = vst.msk [vmem:[#allocation2 + $0x10] sm:$0xff] %vm744, %v710
    %749 = vst.msk [vmem:[#allocation2 + $0x18] sm:$0xf] %vm746, %v727
    %750 = vst.msk [vmem:[#allocation2 + $0x20] sm:$0xff] %vm744, %v711
    %751 = vst.msk [vmem:[#allocation2 + $0x28] sm:$0xf] %vm746, %v728
    %752 = vst.msk [vmem:[#allocation2 + $0x30] sm:$0xff] %vm744, %v712
    %753 = vst.msk [vmem:[#allocation2 + $0x38] sm:$0xf] %vm746, %v729
    %754 = vst.msk [vmem:[#allocation2 + $0x40] sm:$0xff] %vm744, %v713
    %755 = vst.msk [vmem:[#allocation2 + $0x48] sm:$0xf] %vm746, %v730
    %756 = vst.msk [vmem:[#allocation2 + $0x50] sm:$0xff] %vm744, %v714
    %757 = vst.msk [vmem:[#allocation2 + $0x58] sm:$0xf] %vm746, %v731
    %758 = vst.msk [vmem:[#allocation2 + $0x60] sm:$0xff] %vm744, %v715
    %759 = vst.msk [vmem:[#allocation2 + $0x68] sm:$0xf] %vm746, %v732
    %760 = vst.msk [vmem:[#allocation2 + $0x70] sm:$0xff] %vm744, %v716
    %761 = vst.msk [vmem:[#allocation2 + $0x78] sm:$0xf] %vm746, %v733
    %762 = vst.msk [vmem:[#allocation2 + $0x80] sm:$0xff] %vm744, %v717
    %763 = vst.msk [vmem:[#allocation2 + $0x88] sm:$0xf] %vm746, %v734
    %764 = vst.msk [vmem:[#allocation2 + $0x90] sm:$0xff] %vm744, %v718
    %765 = vst.msk [vmem:[#allocation2 + $0x98] sm:$0xf] %vm746, %v735
    %766 = vst.msk [vmem:[#allocation2 + $0xa0] sm:$0xff] %vm744, %v710
    %767 = vst.msk [vmem:[#allocation2 + $0xa8] sm:$0xf] %vm746, %v727
    %768 = vst.msk [vmem:[#allocation2 + $0xb0] sm:$0xff] %vm744, %v710
    %769 = vst.msk [vmem:[#allocation2 + $0xb8] sm:$0xf] %vm746, %v727
    %770 = vst.msk [vmem:[#allocation2 + $0xc0] sm:$0xff] %vm744, %v710
    %771 = vst.msk [vmem:[#allocation2 + $0xc8] sm:$0xf] %vm746, %v727
    %772 = vst.msk [vmem:[#allocation2 + $0xd0] sm:$0xff] %vm744, %v710
    %773 = vst.msk [vmem:[#allocation2 + $0xd8] sm:$0xf] %vm746, %v727
    %774 = vst.msk [vmem:[#allocation2 + $0xe0] sm:$0xff] %vm744, %v719
    %775 = vst.msk [vmem:[#allocation2 + $0xe8] sm:$0xf] %vm746, %v736
    %776 = vst.msk [vmem:[#allocation2 + $0xf0] sm:$0xff] %vm744, %v720
    %777 = vst.msk [vmem:[#allocation2 + $0xf8] sm:$0xf] %vm746, %v737
    %778 = vst.msk [vmem:[#allocation2 + $0x100] sm:$0xff] %vm744, %v721
    %779 = vst.msk [vmem:[#allocation2 + $0x108] sm:$0xf] %vm746, %v738
    %780 = vst.msk [vmem:[#allocation2 + $0x110] sm:$0xff] %vm744, %v722
    %781 = vst.msk [vmem:[#allocation2 + $0x118] sm:$0xf] %vm746, %v739
    %782 = vst.msk [vmem:[#allocation2 + $0x120] sm:$0xff] %vm744, %v723
    %783 = vst.msk [vmem:[#allocation2 + $0x128] sm:$0xf] %vm746, %v740
    %784 = vst.msk [vmem:[#allocation2 + $0x130] sm:$0xff] %vm744, %v724
    %785 = vst.msk [vmem:[#allocation2 + $0x138] sm:$0xf] %vm746, %v741
    %786 = vst.msk [vmem:[#allocation2 + $0x140] sm:$0xff] %vm744, %v725
    %787 = vst.msk [vmem:[#allocation2 + $0x148] sm:$0xf] %vm746, %v742
    %788 = vst.msk [vmem:[#allocation2 + $0x150] sm:$0xff] %vm744, %v726
    %789 = vst.msk [vmem:[#allocation2 + $0x158] sm:$0xf] %vm746, %v743
    %790 = vst.msk [vmem:[#allocation2 + $0x160] sm:$0xff] %vm744, %v710
    %791 = vst.msk [vmem:[#allocation2 + $0x168] sm:$0xf] %vm746, %v727
    %792 = vst.msk [vmem:[#allocation2 + $0x170] sm:$0xff] %vm744, %v710
    %793 = vst.msk [vmem:[#allocation2 + $0x178] sm:$0xf] %vm746, %v727
    %v794 = vld [vmem:[#allocation2] sm:$0xff]
    %v795 = vld [vmem:[#allocation2 + $0x10] sm:$0xff]
    %v796 = vld [vmem:[#allocation2 + $0x20] sm:$0xff]
    %v797 = vld [vmem:[#allocation2 + $0x30] sm:$0xff]
    %v798 = vld [vmem:[#allocation2 + $0x40] sm:$0xff]
    %v799 = vld [vmem:[#allocation2 + $0x50] sm:$0xff]
    %v800 = vld [vmem:[#allocation2 + $0x60] sm:$0xff]
    %v801 = vld [vmem:[#allocation2 + $0x70] sm:$0xff]
    %v802 = vld [vmem:[#allocation2 + $0xc0] sm:$0xff]
    %v803 = vld [vmem:[#allocation2 + $0xd0] sm:$0xff]
    %v804 = vld [vmem:[#allocation2 + $0xe0] sm:$0xff]
    %v805 = vld [vmem:[#allocation2 + $0xf0] sm:$0xff]
    %v806 = vld [vmem:[#allocation2 + $0x100] sm:$0xff]
    %v807 = vld [vmem:[#allocation2 + $0x110] sm:$0xff]
    %v808 = vld [vmem:[#allocation2 + $0x120] sm:$0xff]
    %v809 = vld [vmem:[#allocation2 + $0x130] sm:$0xff]
    %v810 = vld [vmem:[#allocation2 + $0x1] sm:$0xff]
    %v811 = vld [vmem:[#allocation2 + $0x11] sm:$0xff]
    %v812 = vld [vmem:[#allocation2 + $0x21] sm:$0xff]
    %v813 = vld [vmem:[#allocation2 + $0x31] sm:$0xff]
    %v814 = vld [vmem:[#allocation2 + $0x41] sm:$0xff]
    %v815 = vld [vmem:[#allocation2 + $0x51] sm:$0xff]
    %v816 = vld [vmem:[#allocation2 + $0x61] sm:$0xff]
    %v817 = vld [vmem:[#allocation2 + $0x71] sm:$0xff]
    %v818 = vld [vmem:[#allocation2 + $0xc1] sm:$0xff]
    %v819 = vld [vmem:[#allocation2 + $0xd1] sm:$0xff]
    %v820 = vld [vmem:[#allocation2 + $0xe1] sm:$0xff]
    %v821 = vld [vmem:[#allocation2 + $0xf1] sm:$0xff]
    %v822 = vld [vmem:[#allocation2 + $0x101] sm:$0xff]
    %v823 = vld [vmem:[#allocation2 + $0x111] sm:$0xff]
    %v824 = vld [vmem:[#allocation2 + $0x121] sm:$0xff]
    %v825 = vld [vmem:[#allocation2 + $0x131] sm:$0xff]
    %v826 = vld [vmem:[#allocation2 + $0x2] sm:$0xff]
    %v827 = vld [vmem:[#allocation2 + $0x12] sm:$0xff]
    %v828 = vld [vmem:[#allocation2 + $0x22] sm:$0xff]
    %v829 = vld [vmem:[#allocation2 + $0x32] sm:$0xff]
    %v830 = vld [vmem:[#allocation2 + $0x42] sm:$0xff]
    %v831 = vld [vmem:[#allocation2 + $0x52] sm:$0xff]
    %v832 = vld [vmem:[#allocation2 + $0x62] sm:$0xff]
    %v833 = vld [vmem:[#allocation2 + $0x72] sm:$0xff]
    %v834 = vld [vmem:[#allocation2 + $0xc2] sm:$0xff]
    %v835 = vld [vmem:[#allocation2 + $0xd2] sm:$0xff]
    %v836 = vld [vmem:[#allocation2 + $0xe2] sm:$0xff]
    %v837 = vld [vmem:[#allocation2 + $0xf2] sm:$0xff]
    %v838 = vld [vmem:[#allocation2 + $0x102] sm:$0xff]
    %v839 = vld [vmem:[#allocation2 + $0x112] sm:$0xff]
    %v840 = vld [vmem:[#allocation2 + $0x122] sm:$0xff]
    %v841 = vld [vmem:[#allocation2 + $0x132] sm:$0xff]
    %v842 = vld [vmem:[#allocation2 + $0x3] sm:$0xff]
    %v843 = vld [vmem:[#allocation2 + $0x13] sm:$0xff]
    %v844 = vld [vmem:[#allocation2 + $0x23] sm:$0xff]
    %v845 = vld [vmem:[#allocation2 + $0x33] sm:$0xff]
    %v846 = vld [vmem:[#allocation2 + $0x43] sm:$0xff]
    %v847 = vld [vmem:[#allocation2 + $0x53] sm:$0xff]
    %v848 = vld [vmem:[#allocation2 + $0x63] sm:$0xff]
    %v849 = vld [vmem:[#allocation2 + $0x73] sm:$0xff]
    %v850 = vld [vmem:[#allocation2 + $0xc3] sm:$0xff]
    %v851 = vld [vmem:[#allocation2 + $0xd3] sm:$0xff]
    %v852 = vld [vmem:[#allocation2 + $0xe3] sm:$0xff]
    %v853 = vld [vmem:[#allocation2 + $0xf3] sm:$0xff]
    %v854 = vld [vmem:[#allocation2 + $0x103] sm:$0xff]
    %v855 = vld [vmem:[#allocation2 + $0x113] sm:$0xff]
    %v856 = vld [vmem:[#allocation2 + $0x123] sm:$0xff]
    %v857 = vld [vmem:[#allocation2 + $0x133] sm:$0xff]
    %v858 = vld [vmem:[#allocation2 + $0x4] sm:$0xff]
    %v859 = vld [vmem:[#allocation2 + $0x14] sm:$0xff]
    %v860 = vld [vmem:[#allocation2 + $0x24] sm:$0xff]
    %v861 = vld [vmem:[#allocation2 + $0x34] sm:$0xff]
    %v862 = vld [vmem:[#allocation2 + $0x44] sm:$0xff]
    %v863 = vld [vmem:[#allocation2 + $0x54] sm:$0xff]
    %v864 = vld [vmem:[#allocation2 + $0x64] sm:$0xff]
    %v865 = vld [vmem:[#allocation2 + $0x74] sm:$0xff]
    %v866 = vld [vmem:[#allocation2 + $0xc4] sm:$0xff]
    %v867 = vld [vmem:[#allocation2 + $0xd4] sm:$0xff]
    %v868 = vld [vmem:[#allocation2 + $0xe4] sm:$0xff]
    %v869 = vld [vmem:[#allocation2 + $0xf4] sm:$0xff]
    %v870 = vld [vmem:[#allocation2 + $0x104] sm:$0xff]
    %v871 = vld [vmem:[#allocation2 + $0x114] sm:$0xff]
    %v872 = vld [vmem:[#allocation2 + $0x124] sm:$0xff]
    %v873 = vld [vmem:[#allocation2 + $0x134] sm:$0xff]
    %s874 = scalar_lea.vmem [#allocation2], 16
    %v875 = vld [vmem:[%s874] sm:$0xff]
    %v876 = vld [vmem:[%s874 + $0x10] sm:$0xff]
    %v877 = vld [vmem:[%s874 + $0x20] sm:$0xff]
    %v878 = vld [vmem:[%s874 + $0x30] sm:$0xff]
    %v879 = vld [vmem:[%s874 + $0x40] sm:$0xff]
    %v880 = vld [vmem:[%s874 + $0x50] sm:$0xff]
    %v881 = vld [vmem:[%s874 + $0x60] sm:$0xff]
    %v882 = vld [vmem:[%s874 + $0x70] sm:$0xff]
    %v883 = vld [vmem:[%s874 + $0xc0] sm:$0xff]
    %v884 = vld [vmem:[%s874 + $0xd0] sm:$0xff]
    %v885 = vld [vmem:[%s874 + $0xe0] sm:$0xff]
    %v886 = vld [vmem:[%s874 + $0xf0] sm:$0xff]
    %v887 = vld [vmem:[%s874 + $0x100] sm:$0xff]
    %v888 = vld [vmem:[%s874 + $0x110] sm:$0xff]
    %v889 = vld [vmem:[%s874 + $0x120] sm:$0xff]
    %v890 = vld [vmem:[%s874 + $0x130] sm:$0xff]
    %v891 = vld [vmem:[%s874 + $0x1] sm:$0xff]
    %v892 = vld [vmem:[%s874 + $0x11] sm:$0xff]
    %v893 = vld [vmem:[%s874 + $0x21] sm:$0xff]
    %v894 = vld [vmem:[%s874 + $0x31] sm:$0xff]
    %v895 = vld [vmem:[%s874 + $0x41] sm:$0xff]
    %v896 = vld [vmem:[%s874 + $0x51] sm:$0xff]
    %v897 = vld [vmem:[%s874 + $0x61] sm:$0xff]
    %v898 = vld [vmem:[%s874 + $0x71] sm:$0xff]
    %v899 = vld [vmem:[%s874 + $0xc1] sm:$0xff]
    %v900 = vld [vmem:[%s874 + $0xd1] sm:$0xff]
    %v901 = vld [vmem:[%s874 + $0xe1] sm:$0xff]
    %v902 = vld [vmem:[%s874 + $0xf1] sm:$0xff]
    %v903 = vld [vmem:[%s874 + $0x101] sm:$0xff]
    %v904 = vld [vmem:[%s874 + $0x111] sm:$0xff]
    %v905 = vld [vmem:[%s874 + $0x121] sm:$0xff]
    %v906 = vld [vmem:[%s874 + $0x131] sm:$0xff]
    %v907 = vld [vmem:[%s874 + $0x2] sm:$0xff]
    %v908 = vld [vmem:[%s874 + $0x12] sm:$0xff]
    %v909 = vld [vmem:[%s874 + $0x22] sm:$0xff]
    %v910 = vld [vmem:[%s874 + $0x32] sm:$0xff]
    %v911 = vld [vmem:[%s874 + $0x42] sm:$0xff]
    %v912 = vld [vmem:[%s874 + $0x52] sm:$0xff]
    %v913 = vld [vmem:[%s874 + $0x62] sm:$0xff]
    %v914 = vld [vmem:[%s874 + $0x72] sm:$0xff]
    %v915 = vld [vmem:[%s874 + $0xc2] sm:$0xff]
    %v916 = vld [vmem:[%s874 + $0xd2] sm:$0xff]
    %v917 = vld [vmem:[%s874 + $0xe2] sm:$0xff]
    %v918 = vld [vmem:[%s874 + $0xf2] sm:$0xff]
    %v919 = vld [vmem:[%s874 + $0x102] sm:$0xff]
    %v920 = vld [vmem:[%s874 + $0x112] sm:$0xff]
    %v921 = vld [vmem:[%s874 + $0x122] sm:$0xff]
    %v922 = vld [vmem:[%s874 + $0x132] sm:$0xff]
    %v923 = vld [vmem:[%s874 + $0x3] sm:$0xff]
    %v924 = vld [vmem:[%s874 + $0x13] sm:$0xff]
    %v925 = vld [vmem:[%s874 + $0x23] sm:$0xff]
    %v926 = vld [vmem:[%s874 + $0x33] sm:$0xff]
    %v927 = vld [vmem:[%s874 + $0x43] sm:$0xff]
    %v928 = vld [vmem:[%s874 + $0x53] sm:$0xff]
    %v929 = vld [vmem:[%s874 + $0x63] sm:$0xff]
    %v930 = vld [vmem:[%s874 + $0x73] sm:$0xff]
    %v931 = vld [vmem:[%s874 + $0xc3] sm:$0xff]
    %v932 = vld [vmem:[%s874 + $0xd3] sm:$0xff]
    %v933 = vld [vmem:[%s874 + $0xe3] sm:$0xff]
    %v934 = vld [vmem:[%s874 + $0xf3] sm:$0xff]
    %v935 = vld [vmem:[%s874 + $0x103] sm:$0xff]
    %v936 = vld [vmem:[%s874 + $0x113] sm:$0xff]
    %v937 = vld [vmem:[%s874 + $0x123] sm:$0xff]
    %v938 = vld [vmem:[%s874 + $0x133] sm:$0xff]
    %v939 = vld [vmem:[%s874 + $0x4] sm:$0xff]
    %v940 = vld [vmem:[%s874 + $0x14] sm:$0xff]
    %v941 = vld [vmem:[%s874 + $0x24] sm:$0xff]
    %v942 = vld [vmem:[%s874 + $0x34] sm:$0xff]
    %v943 = vld [vmem:[%s874 + $0x44] sm:$0xff]
    %v944 = vld [vmem:[%s874 + $0x54] sm:$0xff]
    %v945 = vld [vmem:[%s874 + $0x64] sm:$0xff]
    %v946 = vld [vmem:[%s874 + $0x74] sm:$0xff]
    %v947 = vld [vmem:[%s874 + $0xc4] sm:$0xff]
    %v948 = vld [vmem:[%s874 + $0xd4] sm:$0xff]
    %v949 = vld [vmem:[%s874 + $0xe4] sm:$0xff]
    %v950 = vld [vmem:[%s874 + $0xf4] sm:$0xff]
    %v951 = vld [vmem:[%s874 + $0x104] sm:$0xff]
    %v952 = vld [vmem:[%s874 + $0x114] sm:$0xff]
    %v953 = vld [vmem:[%s874 + $0x124] sm:$0xff]
    %v954 = vld [vmem:[%s874 + $0x134] sm:$0xff]
    %s955 = scalar_lea.vmem [#allocation2], 32
    %v956 = vld [vmem:[%s955] sm:$0xff]
    %v957 = vld [vmem:[%s955 + $0x10] sm:$0xff]
    %v958 = vld [vmem:[%s955 + $0x20] sm:$0xff]
    %v959 = vld [vmem:[%s955 + $0x30] sm:$0xff]
    %v960 = vld [vmem:[%s955 + $0x40] sm:$0xff]
    %v961 = vld [vmem:[%s955 + $0x50] sm:$0xff]
    %v962 = vld [vmem:[%s955 + $0x60] sm:$0xff]
    %v963 = vld [vmem:[%s955 + $0x70] sm:$0xff]
    %v964 = vld [vmem:[%s955 + $0xc0] sm:$0xff]
    %v965 = vld [vmem:[%s955 + $0xd0] sm:$0xff]
    %v966 = vld [vmem:[%s955 + $0xe0] sm:$0xff]
    %v967 = vld [vmem:[%s955 + $0xf0] sm:$0xff]
    %v968 = vld [vmem:[%s955 + $0x100] sm:$0xff]
    %v969 = vld [vmem:[%s955 + $0x110] sm:$0xff]
    %v970 = vld [vmem:[%s955 + $0x120] sm:$0xff]
    %v971 = vld [vmem:[%s955 + $0x130] sm:$0xff]
    %v972 = vld [vmem:[%s955 + $0x1] sm:$0xff]
    %v973 = vld [vmem:[%s955 + $0x11] sm:$0xff]
    %v974 = vld [vmem:[%s955 + $0x21] sm:$0xff]
    %v975 = vld [vmem:[%s955 + $0x31] sm:$0xff]
    %v976 = vld [vmem:[%s955 + $0x41] sm:$0xff]
    %v977 = vld [vmem:[%s955 + $0x51] sm:$0xff]
    %v978 = vld [vmem:[%s955 + $0x61] sm:$0xff]
    %v979 = vld [vmem:[%s955 + $0x71] sm:$0xff]
    %v980 = vld [vmem:[%s955 + $0xc1] sm:$0xff]
    %v981 = vld [vmem:[%s955 + $0xd1] sm:$0xff]
    %v982 = vld [vmem:[%s955 + $0xe1] sm:$0xff]
    %v983 = vld [vmem:[%s955 + $0xf1] sm:$0xff]
    %v984 = vld [vmem:[%s955 + $0x101] sm:$0xff]
    %v985 = vld [vmem:[%s955 + $0x111] sm:$0xff]
    %v986 = vld [vmem:[%s955 + $0x121] sm:$0xff]
    %v987 = vld [vmem:[%s955 + $0x131] sm:$0xff]
    %v988 = vld [vmem:[%s955 + $0x2] sm:$0xff]
    %v989 = vld [vmem:[%s955 + $0x12] sm:$0xff]
    %v990 = vld [vmem:[%s955 + $0x22] sm:$0xff]
    %v991 = vld [vmem:[%s955 + $0x32] sm:$0xff]
    %v992 = vld [vmem:[%s955 + $0x42] sm:$0xff]
    %v993 = vld [vmem:[%s955 + $0x52] sm:$0xff]
    %v994 = vld [vmem:[%s955 + $0x62] sm:$0xff]
    %v995 = vld [vmem:[%s955 + $0x72] sm:$0xff]
    %v996 = vld [vmem:[%s955 + $0xc2] sm:$0xff]
    %v997 = vld [vmem:[%s955 + $0xd2] sm:$0xff]
    %v998 = vld [vmem:[%s955 + $0xe2] sm:$0xff]
    %v999 = vld [vmem:[%s955 + $0xf2] sm:$0xff]
    %v1000 = vld [vmem:[%s955 + $0x102] sm:$0xff]
    %v1001 = vld [vmem:[%s955 + $0x112] sm:$0xff]
    %v1002 = vld [vmem:[%s955 + $0x122] sm:$0xff]
    %v1003 = vld [vmem:[%s955 + $0x132] sm:$0xff]
    %v1004 = vld [vmem:[%s955 + $0x3] sm:$0xff]
    %v1005 = vld [vmem:[%s955 + $0x13] sm:$0xff]
    %v1006 = vld [vmem:[%s955 + $0x23] sm:$0xff]
    %v1007 = vld [vmem:[%s955 + $0x33] sm:$0xff]
    %v1008 = vld [vmem:[%s955 + $0x43] sm:$0xff]
    %v1009 = vld [vmem:[%s955 + $0x53] sm:$0xff]
    %v1010 = vld [vmem:[%s955 + $0x63] sm:$0xff]
    %v1011 = vld [vmem:[%s955 + $0x73] sm:$0xff]
    %v1012 = vld [vmem:[%s955 + $0xc3] sm:$0xff]
    %v1013 = vld [vmem:[%s955 + $0xd3] sm:$0xff]
    %v1014 = vld [vmem:[%s955 + $0xe3] sm:$0xff]
    %v1015 = vld [vmem:[%s955 + $0xf3] sm:$0xff]
    %v1016 = vld [vmem:[%s955 + $0x103] sm:$0xff]
    %v1017 = vld [vmem:[%s955 + $0x113] sm:$0xff]
    %v1018 = vld [vmem:[%s955 + $0x123] sm:$0xff]
    %v1019 = vld [vmem:[%s955 + $0x133] sm:$0xff]
    %v1020 = vld [vmem:[%s955 + $0x4] sm:$0xff]
    %v1021 = vld [vmem:[%s955 + $0x14] sm:$0xff]
    %v1022 = vld [vmem:[%s955 + $0x24] sm:$0xff]
    %v1023 = vld [vmem:[%s955 + $0x34] sm:$0xff]
    %v1024 = vld [vmem:[%s955 + $0x44] sm:$0xff]
    %v1025 = vld [vmem:[%s955 + $0x54] sm:$0xff]
    %v1026 = vld [vmem:[%s955 + $0x64] sm:$0xff]
    %v1027 = vld [vmem:[%s955 + $0x74] sm:$0xff]
    %v1028 = vld [vmem:[%s955 + $0xc4] sm:$0xff]
    %v1029 = vld [vmem:[%s955 + $0xd4] sm:$0xff]
    %v1030 = vld [vmem:[%s955 + $0xe4] sm:$0xff]
    %v1031 = vld [vmem:[%s955 + $0xf4] sm:$0xff]
    %v1032 = vld [vmem:[%s955 + $0x104] sm:$0xff]
    %v1033 = vld [vmem:[%s955 + $0x114] sm:$0xff]
    %v1034 = vld [vmem:[%s955 + $0x124] sm:$0xff]
    %v1035 = vld [vmem:[%s955 + $0x134] sm:$0xff]
    %s1036 = scalar_lea.vmem [#allocation2], 48
    %v1037 = vld [vmem:[%s1036] sm:$0xff]
    %v1038 = vld [vmem:[%s1036 + $0x10] sm:$0xff]
    %v1039 = vld [vmem:[%s1036 + $0x20] sm:$0xff]
    %v1040 = vld [vmem:[%s1036 + $0x30] sm:$0xff]
    %v1041 = vld [vmem:[%s1036 + $0x40] sm:$0xff]
    %v1042 = vld [vmem:[%s1036 + $0x50] sm:$0xff]
    %v1043 = vld [vmem:[%s1036 + $0x60] sm:$0xff]
    %v1044 = vld [vmem:[%s1036 + $0x70] sm:$0xff]
    %v1045 = vld [vmem:[%s1036 + $0xc0] sm:$0xff]
    %v1046 = vld [vmem:[%s1036 + $0xd0] sm:$0xff]
    %v1047 = vld [vmem:[%s1036 + $0xe0] sm:$0xff]
    %v1048 = vld [vmem:[%s1036 + $0xf0] sm:$0xff]
    %v1049 = vld [vmem:[%s1036 + $0x100] sm:$0xff]
    %v1050 = vld [vmem:[%s1036 + $0x110] sm:$0xff]
    %v1051 = vld [vmem:[%s1036 + $0x120] sm:$0xff]
    %v1052 = vld [vmem:[%s1036 + $0x130] sm:$0xff]
    %v1053 = vld [vmem:[%s1036 + $0x1] sm:$0xff]
    %v1054 = vld [vmem:[%s1036 + $0x11] sm:$0xff]
    %v1055 = vld [vmem:[%s1036 + $0x21] sm:$0xff]
    %v1056 = vld [vmem:[%s1036 + $0x31] sm:$0xff]
    %v1057 = vld [vmem:[%s1036 + $0x41] sm:$0xff]
    %v1058 = vld [vmem:[%s1036 + $0x51] sm:$0xff]
    %v1059 = vld [vmem:[%s1036 + $0x61] sm:$0xff]
    %v1060 = vld [vmem:[%s1036 + $0x71] sm:$0xff]
    %v1061 = vld [vmem:[%s1036 + $0xc1] sm:$0xff]
    %v1062 = vld [vmem:[%s1036 + $0xd1] sm:$0xff]
    %v1063 = vld [vmem:[%s1036 + $0xe1] sm:$0xff]
    %v1064 = vld [vmem:[%s1036 + $0xf1] sm:$0xff]
    %v1065 = vld [vmem:[%s1036 + $0x101] sm:$0xff]
    %v1066 = vld [vmem:[%s1036 + $0x111] sm:$0xff]
    %v1067 = vld [vmem:[%s1036 + $0x121] sm:$0xff]
    %v1068 = vld [vmem:[%s1036 + $0x131] sm:$0xff]
    %v1069 = vld [vmem:[%s1036 + $0x2] sm:$0xff]
    %v1070 = vld [vmem:[%s1036 + $0x12] sm:$0xff]
    %v1071 = vld [vmem:[%s1036 + $0x22] sm:$0xff]
    %v1072 = vld [vmem:[%s1036 + $0x32] sm:$0xff]
    %v1073 = vld [vmem:[%s1036 + $0x42] sm:$0xff]
    %v1074 = vld [vmem:[%s1036 + $0x52] sm:$0xff]
    %v1075 = vld [vmem:[%s1036 + $0x62] sm:$0xff]
    %v1076 = vld [vmem:[%s1036 + $0x72] sm:$0xff]
    %v1077 = vld [vmem:[%s1036 + $0xc2] sm:$0xff]
    %v1078 = vld [vmem:[%s1036 + $0xd2] sm:$0xff]
    %v1079 = vld [vmem:[%s1036 + $0xe2] sm:$0xff]
    %v1080 = vld [vmem:[%s1036 + $0xf2] sm:$0xff]
    %v1081 = vld [vmem:[%s1036 + $0x102] sm:$0xff]
    %v1082 = vld [vmem:[%s1036 + $0x112] sm:$0xff]
    %v1083 = vld [vmem:[%s1036 + $0x122] sm:$0xff]
    %v1084 = vld [vmem:[%s1036 + $0x132] sm:$0xff]
    %v1085 = vld [vmem:[%s1036 + $0x3] sm:$0xff]
    %v1086 = vld [vmem:[%s1036 + $0x13] sm:$0xff]
    %v1087 = vld [vmem:[%s1036 + $0x23] sm:$0xff]
    %v1088 = vld [vmem:[%s1036 + $0x33] sm:$0xff]
    %v1089 = vld [vmem:[%s1036 + $0x43] sm:$0xff]
    %v1090 = vld [vmem:[%s1036 + $0x53] sm:$0xff]
    %v1091 = vld [vmem:[%s1036 + $0x63] sm:$0xff]
    %v1092 = vld [vmem:[%s1036 + $0x73] sm:$0xff]
    %v1093 = vld [vmem:[%s1036 + $0xc3] sm:$0xff]
    %v1094 = vld [vmem:[%s1036 + $0xd3] sm:$0xff]
    %v1095 = vld [vmem:[%s1036 + $0xe3] sm:$0xff]
    %v1096 = vld [vmem:[%s1036 + $0xf3] sm:$0xff]
    %v1097 = vld [vmem:[%s1036 + $0x103] sm:$0xff]
    %v1098 = vld [vmem:[%s1036 + $0x113] sm:$0xff]
    %v1099 = vld [vmem:[%s1036 + $0x123] sm:$0xff]
    %v1100 = vld [vmem:[%s1036 + $0x133] sm:$0xff]
    %v1101 = vld [vmem:[%s1036 + $0x4] sm:$0xff]
    %v1102 = vld [vmem:[%s1036 + $0x14] sm:$0xff]
    %v1103 = vld [vmem:[%s1036 + $0x24] sm:$0xff]
    %v1104 = vld [vmem:[%s1036 + $0x34] sm:$0xff]
    %v1105 = vld [vmem:[%s1036 + $0x44] sm:$0xff]
    %v1106 = vld [vmem:[%s1036 + $0x54] sm:$0xff]
    %v1107 = vld [vmem:[%s1036 + $0x64] sm:$0xff]
    %v1108 = vld [vmem:[%s1036 + $0x74] sm:$0xff]
    %v1109 = vld [vmem:[%s1036 + $0xc4] sm:$0xff]
    %v1110 = vld [vmem:[%s1036 + $0xd4] sm:$0xff]
    %v1111 = vld [vmem:[%s1036 + $0xe4] sm:$0xff]
    %v1112 = vld [vmem:[%s1036 + $0xf4] sm:$0xff]
    %v1113 = vld [vmem:[%s1036 + $0x104] sm:$0xff]
    %v1114 = vld [vmem:[%s1036 + $0x114] sm:$0xff]
    %v1115 = vld [vmem:[%s1036 + $0x124] sm:$0xff]
    %v1116 = vld [vmem:[%s1036 + $0x134] sm:$0xff]
    %s1117 = scalar_lea.vmem [#allocation2], 64
    %v1118 = vld [vmem:[%s1117] sm:$0xff]
    %v1119 = vld [vmem:[%s1117 + $0x10] sm:$0xff]
    %v1120 = vld [vmem:[%s1117 + $0x20] sm:$0xff]
    %v1121 = vld [vmem:[%s1117 + $0x30] sm:$0xff]
    %v1122 = vld [vmem:[%s1117 + $0x40] sm:$0xff]
    %v1123 = vld [vmem:[%s1117 + $0x50] sm:$0xff]
    %v1124 = vld [vmem:[%s1117 + $0x60] sm:$0xff]
    %v1125 = vld [vmem:[%s1117 + $0x70] sm:$0xff]
    %v1126 = vld [vmem:[%s1117 + $0xc0] sm:$0xff]
    %v1127 = vld [vmem:[%s1117 + $0xd0] sm:$0xff]
    %v1128 = vld [vmem:[%s1117 + $0xe0] sm:$0xff]
    %v1129 = vld [vmem:[%s1117 + $0xf0] sm:$0xff]
    %v1130 = vld [vmem:[%s1117 + $0x100] sm:$0xff]
    %v1131 = vld [vmem:[%s1117 + $0x110] sm:$0xff]
    %v1132 = vld [vmem:[%s1117 + $0x120] sm:$0xff]
    %v1133 = vld [vmem:[%s1117 + $0x130] sm:$0xff]
    %v1134 = vld [vmem:[%s1117 + $0x1] sm:$0xff]
    %v1135 = vld [vmem:[%s1117 + $0x11] sm:$0xff]
    %v1136 = vld [vmem:[%s1117 + $0x21] sm:$0xff]
    %v1137 = vld [vmem:[%s1117 + $0x31] sm:$0xff]
    %v1138 = vld [vmem:[%s1117 + $0x41] sm:$0xff]
    %v1139 = vld [vmem:[%s1117 + $0x51] sm:$0xff]
    %v1140 = vld [vmem:[%s1117 + $0x61] sm:$0xff]
    %v1141 = vld [vmem:[%s1117 + $0x71] sm:$0xff]
    %v1142 = vld [vmem:[%s1117 + $0xc1] sm:$0xff]
    %v1143 = vld [vmem:[%s1117 + $0xd1] sm:$0xff]
    %v1144 = vld [vmem:[%s1117 + $0xe1] sm:$0xff]
    %v1145 = vld [vmem:[%s1117 + $0xf1] sm:$0xff]
    %v1146 = vld [vmem:[%s1117 + $0x101] sm:$0xff]
    %v1147 = vld [vmem:[%s1117 + $0x111] sm:$0xff]
    %v1148 = vld [vmem:[%s1117 + $0x121] sm:$0xff]
    %v1149 = vld [vmem:[%s1117 + $0x131] sm:$0xff]
    %v1150 = vld [vmem:[%s1117 + $0x2] sm:$0xff]
    %v1151 = vld [vmem:[%s1117 + $0x12] sm:$0xff]
    %v1152 = vld [vmem:[%s1117 + $0x22] sm:$0xff]
    %v1153 = vld [vmem:[%s1117 + $0x32] sm:$0xff]
    %v1154 = vld [vmem:[%s1117 + $0x42] sm:$0xff]
    %v1155 = vld [vmem:[%s1117 + $0x52] sm:$0xff]
    %v1156 = vld [vmem:[%s1117 + $0x62] sm:$0xff]
    %v1157 = vld [vmem:[%s1117 + $0x72] sm:$0xff]
    %v1158 = vld [vmem:[%s1117 + $0xc2] sm:$0xff]
    %v1159 = vld [vmem:[%s1117 + $0xd2] sm:$0xff]
    %v1160 = vld [vmem:[%s1117 + $0xe2] sm:$0xff]
    %v1161 = vld [vmem:[%s1117 + $0xf2] sm:$0xff]
    %v1162 = vld [vmem:[%s1117 + $0x102] sm:$0xff]
    %v1163 = vld [vmem:[%s1117 + $0x112] sm:$0xff]
    %v1164 = vld [vmem:[%s1117 + $0x122] sm:$0xff]
    %v1165 = vld [vmem:[%s1117 + $0x132] sm:$0xff]
    %v1166 = vld [vmem:[%s1117 + $0x3] sm:$0xff]
    %v1167 = vld [vmem:[%s1117 + $0x13] sm:$0xff]
    %v1168 = vld [vmem:[%s1117 + $0x23] sm:$0xff]
    %v1169 = vld [vmem:[%s1117 + $0x33] sm:$0xff]
    %v1170 = vld [vmem:[%s1117 + $0x43] sm:$0xff]
    %v1171 = vld [vmem:[%s1117 + $0x53] sm:$0xff]
    %v1172 = vld [vmem:[%s1117 + $0x63] sm:$0xff]
    %v1173 = vld [vmem:[%s1117 + $0x73] sm:$0xff]
    %v1174 = vld [vmem:[%s1117 + $0xc3] sm:$0xff]
    %v1175 = vld [vmem:[%s1117 + $0xd3] sm:$0xff]
    %v1176 = vld [vmem:[%s1117 + $0xe3] sm:$0xff]
    %v1177 = vld [vmem:[%s1117 + $0xf3] sm:$0xff]
    %v1178 = vld [vmem:[%s1117 + $0x103] sm:$0xff]
    %v1179 = vld [vmem:[%s1117 + $0x113] sm:$0xff]
    %v1180 = vld [vmem:[%s1117 + $0x123] sm:$0xff]
    %v1181 = vld [vmem:[%s1117 + $0x133] sm:$0xff]
    %v1182 = vld [vmem:[%s1117 + $0x4] sm:$0xff]
    %v1183 = vld [vmem:[%s1117 + $0x14] sm:$0xff]
    %v1184 = vld [vmem:[%s1117 + $0x24] sm:$0xff]
    %v1185 = vld [vmem:[%s1117 + $0x34] sm:$0xff]
    %v1186 = vld [vmem:[%s1117 + $0x44] sm:$0xff]
    %v1187 = vld [vmem:[%s1117 + $0x54] sm:$0xff]
    %v1188 = vld [vmem:[%s1117 + $0x64] sm:$0xff]
    %v1189 = vld [vmem:[%s1117 + $0x74] sm:$0xff]
    %v1190 = vld [vmem:[%s1117 + $0xc4] sm:$0xff]
    %v1191 = vld [vmem:[%s1117 + $0xd4] sm:$0xff]
    %v1192 = vld [vmem:[%s1117 + $0xe4] sm:$0xff]
    %v1193 = vld [vmem:[%s1117 + $0xf4] sm:$0xff]
    %v1194 = vld [vmem:[%s1117 + $0x104] sm:$0xff]
    %v1195 = vld [vmem:[%s1117 + $0x114] sm:$0xff]
    %v1196 = vld [vmem:[%s1117 + $0x124] sm:$0xff]
    %v1197 = vld [vmem:[%s1117 + $0x134] sm:$0xff]
    %1214 = vrot.lane.b32.xlu0 %v810, 16
    %v1215 = vpop.permute.xlu0 %1214
    %1216 = vrot.lane.b32.xlu0 %v811, 16
    %v1217 = vpop.permute.xlu0 %1216
    %1218 = vrot.lane.b32.xlu0 %v812, 16
    %v1219 = vpop.permute.xlu0 %1218
    %1220 = vrot.lane.b32.xlu0 %v813, 16
    %v1221 = vpop.permute.xlu0 %1220
    %1222 = vrot.lane.b32.xlu0 %v814, 16
    %v1223 = vpop.permute.xlu0 %1222
    %1224 = vrot.lane.b32.xlu0 %v815, 16
    %v1225 = vpop.permute.xlu0 %1224
    %1226 = vrot.lane.b32.xlu0 %v816, 16
    %v1227 = vpop.permute.xlu0 %1226
    %1228 = vrot.lane.b32.xlu0 %v817, 16
    %v1229 = vpop.permute.xlu0 %1228
    %1230 = vrot.lane.b32.xlu0 %v818, 16
    %v1231 = vpop.permute.xlu0 %1230
    %1232 = vrot.lane.b32.xlu0 %v819, 16
    %v1233 = vpop.permute.xlu0 %1232
    %1234 = vrot.lane.b32.xlu0 %v820, 16
    %v1235 = vpop.permute.xlu0 %1234
    %1236 = vrot.lane.b32.xlu0 %v821, 16
    %v1237 = vpop.permute.xlu0 %1236
    %1238 = vrot.lane.b32.xlu0 %v822, 16
    %v1239 = vpop.permute.xlu0 %1238
    %1240 = vrot.lane.b32.xlu0 %v823, 16
    %v1241 = vpop.permute.xlu0 %1240
    %1242 = vrot.lane.b32.xlu0 %v824, 16
    %v1243 = vpop.permute.xlu0 %1242
    %1244 = vrot.lane.b32.xlu0 %v825, 16
    %v1245 = vpop.permute.xlu0 %1244
    %1278 = vrot.lane.b32.xlu0 %v826, 32
    %v1279 = vpop.permute.xlu0 %1278
    %1280 = vrot.lane.b32.xlu0 %v827, 32
    %v1281 = vpop.permute.xlu0 %1280
    %1282 = vrot.lane.b32.xlu0 %v828, 32
    %v1283 = vpop.permute.xlu0 %1282
    %1284 = vrot.lane.b32.xlu0 %v829, 32
    %v1285 = vpop.permute.xlu0 %1284
    %1286 = vrot.lane.b32.xlu0 %v830, 32
    %v1287 = vpop.permute.xlu0 %1286
    %1288 = vrot.lane.b32.xlu0 %v831, 32
    %v1289 = vpop.permute.xlu0 %1288
    %1290 = vrot.lane.b32.xlu0 %v832, 32
    %v1291 = vpop.permute.xlu0 %1290
    %1292 = vrot.lane.b32.xlu0 %v833, 32
    %v1293 = vpop.permute.xlu0 %1292
    %1294 = vrot.lane.b32.xlu0 %v834, 32
    %v1295 = vpop.permute.xlu0 %1294
    %1296 = vrot.lane.b32.xlu0 %v835, 32
    %v1297 = vpop.permute.xlu0 %1296
    %1298 = vrot.lane.b32.xlu0 %v836, 32
    %v1299 = vpop.permute.xlu0 %1298
    %1300 = vrot.lane.b32.xlu0 %v837, 32
    %v1301 = vpop.permute.xlu0 %1300
    %1302 = vrot.lane.b32.xlu0 %v838, 32
    %v1303 = vpop.permute.xlu0 %1302
    %1304 = vrot.lane.b32.xlu0 %v839, 32
    %v1305 = vpop.permute.xlu0 %1304
    %1306 = vrot.lane.b32.xlu0 %v840, 32
    %v1307 = vpop.permute.xlu0 %1306
    %1308 = vrot.lane.b32.xlu0 %v841, 32
    %v1309 = vpop.permute.xlu0 %1308
    %1342 = vrot.lane.b32.xlu0 %v842, 48
    %v1343 = vpop.permute.xlu0 %1342
    %1344 = vrot.lane.b32.xlu0 %v843, 48
    %v1345 = vpop.permute.xlu0 %1344
    %1346 = vrot.lane.b32.xlu0 %v844, 48
    %v1347 = vpop.permute.xlu0 %1346
    %1348 = vrot.lane.b32.xlu0 %v845, 48
    %v1349 = vpop.permute.xlu0 %1348
    %1350 = vrot.lane.b32.xlu0 %v846, 48
    %v1351 = vpop.permute.xlu0 %1350
    %1352 = vrot.lane.b32.xlu0 %v847, 48
    %v1353 = vpop.permute.xlu0 %1352
    %1354 = vrot.lane.b32.xlu0 %v848, 48
    %v1355 = vpop.permute.xlu0 %1354
    %1356 = vrot.lane.b32.xlu0 %v849, 48
    %v1357 = vpop.permute.xlu0 %1356
    %1358 = vrot.lane.b32.xlu0 %v850, 48
    %v1359 = vpop.permute.xlu0 %1358
    %1360 = vrot.lane.b32.xlu0 %v851, 48
    %v1361 = vpop.permute.xlu0 %1360
    %1362 = vrot.lane.b32.xlu0 %v852, 48
    %v1363 = vpop.permute.xlu0 %1362
    %1364 = vrot.lane.b32.xlu0 %v853, 48
    %v1365 = vpop.permute.xlu0 %1364
    %1366 = vrot.lane.b32.xlu0 %v854, 48
    %v1367 = vpop.permute.xlu0 %1366
    %1368 = vrot.lane.b32.xlu0 %v855, 48
    %v1369 = vpop.permute.xlu0 %1368
    %1370 = vrot.lane.b32.xlu0 %v856, 48
    %v1371 = vpop.permute.xlu0 %1370
    %1372 = vrot.lane.b32.xlu0 %v857, 48
    %v1373 = vpop.permute.xlu0 %1372
    %1406 = vrot.lane.b32.xlu0 %v858, 64
    %v1407 = vpop.permute.xlu0 %1406
    %1408 = vrot.lane.b32.xlu0 %v859, 64
    %v1409 = vpop.permute.xlu0 %1408
    %1410 = vrot.lane.b32.xlu0 %v860, 64
    %v1411 = vpop.permute.xlu0 %1410
    %1412 = vrot.lane.b32.xlu0 %v861, 64
    %v1413 = vpop.permute.xlu0 %1412
    %1414 = vrot.lane.b32.xlu0 %v862, 64
    %v1415 = vpop.permute.xlu0 %1414
    %1416 = vrot.lane.b32.xlu0 %v863, 64
    %v1417 = vpop.permute.xlu0 %1416
    %1418 = vrot.lane.b32.xlu0 %v864, 64
    %v1419 = vpop.permute.xlu0 %1418
    %1420 = vrot.lane.b32.xlu0 %v865, 64
    %v1421 = vpop.permute.xlu0 %1420
    %1422 = vrot.lane.b32.xlu0 %v866, 64
    %v1423 = vpop.permute.xlu0 %1422
    %1424 = vrot.lane.b32.xlu0 %v867, 64
    %v1425 = vpop.permute.xlu0 %1424
    %1426 = vrot.lane.b32.xlu0 %v868, 64
    %v1427 = vpop.permute.xlu0 %1426
    %1428 = vrot.lane.b32.xlu0 %v869, 64
    %v1429 = vpop.permute.xlu0 %1428
    %1430 = vrot.lane.b32.xlu0 %v870, 64
    %v1431 = vpop.permute.xlu0 %1430
    %1432 = vrot.lane.b32.xlu0 %v871, 64
    %v1433 = vpop.permute.xlu0 %1432
    %1434 = vrot.lane.b32.xlu0 %v872, 64
    %v1435 = vpop.permute.xlu0 %1434
    %1436 = vrot.lane.b32.xlu0 %v873, 64
    %v1437 = vpop.permute.xlu0 %1436
    %1470 = vrot.lane.b32.xlu0 %v875, 80
    %v1471 = vpop.permute.xlu0 %1470
    %1472 = vrot.lane.b32.xlu0 %v876, 80
    %v1473 = vpop.permute.xlu0 %1472
    %1474 = vrot.lane.b32.xlu0 %v877, 80
    %v1475 = vpop.permute.xlu0 %1474
    %1476 = vrot.lane.b32.xlu0 %v878, 80
    %v1477 = vpop.permute.xlu0 %1476
    %1478 = vrot.lane.b32.xlu0 %v879, 80
    %v1479 = vpop.permute.xlu0 %1478
    %1480 = vrot.lane.b32.xlu0 %v880, 80
    %v1481 = vpop.permute.xlu0 %1480
    %1482 = vrot.lane.b32.xlu0 %v881, 80
    %v1483 = vpop.permute.xlu0 %1482
    %1484 = vrot.lane.b32.xlu0 %v882, 80
    %v1485 = vpop.permute.xlu0 %1484
    %1486 = vrot.lane.b32.xlu0 %v883, 80
    %v1487 = vpop.permute.xlu0 %1486
    %1488 = vrot.lane.b32.xlu0 %v884, 80
    %v1489 = vpop.permute.xlu0 %1488
    %1490 = vrot.lane.b32.xlu0 %v885, 80
    %v1491 = vpop.permute.xlu0 %1490
    %1492 = vrot.lane.b32.xlu0 %v886, 80
    %v1493 = vpop.permute.xlu0 %1492
    %1494 = vrot.lane.b32.xlu0 %v887, 80
    %v1495 = vpop.permute.xlu0 %1494
    %1496 = vrot.lane.b32.xlu0 %v888, 80
    %v1497 = vpop.permute.xlu0 %1496
    %1498 = vrot.lane.b32.xlu0 %v889, 80
    %v1499 = vpop.permute.xlu0 %1498
    %1500 = vrot.lane.b32.xlu0 %v890, 80
    %v1501 = vpop.permute.xlu0 %1500
    %1534 = vrot.lane.b32.xlu0 %v891, 96
    %v1535 = vpop.permute.xlu0 %1534
    %1536 = vrot.lane.b32.xlu0 %v892, 96
    %v1537 = vpop.permute.xlu0 %1536
    %1538 = vrot.lane.b32.xlu0 %v893, 96
    %v1539 = vpop.permute.xlu0 %1538
    %1540 = vrot.lane.b32.xlu0 %v894, 96
    %v1541 = vpop.permute.xlu0 %1540
    %1542 = vrot.lane.b32.xlu0 %v895, 96
    %v1543 = vpop.permute.xlu0 %1542
    %1544 = vrot.lane.b32.xlu0 %v896, 96
    %v1545 = vpop.permute.xlu0 %1544
    %1546 = vrot.lane.b32.xlu0 %v897, 96
    %v1547 = vpop.permute.xlu0 %1546
    %1548 = vrot.lane.b32.xlu0 %v898, 96
    %v1549 = vpop.permute.xlu0 %1548
    %1550 = vrot.lane.b32.xlu0 %v899, 96
    %v1551 = vpop.permute.xlu0 %1550
    %1552 = vrot.lane.b32.xlu0 %v900, 96
    %v1553 = vpop.permute.xlu0 %1552
    %1554 = vrot.lane.b32.xlu0 %v901, 96
    %v1555 = vpop.permute.xlu0 %1554
    %1556 = vrot.lane.b32.xlu0 %v902, 96
    %v1557 = vpop.permute.xlu0 %1556
    %1558 = vrot.lane.b32.xlu0 %v903, 96
    %v1559 = vpop.permute.xlu0 %1558
    %1560 = vrot.lane.b32.xlu0 %v904, 96
    %v1561 = vpop.permute.xlu0 %1560
    %1562 = vrot.lane.b32.xlu0 %v905, 96
    %v1563 = vpop.permute.xlu0 %1562
    %1564 = vrot.lane.b32.xlu0 %v906, 96
    %v1565 = vpop.permute.xlu0 %1564
    %1598 = vrot.lane.b32.xlu0 %v907, 112
    %v1599 = vpop.permute.xlu0 %1598
    %1600 = vrot.lane.b32.xlu0 %v908, 112
    %v1601 = vpop.permute.xlu0 %1600
    %1602 = vrot.lane.b32.xlu0 %v909, 112
    %v1603 = vpop.permute.xlu0 %1602
    %1604 = vrot.lane.b32.xlu0 %v910, 112
    %v1605 = vpop.permute.xlu0 %1604
    %1606 = vrot.lane.b32.xlu0 %v911, 112
    %v1607 = vpop.permute.xlu0 %1606
    %1608 = vrot.lane.b32.xlu0 %v912, 112
    %v1609 = vpop.permute.xlu0 %1608
    %1610 = vrot.lane.b32.xlu0 %v913, 112
    %v1611 = vpop.permute.xlu0 %1610
    %1612 = vrot.lane.b32.xlu0 %v914, 112
    %v1613 = vpop.permute.xlu0 %1612
    %1614 = vrot.lane.b32.xlu0 %v915, 112
    %v1615 = vpop.permute.xlu0 %1614
    %1616 = vrot.lane.b32.xlu0 %v916, 112
    %v1617 = vpop.permute.xlu0 %1616
    %1618 = vrot.lane.b32.xlu0 %v917, 112
    %v1619 = vpop.permute.xlu0 %1618
    %1620 = vrot.lane.b32.xlu0 %v918, 112
    %v1621 = vpop.permute.xlu0 %1620
    %1622 = vrot.lane.b32.xlu0 %v919, 112
    %v1623 = vpop.permute.xlu0 %1622
    %1624 = vrot.lane.b32.xlu0 %v920, 112
    %v1625 = vpop.permute.xlu0 %1624
    %1626 = vrot.lane.b32.xlu0 %v921, 112
    %v1627 = vpop.permute.xlu0 %1626
    %1628 = vrot.lane.b32.xlu0 %v922, 112
    %v1629 = vpop.permute.xlu0 %1628
    %1662 = vrot.lane.b32.xlu0 %v939, 16
    %v1663 = vpop.permute.xlu0 %1662
    %1664 = vrot.lane.b32.xlu0 %v940, 16
    %v1665 = vpop.permute.xlu0 %1664
    %1666 = vrot.lane.b32.xlu0 %v941, 16
    %v1667 = vpop.permute.xlu0 %1666
    %1668 = vrot.lane.b32.xlu0 %v942, 16
    %v1669 = vpop.permute.xlu0 %1668
    %1670 = vrot.lane.b32.xlu0 %v943, 16
    %v1671 = vpop.permute.xlu0 %1670
    %1672 = vrot.lane.b32.xlu0 %v944, 16
    %v1673 = vpop.permute.xlu0 %1672
    %1674 = vrot.lane.b32.xlu0 %v945, 16
    %v1675 = vpop.permute.xlu0 %1674
    %1676 = vrot.lane.b32.xlu0 %v946, 16
    %v1677 = vpop.permute.xlu0 %1676
    %1678 = vrot.lane.b32.xlu0 %v947, 16
    %v1679 = vpop.permute.xlu0 %1678
    %1680 = vrot.lane.b32.xlu0 %v948, 16
    %v1681 = vpop.permute.xlu0 %1680
    %1682 = vrot.lane.b32.xlu0 %v949, 16
    %v1683 = vpop.permute.xlu0 %1682
    %1684 = vrot.lane.b32.xlu0 %v950, 16
    %v1685 = vpop.permute.xlu0 %1684
    %1686 = vrot.lane.b32.xlu0 %v951, 16
    %v1687 = vpop.permute.xlu0 %1686
    %1688 = vrot.lane.b32.xlu0 %v952, 16
    %v1689 = vpop.permute.xlu0 %1688
    %1690 = vrot.lane.b32.xlu0 %v953, 16
    %v1691 = vpop.permute.xlu0 %1690
    %1692 = vrot.lane.b32.xlu0 %v954, 16
    %v1693 = vpop.permute.xlu0 %1692
    %1726 = vrot.lane.b32.xlu0 %v956, 32
    %v1727 = vpop.permute.xlu0 %1726
    %1728 = vrot.lane.b32.xlu0 %v957, 32
    %v1729 = vpop.permute.xlu0 %1728
    %1730 = vrot.lane.b32.xlu0 %v958, 32
    %v1731 = vpop.permute.xlu0 %1730
    %1732 = vrot.lane.b32.xlu0 %v959, 32
    %v1733 = vpop.permute.xlu0 %1732
    %1734 = vrot.lane.b32.xlu0 %v960, 32
    %v1735 = vpop.permute.xlu0 %1734
    %1736 = vrot.lane.b32.xlu0 %v961, 32
    %v1737 = vpop.permute.xlu0 %1736
    %1738 = vrot.lane.b32.xlu0 %v962, 32
    %v1739 = vpop.permute.xlu0 %1738
    %1740 = vrot.lane.b32.xlu0 %v963, 32
    %v1741 = vpop.permute.xlu0 %1740
    %1742 = vrot.lane.b32.xlu0 %v964, 32
    %v1743 = vpop.permute.xlu0 %1742
    %1744 = vrot.lane.b32.xlu0 %v965, 32
    %v1745 = vpop.permute.xlu0 %1744
    %1746 = vrot.lane.b32.xlu0 %v966, 32
    %v1747 = vpop.permute.xlu0 %1746
    %1748 = vrot.lane.b32.xlu0 %v967, 32
    %v1749 = vpop.permute.xlu0 %1748
    %1750 = vrot.lane.b32.xlu0 %v968, 32
    %v1751 = vpop.permute.xlu0 %1750
    %1752 = vrot.lane.b32.xlu0 %v969, 32
    %v1753 = vpop.permute.xlu0 %1752
    %1754 = vrot.lane.b32.xlu0 %v970, 32
    %v1755 = vpop.permute.xlu0 %1754
    %1756 = vrot.lane.b32.xlu0 %v971, 32
    %v1757 = vpop.permute.xlu0 %1756
    %1790 = vrot.lane.b32.xlu0 %v972, 48
    %v1791 = vpop.permute.xlu0 %1790
    %1792 = vrot.lane.b32.xlu0 %v973, 48
    %v1793 = vpop.permute.xlu0 %1792
    %1794 = vrot.lane.b32.xlu0 %v974, 48
    %v1795 = vpop.permute.xlu0 %1794
    %1796 = vrot.lane.b32.xlu0 %v975, 48
    %v1797 = vpop.permute.xlu0 %1796
    %1798 = vrot.lane.b32.xlu0 %v976, 48
    %v1799 = vpop.permute.xlu0 %1798
    %1800 = vrot.lane.b32.xlu0 %v977, 48
    %v1801 = vpop.permute.xlu0 %1800
    %1802 = vrot.lane.b32.xlu0 %v978, 48
    %v1803 = vpop.permute.xlu0 %1802
    %1804 = vrot.lane.b32.xlu0 %v979, 48
    %v1805 = vpop.permute.xlu0 %1804
    %1806 = vrot.lane.b32.xlu0 %v980, 48
    %v1807 = vpop.permute.xlu0 %1806
    %1808 = vrot.lane.b32.xlu0 %v981, 48
    %v1809 = vpop.permute.xlu0 %1808
    %1810 = vrot.lane.b32.xlu0 %v982, 48
    %v1811 = vpop.permute.xlu0 %1810
    %1812 = vrot.lane.b32.xlu0 %v983, 48
    %v1813 = vpop.permute.xlu0 %1812
    %1814 = vrot.lane.b32.xlu0 %v984, 48
    %v1815 = vpop.permute.xlu0 %1814
    %1816 = vrot.lane.b32.xlu0 %v985, 48
    %v1817 = vpop.permute.xlu0 %1816
    %1818 = vrot.lane.b32.xlu0 %v986, 48
    %v1819 = vpop.permute.xlu0 %1818
    %1820 = vrot.lane.b32.xlu0 %v987, 48
    %v1821 = vpop.permute.xlu0 %1820
    %1854 = vrot.lane.b32.xlu0 %v988, 64
    %v1855 = vpop.permute.xlu0 %1854
    %1856 = vrot.lane.b32.xlu0 %v989, 64
    %v1857 = vpop.permute.xlu0 %1856
    %1858 = vrot.lane.b32.xlu0 %v990, 64
    %v1859 = vpop.permute.xlu0 %1858
    %1860 = vrot.lane.b32.xlu0 %v991, 64
    %v1861 = vpop.permute.xlu0 %1860
    %1862 = vrot.lane.b32.xlu0 %v992, 64
    %v1863 = vpop.permute.xlu0 %1862
    %1864 = vrot.lane.b32.xlu0 %v993, 64
    %v1865 = vpop.permute.xlu0 %1864
    %1866 = vrot.lane.b32.xlu0 %v994, 64
    %v1867 = vpop.permute.xlu0 %1866
    %1868 = vrot.lane.b32.xlu0 %v995, 64
    %v1869 = vpop.permute.xlu0 %1868
    %1870 = vrot.lane.b32.xlu0 %v996, 64
    %v1871 = vpop.permute.xlu0 %1870
    %1872 = vrot.lane.b32.xlu0 %v997, 64
    %v1873 = vpop.permute.xlu0 %1872
    %1874 = vrot.lane.b32.xlu0 %v998, 64
    %v1875 = vpop.permute.xlu0 %1874
    %1876 = vrot.lane.b32.xlu0 %v999, 64
    %v1877 = vpop.permute.xlu0 %1876
    %1878 = vrot.lane.b32.xlu0 %v1000, 64
    %v1879 = vpop.permute.xlu0 %1878
    %1880 = vrot.lane.b32.xlu0 %v1001, 64
    %v1881 = vpop.permute.xlu0 %1880
    %1882 = vrot.lane.b32.xlu0 %v1002, 64
    %v1883 = vpop.permute.xlu0 %1882
    %1884 = vrot.lane.b32.xlu0 %v1003, 64
    %v1885 = vpop.permute.xlu0 %1884
    %1918 = vrot.lane.b32.xlu0 %v1004, 80
    %v1919 = vpop.permute.xlu0 %1918
    %1920 = vrot.lane.b32.xlu0 %v1005, 80
    %v1921 = vpop.permute.xlu0 %1920
    %1922 = vrot.lane.b32.xlu0 %v1006, 80
    %v1923 = vpop.permute.xlu0 %1922
    %1924 = vrot.lane.b32.xlu0 %v1007, 80
    %v1925 = vpop.permute.xlu0 %1924
    %1926 = vrot.lane.b32.xlu0 %v1008, 80
    %v1927 = vpop.permute.xlu0 %1926
    %1928 = vrot.lane.b32.xlu0 %v1009, 80
    %v1929 = vpop.permute.xlu0 %1928
    %1930 = vrot.lane.b32.xlu0 %v1010, 80
    %v1931 = vpop.permute.xlu0 %1930
    %1932 = vrot.lane.b32.xlu0 %v1011, 80
    %v1933 = vpop.permute.xlu0 %1932
    %1934 = vrot.lane.b32.xlu0 %v1012, 80
    %v1935 = vpop.permute.xlu0 %1934
    %1936 = vrot.lane.b32.xlu0 %v1013, 80
    %v1937 = vpop.permute.xlu0 %1936
    %1938 = vrot.lane.b32.xlu0 %v1014, 80
    %v1939 = vpop.permute.xlu0 %1938
    %1940 = vrot.lane.b32.xlu0 %v1015, 80
    %v1941 = vpop.permute.xlu0 %1940
    %1942 = vrot.lane.b32.xlu0 %v1016, 80
    %v1943 = vpop.permute.xlu0 %1942
    %1944 = vrot.lane.b32.xlu0 %v1017, 80
    %v1945 = vpop.permute.xlu0 %1944
    %1946 = vrot.lane.b32.xlu0 %v1018, 80
    %v1947 = vpop.permute.xlu0 %1946
    %1948 = vrot.lane.b32.xlu0 %v1019, 80
    %v1949 = vpop.permute.xlu0 %1948
    %1982 = vrot.lane.b32.xlu0 %v1020, 96
    %v1983 = vpop.permute.xlu0 %1982
    %1984 = vrot.lane.b32.xlu0 %v1021, 96
    %v1985 = vpop.permute.xlu0 %1984
    %1986 = vrot.lane.b32.xlu0 %v1022, 96
    %v1987 = vpop.permute.xlu0 %1986
    %1988 = vrot.lane.b32.xlu0 %v1023, 96
    %v1989 = vpop.permute.xlu0 %1988
    %1990 = vrot.lane.b32.xlu0 %v1024, 96
    %v1991 = vpop.permute.xlu0 %1990
    %1992 = vrot.lane.b32.xlu0 %v1025, 96
    %v1993 = vpop.permute.xlu0 %1992
    %1994 = vrot.lane.b32.xlu0 %v1026, 96
    %v1995 = vpop.permute.xlu0 %1994
    %1996 = vrot.lane.b32.xlu0 %v1027, 96
    %v1997 = vpop.permute.xlu0 %1996
    %1998 = vrot.lane.b32.xlu0 %v1028, 96
    %v1999 = vpop.permute.xlu0 %1998
    %2000 = vrot.lane.b32.xlu0 %v1029, 96
    %v2001 = vpop.permute.xlu0 %2000
    %2002 = vrot.lane.b32.xlu0 %v1030, 96
    %v2003 = vpop.permute.xlu0 %2002
    %2004 = vrot.lane.b32.xlu0 %v1031, 96
    %v2005 = vpop.permute.xlu0 %2004
    %2006 = vrot.lane.b32.xlu0 %v1032, 96
    %v2007 = vpop.permute.xlu0 %2006
    %2008 = vrot.lane.b32.xlu0 %v1033, 96
    %v2009 = vpop.permute.xlu0 %2008
    %2010 = vrot.lane.b32.xlu0 %v1034, 96
    %v2011 = vpop.permute.xlu0 %2010
    %2012 = vrot.lane.b32.xlu0 %v1035, 96
    %v2013 = vpop.permute.xlu0 %2012
    %2046 = vrot.lane.b32.xlu0 %v1037, 112
    %v2047 = vpop.permute.xlu0 %2046
    %2048 = vrot.lane.b32.xlu0 %v1038, 112
    %v2049 = vpop.permute.xlu0 %2048
    %2050 = vrot.lane.b32.xlu0 %v1039, 112
    %v2051 = vpop.permute.xlu0 %2050
    %2052 = vrot.lane.b32.xlu0 %v1040, 112
    %v2053 = vpop.permute.xlu0 %2052
    %2054 = vrot.lane.b32.xlu0 %v1041, 112
    %v2055 = vpop.permute.xlu0 %2054
    %2056 = vrot.lane.b32.xlu0 %v1042, 112
    %v2057 = vpop.permute.xlu0 %2056
    %2058 = vrot.lane.b32.xlu0 %v1043, 112
    %v2059 = vpop.permute.xlu0 %2058
    %2060 = vrot.lane.b32.xlu0 %v1044, 112
    %v2061 = vpop.permute.xlu0 %2060
    %2062 = vrot.lane.b32.xlu0 %v1045, 112
    %v2063 = vpop.permute.xlu0 %2062
    %2064 = vrot.lane.b32.xlu0 %v1046, 112
    %v2065 = vpop.permute.xlu0 %2064
    %2066 = vrot.lane.b32.xlu0 %v1047, 112
    %v2067 = vpop.permute.xlu0 %2066
    %2068 = vrot.lane.b32.xlu0 %v1048, 112
    %v2069 = vpop.permute.xlu0 %2068
    %2070 = vrot.lane.b32.xlu0 %v1049, 112
    %v2071 = vpop.permute.xlu0 %2070
    %2072 = vrot.lane.b32.xlu0 %v1050, 112
    %v2073 = vpop.permute.xlu0 %2072
    %2074 = vrot.lane.b32.xlu0 %v1051, 112
    %v2075 = vpop.permute.xlu0 %2074
    %2076 = vrot.lane.b32.xlu0 %v1052, 112
    %v2077 = vpop.permute.xlu0 %2076
    %v2094 = vsel %vm744, %v794, %v1215
    %v2095 = vsel %vm744, %v795, %v1217
    %v2096 = vsel %vm744, %v796, %v1219
    %v2097 = vsel %vm744, %v797, %v1221
    %v2098 = vsel %vm744, %v798, %v1223
    %v2099 = vsel %vm744, %v799, %v1225
    %v2100 = vsel %vm744, %v800, %v1227
    %v2101 = vsel %vm744, %v801, %v1229
    %v2102 = vsel %vm744, %v802, %v1231
    %v2103 = vsel %vm744, %v803, %v1233
    %v2104 = vsel %vm744, %v804, %v1235
    %v2105 = vsel %vm744, %v805, %v1237
    %v2106 = vsel %vm744, %v806, %v1239
    %v2107 = vsel %vm744, %v807, %v1241
    %v2108 = vsel %vm744, %v808, %v1243
    %v2109 = vsel %vm744, %v809, %v1245
    %vm2110 = vcmask 261120
    %v2111 = vsel %vm2110, %v2094, %v1279
    %v2112 = vsel %vm2110, %v2095, %v1281
    %v2113 = vsel %vm2110, %v2096, %v1283
    %v2114 = vsel %vm2110, %v2097, %v1285
    %v2115 = vsel %vm2110, %v2098, %v1287
    %v2116 = vsel %vm2110, %v2099, %v1289
    %v2117 = vsel %vm2110, %v2100, %v1291
    %v2118 = vsel %vm2110, %v2101, %v1293
    %v2119 = vsel %vm2110, %v2102, %v1295
    %v2120 = vsel %vm2110, %v2103, %v1297
    %v2121 = vsel %vm2110, %v2104, %v1299
    %v2122 = vsel %vm2110, %v2105, %v1301
    %v2123 = vsel %vm2110, %v2106, %v1303
    %v2124 = vsel %vm2110, %v2107, %v1305
    %v2125 = vsel %vm2110, %v2108, %v1307
    %v2126 = vsel %vm2110, %v2109, %v1309
    %vm2127 = vcmask 392192
    %v2128 = vsel %vm2127, %v2111, %v1343
    %v2129 = vsel %vm2127, %v2112, %v1345
    %v2130 = vsel %vm2127, %v2113, %v1347
    %v2131 = vsel %vm2127, %v2114, %v1349
    %v2132 = vsel %vm2127, %v2115, %v1351
    %v2133 = vsel %vm2127, %v2116, %v1353
    %v2134 = vsel %vm2127, %v2117, %v1355
    %v2135 = vsel %vm2127, %v2118, %v1357
    %v2136 = vsel %vm2127, %v2119, %v1359
    %v2137 = vsel %vm2127, %v2120, %v1361
    %v2138 = vsel %vm2127, %v2121, %v1363
    %v2139 = vsel %vm2127, %v2122, %v1365
    %v2140 = vsel %vm2127, %v2123, %v1367
    %v2141 = vsel %vm2127, %v2124, %v1369
    %v2142 = vsel %vm2127, %v2125, %v1371
    %v2143 = vsel %vm2127, %v2126, %v1373
    %vm2144 = vcmask 523264
    %v2145 = vsel %vm2144, %v2128, %v1407
    %v2146 = vsel %vm2144, %v2129, %v1409
    %v2147 = vsel %vm2144, %v2130, %v1411
    %v2148 = vsel %vm2144, %v2131, %v1413
    %v2149 = vsel %vm2144, %v2132, %v1415
    %v2150 = vsel %vm2144, %v2133, %v1417
    %v2151 = vsel %vm2144, %v2134, %v1419
    %v2152 = vsel %vm2144, %v2135, %v1421
    %v2153 = vsel %vm2144, %v2136, %v1423
    %v2154 = vsel %vm2144, %v2137, %v1425
    %v2155 = vsel %vm2144, %v2138, %v1427
    %v2156 = vsel %vm2144, %v2139, %v1429
    %v2157 = vsel %vm2144, %v2140, %v1431
    %v2158 = vsel %vm2144, %v2141, %v1433
    %v2159 = vsel %vm2144, %v2142, %v1435
    %v2160 = vsel %vm2144, %v2143, %v1437
    %vm2161 = vcmask 654336
    %v2162 = vsel %vm2161, %v2145, %v1471
    %v2163 = vsel %vm2161, %v2146, %v1473
    %v2164 = vsel %vm2161, %v2147, %v1475
    %v2165 = vsel %vm2161, %v2148, %v1477
    %v2166 = vsel %vm2161, %v2149, %v1479
    %v2167 = vsel %vm2161, %v2150, %v1481
    %v2168 = vsel %vm2161, %v2151, %v1483
    %v2169 = vsel %vm2161, %v2152, %v1485
    %v2170 = vsel %vm2161, %v2153, %v1487
    %v2171 = vsel %vm2161, %v2154, %v1489
    %v2172 = vsel %vm2161, %v2155, %v1491
    %v2173 = vsel %vm2161, %v2156, %v1493
    %v2174 = vsel %vm2161, %v2157, %v1495
    %v2175 = vsel %vm2161, %v2158, %v1497
    %v2176 = vsel %vm2161, %v2159, %v1499
    %v2177 = vsel %vm2161, %v2160, %v1501
    %vm2178 = vcmask 785408
    %v2179 = vsel %vm2178, %v2162, %v1535
    %v2180 = vsel %vm2178, %v2163, %v1537
    %v2181 = vsel %vm2178, %v2164, %v1539
    %v2182 = vsel %vm2178, %v2165, %v1541
    %v2183 = vsel %vm2178, %v2166, %v1543
    %v2184 = vsel %vm2178, %v2167, %v1545
    %v2185 = vsel %vm2178, %v2168, %v1547
    %v2186 = vsel %vm2178, %v2169, %v1549
    %v2187 = vsel %vm2178, %v2170, %v1551
    %v2188 = vsel %vm2178, %v2171, %v1553
    %v2189 = vsel %vm2178, %v2172, %v1555
    %v2190 = vsel %vm2178, %v2173, %v1557
    %v2191 = vsel %vm2178, %v2174, %v1559
    %v2192 = vsel %vm2178, %v2175, %v1561
    %v2193 = vsel %vm2178, %v2176, %v1563
    %v2194 = vsel %vm2178, %v2177, %v1565
    %vm2195 = vcmask 916480
    %v2196 = vsel %vm2195, %v2179, %v1599
    %v2197 = vsel %vm2195, %v2180, %v1601
    %v2198 = vsel %vm2195, %v2181, %v1603
    %v2199 = vsel %vm2195, %v2182, %v1605
    %v2200 = vsel %vm2195, %v2183, %v1607
    %v2201 = vsel %vm2195, %v2184, %v1609
    %v2202 = vsel %vm2195, %v2185, %v1611
    %v2203 = vsel %vm2195, %v2186, %v1613
    %v2204 = vsel %vm2195, %v2187, %v1615
    %v2205 = vsel %vm2195, %v2188, %v1617
    %v2206 = vsel %vm2195, %v2189, %v1619
    %v2207 = vsel %vm2195, %v2190, %v1621
    %v2208 = vsel %vm2195, %v2191, %v1623
    %v2209 = vsel %vm2195, %v2192, %v1625
    %v2210 = vsel %vm2195, %v2193, %v1627
    %v2211 = vsel %vm2195, %v2194, %v1629
    %v2212 = vsel %vm744, %v923, %v1663
    %v2213 = vsel %vm744, %v924, %v1665
    %v2214 = vsel %vm744, %v925, %v1667
    %v2215 = vsel %vm744, %v926, %v1669
    %v2216 = vsel %vm744, %v927, %v1671
    %v2217 = vsel %vm744, %v928, %v1673
    %v2218 = vsel %vm744, %v929, %v1675
    %v2219 = vsel %vm744, %v930, %v1677
    %v2220 = vsel %vm744, %v931, %v1679
    %v2221 = vsel %vm744, %v932, %v1681
    %v2222 = vsel %vm744, %v933, %v1683
    %v2223 = vsel %vm744, %v934, %v1685
    %v2224 = vsel %vm744, %v935, %v1687
    %v2225 = vsel %vm744, %v936, %v1689
    %v2226 = vsel %vm744, %v937, %v1691
    %v2227 = vsel %vm744, %v938, %v1693
    %v2228 = vsel %vm2110, %v2212, %v1727
    %v2229 = vsel %vm2110, %v2213, %v1729
    %v2230 = vsel %vm2110, %v2214, %v1731
    %v2231 = vsel %vm2110, %v2215, %v1733
    %v2232 = vsel %vm2110, %v2216, %v1735
    %v2233 = vsel %vm2110, %v2217, %v1737
    %v2234 = vsel %vm2110, %v2218, %v1739
    %v2235 = vsel %vm2110, %v2219, %v1741
    %v2236 = vsel %vm2110, %v2220, %v1743
    %v2237 = vsel %vm2110, %v2221, %v1745
    %v2238 = vsel %vm2110, %v2222, %v1747
    %v2239 = vsel %vm2110, %v2223, %v1749
    %v2240 = vsel %vm2110, %v2224, %v1751
    %v2241 = vsel %vm2110, %v2225, %v1753
    %v2242 = vsel %vm2110, %v2226, %v1755
    %v2243 = vsel %vm2110, %v2227, %v1757
    %v2244 = vsel %vm2127, %v2228, %v1791
    %v2245 = vsel %vm2127, %v2229, %v1793
    %v2246 = vsel %vm2127, %v2230, %v1795
    %v2247 = vsel %vm2127, %v2231, %v1797
    %v2248 = vsel %vm2127, %v2232, %v1799
    %v2249 = vsel %vm2127, %v2233, %v1801
    %v2250 = vsel %vm2127, %v2234, %v1803
    %v2251 = vsel %vm2127, %v2235, %v1805
    %v2252 = vsel %vm2127, %v2236, %v1807
    %v2253 = vsel %vm2127, %v2237, %v1809
    %v2254 = vsel %vm2127, %v2238, %v1811
    %v2255 = vsel %vm2127, %v2239, %v1813
    %v2256 = vsel %vm2127, %v2240, %v1815
    %v2257 = vsel %vm2127, %v2241, %v1817
    %v2258 = vsel %vm2127, %v2242, %v1819
    %v2259 = vsel %vm2127, %v2243, %v1821
    %v2260 = vsel %vm2144, %v2244, %v1855
    %v2261 = vsel %vm2144, %v2245, %v1857
    %v2262 = vsel %vm2144, %v2246, %v1859
    %v2263 = vsel %vm2144, %v2247, %v1861
    %v2264 = vsel %vm2144, %v2248, %v1863
    %v2265 = vsel %vm2144, %v2249, %v1865
    %v2266 = vsel %vm2144, %v2250, %v1867
    %v2267 = vsel %vm2144, %v2251, %v1869
    %v2268 = vsel %vm2144, %v2252, %v1871
    %v2269 = vsel %vm2144, %v2253, %v1873
    %v2270 = vsel %vm2144, %v2254, %v1875
    %v2271 = vsel %vm2144, %v2255, %v1877
    %v2272 = vsel %vm2144, %v2256, %v1879
    %v2273 = vsel %vm2144, %v2257, %v1881
    %v2274 = vsel %vm2144, %v2258, %v1883
    %v2275 = vsel %vm2144, %v2259, %v1885
    %v2276 = vsel %vm2161, %v2260, %v1919
    %v2277 = vsel %vm2161, %v2261, %v1921
    %v2278 = vsel %vm2161, %v2262, %v1923
    %v2279 = vsel %vm2161, %v2263, %v1925
    %v2280 = vsel %vm2161, %v2264, %v1927
    %v2281 = vsel %vm2161, %v2265, %v1929
    %v2282 = vsel %vm2161, %v2266, %v1931
    %v2283 = vsel %vm2161, %v2267, %v1933
    %v2284 = vsel %vm2161, %v2268, %v1935
    %v2285 = vsel %vm2161, %v2269, %v1937
    %v2286 = vsel %vm2161, %v2270, %v1939
    %v2287 = vsel %vm2161, %v2271, %v1941
    %v2288 = vsel %vm2161, %v2272, %v1943
    %v2289 = vsel %vm2161, %v2273, %v1945
    %v2290 = vsel %vm2161, %v2274, %v1947
    %v2291 = vsel %vm2161, %v2275, %v1949
    %v2292 = vsel %vm2178, %v2276, %v1983
    %v2293 = vsel %vm2178, %v2277, %v1985
    %v2294 = vsel %vm2178, %v2278, %v1987
    %v2295 = vsel %vm2178, %v2279, %v1989
    %v2296 = vsel %vm2178, %v2280, %v1991
    %v2297 = vsel %vm2178, %v2281, %v1993
    %v2298 = vsel %vm2178, %v2282, %v1995
    %v2299 = vsel %vm2178, %v2283, %v1997
    %v2300 = vsel %vm2178, %v2284, %v1999
    %v2301 = vsel %vm2178, %v2285, %v2001
    %v2302 = vsel %vm2178, %v2286, %v2003
    %v2303 = vsel %vm2178, %v2287, %v2005
    %v2304 = vsel %vm2178, %v2288, %v2007
    %v2305 = vsel %vm2178, %v2289, %v2009
    %v2306 = vsel %vm2178, %v2290, %v2011
    %v2307 = vsel %vm2178, %v2291, %v2013
    %v2308 = vsel %vm2195, %v2292, %v2047
    %v2309 = vsel %vm2195, %v2293, %v2049
    %v2310 = vsel %vm2195, %v2294, %v2051
    %v2311 = vsel %vm2195, %v2295, %v2053
    %v2312 = vsel %vm2195, %v2296, %v2055
    %v2313 = vsel %vm2195, %v2297, %v2057
    %v2314 = vsel %vm2195, %v2298, %v2059
    %v2315 = vsel %vm2195, %v2299, %v2061
    %v2316 = vsel %vm2195, %v2300, %v2063
    %v2317 = vsel %vm2195, %v2301, %v2065
    %v2318 = vsel %vm2195, %v2302, %v2067
    %v2319 = vsel %vm2195, %v2303, %v2069
    %v2320 = vsel %vm2195, %v2304, %v2071
    %v2321 = vsel %vm2195, %v2305, %v2073
    %v2322 = vsel %vm2195, %v2306, %v2075
    %v2323 = vsel %vm2195, %v2307, %v2077
    %2340 = vrot.lane.b32.xlu0 %v1069, 16
    %v2341 = vpop.permute.xlu0 %2340
    %2342 = vrot.lane.b32.xlu0 %v1070, 16
    %v2343 = vpop.permute.xlu0 %2342
    %2344 = vrot.lane.b32.xlu0 %v1071, 16
    %v2345 = vpop.permute.xlu0 %2344
    %2346 = vrot.lane.b32.xlu0 %v1072, 16
    %v2347 = vpop.permute.xlu0 %2346
    %2348 = vrot.lane.b32.xlu0 %v1073, 16
    %v2349 = vpop.permute.xlu0 %2348
    %2350 = vrot.lane.b32.xlu0 %v1074, 16
    %v2351 = vpop.permute.xlu0 %2350
    %2352 = vrot.lane.b32.xlu0 %v1075, 16
    %v2353 = vpop.permute.xlu0 %2352
    %2354 = vrot.lane.b32.xlu0 %v1076, 16
    %v2355 = vpop.permute.xlu0 %2354
    %2356 = vrot.lane.b32.xlu0 %v1077, 16
    %v2357 = vpop.permute.xlu0 %2356
    %2358 = vrot.lane.b32.xlu0 %v1078, 16
    %v2359 = vpop.permute.xlu0 %2358
    %2360 = vrot.lane.b32.xlu0 %v1079, 16
    %v2361 = vpop.permute.xlu0 %2360
    %2362 = vrot.lane.b32.xlu0 %v1080, 16
    %v2363 = vpop.permute.xlu0 %2362
    %2364 = vrot.lane.b32.xlu0 %v1081, 16
    %v2365 = vpop.permute.xlu0 %2364
    %2366 = vrot.lane.b32.xlu0 %v1082, 16
    %v2367 = vpop.permute.xlu0 %2366
    %2368 = vrot.lane.b32.xlu0 %v1083, 16
    %v2369 = vpop.permute.xlu0 %2368
    %2370 = vrot.lane.b32.xlu0 %v1084, 16
    %v2371 = vpop.permute.xlu0 %2370
    %2404 = vrot.lane.b32.xlu0 %v1085, 32
    %v2405 = vpop.permute.xlu0 %2404
    %2406 = vrot.lane.b32.xlu0 %v1086, 32
    %v2407 = vpop.permute.xlu0 %2406
    %2408 = vrot.lane.b32.xlu0 %v1087, 32
    %v2409 = vpop.permute.xlu0 %2408
    %2410 = vrot.lane.b32.xlu0 %v1088, 32
    %v2411 = vpop.permute.xlu0 %2410
    %2412 = vrot.lane.b32.xlu0 %v1089, 32
    %v2413 = vpop.permute.xlu0 %2412
    %2414 = vrot.lane.b32.xlu0 %v1090, 32
    %v2415 = vpop.permute.xlu0 %2414
    %2416 = vrot.lane.b32.xlu0 %v1091, 32
    %v2417 = vpop.permute.xlu0 %2416
    %2418 = vrot.lane.b32.xlu0 %v1092, 32
    %v2419 = vpop.permute.xlu0 %2418
    %2420 = vrot.lane.b32.xlu0 %v1093, 32
    %v2421 = vpop.permute.xlu0 %2420
    %2422 = vrot.lane.b32.xlu0 %v1094, 32
    %v2423 = vpop.permute.xlu0 %2422
    %2424 = vrot.lane.b32.xlu0 %v1095, 32
    %v2425 = vpop.permute.xlu0 %2424
    %2426 = vrot.lane.b32.xlu0 %v1096, 32
    %v2427 = vpop.permute.xlu0 %2426
    %2428 = vrot.lane.b32.xlu0 %v1097, 32
    %v2429 = vpop.permute.xlu0 %2428
    %2430 = vrot.lane.b32.xlu0 %v1098, 32
    %v2431 = vpop.permute.xlu0 %2430
    %2432 = vrot.lane.b32.xlu0 %v1099, 32
    %v2433 = vpop.permute.xlu0 %2432
    %2434 = vrot.lane.b32.xlu0 %v1100, 32
    %v2435 = vpop.permute.xlu0 %2434
    %2468 = vrot.lane.b32.xlu0 %v1101, 48
    %v2469 = vpop.permute.xlu0 %2468
    %2470 = vrot.lane.b32.xlu0 %v1102, 48
    %v2471 = vpop.permute.xlu0 %2470
    %2472 = vrot.lane.b32.xlu0 %v1103, 48
    %v2473 = vpop.permute.xlu0 %2472
    %2474 = vrot.lane.b32.xlu0 %v1104, 48
    %v2475 = vpop.permute.xlu0 %2474
    %2476 = vrot.lane.b32.xlu0 %v1105, 48
    %v2477 = vpop.permute.xlu0 %2476
    %2478 = vrot.lane.b32.xlu0 %v1106, 48
    %v2479 = vpop.permute.xlu0 %2478
    %2480 = vrot.lane.b32.xlu0 %v1107, 48
    %v2481 = vpop.permute.xlu0 %2480
    %2482 = vrot.lane.b32.xlu0 %v1108, 48
    %v2483 = vpop.permute.xlu0 %2482
    %2484 = vrot.lane.b32.xlu0 %v1109, 48
    %v2485 = vpop.permute.xlu0 %2484
    %2486 = vrot.lane.b32.xlu0 %v1110, 48
    %v2487 = vpop.permute.xlu0 %2486
    %2488 = vrot.lane.b32.xlu0 %v1111, 48
    %v2489 = vpop.permute.xlu0 %2488
    %2490 = vrot.lane.b32.xlu0 %v1112, 48
    %v2491 = vpop.permute.xlu0 %2490
    %2492 = vrot.lane.b32.xlu0 %v1113, 48
    %v2493 = vpop.permute.xlu0 %2492
    %2494 = vrot.lane.b32.xlu0 %v1114, 48
    %v2495 = vpop.permute.xlu0 %2494
    %2496 = vrot.lane.b32.xlu0 %v1115, 48
    %v2497 = vpop.permute.xlu0 %2496
    %2498 = vrot.lane.b32.xlu0 %v1116, 48
    %v2499 = vpop.permute.xlu0 %2498
    %2532 = vrot.lane.b32.xlu0 %v1118, 64
    %v2533 = vpop.permute.xlu0 %2532
    %2534 = vrot.lane.b32.xlu0 %v1119, 64
    %v2535 = vpop.permute.xlu0 %2534
    %2536 = vrot.lane.b32.xlu0 %v1120, 64
    %v2537 = vpop.permute.xlu0 %2536
    %2538 = vrot.lane.b32.xlu0 %v1121, 64
    %v2539 = vpop.permute.xlu0 %2538
    %2540 = vrot.lane.b32.xlu0 %v1122, 64
    %v2541 = vpop.permute.xlu0 %2540
    %2542 = vrot.lane.b32.xlu0 %v1123, 64
    %v2543 = vpop.permute.xlu0 %2542
    %2544 = vrot.lane.b32.xlu0 %v1124, 64
    %v2545 = vpop.permute.xlu0 %2544
    %2546 = vrot.lane.b32.xlu0 %v1125, 64
    %v2547 = vpop.permute.xlu0 %2546
    %2548 = vrot.lane.b32.xlu0 %v1126, 64
    %v2549 = vpop.permute.xlu0 %2548
    %2550 = vrot.lane.b32.xlu0 %v1127, 64
    %v2551 = vpop.permute.xlu0 %2550
    %2552 = vrot.lane.b32.xlu0 %v1128, 64
    %v2553 = vpop.permute.xlu0 %2552
    %2554 = vrot.lane.b32.xlu0 %v1129, 64
    %v2555 = vpop.permute.xlu0 %2554
    %2556 = vrot.lane.b32.xlu0 %v1130, 64
    %v2557 = vpop.permute.xlu0 %2556
    %2558 = vrot.lane.b32.xlu0 %v1131, 64
    %v2559 = vpop.permute.xlu0 %2558
    %2560 = vrot.lane.b32.xlu0 %v1132, 64
    %v2561 = vpop.permute.xlu0 %2560
    %2562 = vrot.lane.b32.xlu0 %v1133, 64
    %v2563 = vpop.permute.xlu0 %2562
    %2596 = vrot.lane.b32.xlu0 %v1134, 80
    %v2597 = vpop.permute.xlu0 %2596
    %2598 = vrot.lane.b32.xlu0 %v1135, 80
    %v2599 = vpop.permute.xlu0 %2598
    %2600 = vrot.lane.b32.xlu0 %v1136, 80
    %v2601 = vpop.permute.xlu0 %2600
    %2602 = vrot.lane.b32.xlu0 %v1137, 80
    %v2603 = vpop.permute.xlu0 %2602
    %2604 = vrot.lane.b32.xlu0 %v1138, 80
    %v2605 = vpop.permute.xlu0 %2604
    %2606 = vrot.lane.b32.xlu0 %v1139, 80
    %v2607 = vpop.permute.xlu0 %2606
    %2608 = vrot.lane.b32.xlu0 %v1140, 80
    %v2609 = vpop.permute.xlu0 %2608
    %2610 = vrot.lane.b32.xlu0 %v1141, 80
    %v2611 = vpop.permute.xlu0 %2610
    %2612 = vrot.lane.b32.xlu0 %v1142, 80
    %v2613 = vpop.permute.xlu0 %2612
    %2614 = vrot.lane.b32.xlu0 %v1143, 80
    %v2615 = vpop.permute.xlu0 %2614
    %2616 = vrot.lane.b32.xlu0 %v1144, 80
    %v2617 = vpop.permute.xlu0 %2616
    %2618 = vrot.lane.b32.xlu0 %v1145, 80
    %v2619 = vpop.permute.xlu0 %2618
    %2620 = vrot.lane.b32.xlu0 %v1146, 80
    %v2621 = vpop.permute.xlu0 %2620
    %2622 = vrot.lane.b32.xlu0 %v1147, 80
    %v2623 = vpop.permute.xlu0 %2622
    %2624 = vrot.lane.b32.xlu0 %v1148, 80
    %v2625 = vpop.permute.xlu0 %2624
    %2626 = vrot.lane.b32.xlu0 %v1149, 80
    %v2627 = vpop.permute.xlu0 %2626
    %2660 = vrot.lane.b32.xlu0 %v1150, 96
    %v2661 = vpop.permute.xlu0 %2660
    %2662 = vrot.lane.b32.xlu0 %v1151, 96
    %v2663 = vpop.permute.xlu0 %2662
    %2664 = vrot.lane.b32.xlu0 %v1152, 96
    %v2665 = vpop.permute.xlu0 %2664
    %2666 = vrot.lane.b32.xlu0 %v1153, 96
    %v2667 = vpop.permute.xlu0 %2666
    %2668 = vrot.lane.b32.xlu0 %v1154, 96
    %v2669 = vpop.permute.xlu0 %2668
    %2670 = vrot.lane.b32.xlu0 %v1155, 96
    %v2671 = vpop.permute.xlu0 %2670
    %2672 = vrot.lane.b32.xlu0 %v1156, 96
    %v2673 = vpop.permute.xlu0 %2672
    %2674 = vrot.lane.b32.xlu0 %v1157, 96
    %v2675 = vpop.permute.xlu0 %2674
    %2676 = vrot.lane.b32.xlu0 %v1158, 96
    %v2677 = vpop.permute.xlu0 %2676
    %2678 = vrot.lane.b32.xlu0 %v1159, 96
    %v2679 = vpop.permute.xlu0 %2678
    %2680 = vrot.lane.b32.xlu0 %v1160, 96
    %v2681 = vpop.permute.xlu0 %2680
    %2682 = vrot.lane.b32.xlu0 %v1161, 96
    %v2683 = vpop.permute.xlu0 %2682
    %2684 = vrot.lane.b32.xlu0 %v1162, 96
    %v2685 = vpop.permute.xlu0 %2684
    %2686 = vrot.lane.b32.xlu0 %v1163, 96
    %v2687 = vpop.permute.xlu0 %2686
    %2688 = vrot.lane.b32.xlu0 %v1164, 96
    %v2689 = vpop.permute.xlu0 %2688
    %2690 = vrot.lane.b32.xlu0 %v1165, 96
    %v2691 = vpop.permute.xlu0 %2690
    %2724 = vrot.lane.b32.xlu0 %v1166, 112
    %v2725 = vpop.permute.xlu0 %2724
    %2726 = vrot.lane.b32.xlu0 %v1167, 112
    %v2727 = vpop.permute.xlu0 %2726
    %2728 = vrot.lane.b32.xlu0 %v1168, 112
    %v2729 = vpop.permute.xlu0 %2728
    %2730 = vrot.lane.b32.xlu0 %v1169, 112
    %v2731 = vpop.permute.xlu0 %2730
    %2732 = vrot.lane.b32.xlu0 %v1170, 112
    %v2733 = vpop.permute.xlu0 %2732
    %2734 = vrot.lane.b32.xlu0 %v1171, 112
    %v2735 = vpop.permute.xlu0 %2734
    %2736 = vrot.lane.b32.xlu0 %v1172, 112
    %v2737 = vpop.permute.xlu0 %2736
    %2738 = vrot.lane.b32.xlu0 %v1173, 112
    %v2739 = vpop.permute.xlu0 %2738
    %2740 = vrot.lane.b32.xlu0 %v1174, 112
    %v2741 = vpop.permute.xlu0 %2740
    %2742 = vrot.lane.b32.xlu0 %v1175, 112
    %v2743 = vpop.permute.xlu0 %2742
    %2744 = vrot.lane.b32.xlu0 %v1176, 112
    %v2745 = vpop.permute.xlu0 %2744
    %2746 = vrot.lane.b32.xlu0 %v1177, 112
    %v2747 = vpop.permute.xlu0 %2746
    %2748 = vrot.lane.b32.xlu0 %v1178, 112
    %v2749 = vpop.permute.xlu0 %2748
    %2750 = vrot.lane.b32.xlu0 %v1179, 112
    %v2751 = vpop.permute.xlu0 %2750
    %2752 = vrot.lane.b32.xlu0 %v1180, 112
    %v2753 = vpop.permute.xlu0 %2752
    %2754 = vrot.lane.b32.xlu0 %v1181, 112
    %v2755 = vpop.permute.xlu0 %2754
    %v2772 = vsel %vm744, %v1053, %v2341
    %v2773 = vsel %vm744, %v1054, %v2343
    %v2774 = vsel %vm744, %v1055, %v2345
    %v2775 = vsel %vm744, %v1056, %v2347
    %v2776 = vsel %vm744, %v1057, %v2349
    %v2777 = vsel %vm744, %v1058, %v2351
    %v2778 = vsel %vm744, %v1059, %v2353
    %v2779 = vsel %vm744, %v1060, %v2355
    %v2780 = vsel %vm744, %v1061, %v2357
    %v2781 = vsel %vm744, %v1062, %v2359
    %v2782 = vsel %vm744, %v1063, %v2361
    %v2783 = vsel %vm744, %v1064, %v2363
    %v2784 = vsel %vm744, %v1065, %v2365
    %v2785 = vsel %vm744, %v1066, %v2367
    %v2786 = vsel %vm744, %v1067, %v2369
    %v2787 = vsel %vm744, %v1068, %v2371
    %v2788 = vsel %vm2110, %v2772, %v2405
    %v2789 = vsel %vm2110, %v2773, %v2407
    %v2790 = vsel %vm2110, %v2774, %v2409
    %v2791 = vsel %vm2110, %v2775, %v2411
    %v2792 = vsel %vm2110, %v2776, %v2413
    %v2793 = vsel %vm2110, %v2777, %v2415
    %v2794 = vsel %vm2110, %v2778, %v2417
    %v2795 = vsel %vm2110, %v2779, %v2419
    %v2796 = vsel %vm2110, %v2780, %v2421
    %v2797 = vsel %vm2110, %v2781, %v2423
    %v2798 = vsel %vm2110, %v2782, %v2425
    %v2799 = vsel %vm2110, %v2783, %v2427
    %v2800 = vsel %vm2110, %v2784, %v2429
    %v2801 = vsel %vm2110, %v2785, %v2431
    %v2802 = vsel %vm2110, %v2786, %v2433
    %v2803 = vsel %vm2110, %v2787, %v2435
    %v2804 = vsel %vm2127, %v2788, %v2469
    %v2805 = vsel %vm2127, %v2789, %v2471
    %v2806 = vsel %vm2127, %v2790, %v2473
    %v2807 = vsel %vm2127, %v2791, %v2475
    %v2808 = vsel %vm2127, %v2792, %v2477
    %v2809 = vsel %vm2127, %v2793, %v2479
    %v2810 = vsel %vm2127, %v2794, %v2481
    %v2811 = vsel %vm2127, %v2795, %v2483
    %v2812 = vsel %vm2127, %v2796, %v2485
    %v2813 = vsel %vm2127, %v2797, %v2487
    %v2814 = vsel %vm2127, %v2798, %v2489
    %v2815 = vsel %vm2127, %v2799, %v2491
    %v2816 = vsel %vm2127, %v2800, %v2493
    %v2817 = vsel %vm2127, %v2801, %v2495
    %v2818 = vsel %vm2127, %v2802, %v2497
    %v2819 = vsel %vm2127, %v2803, %v2499
    %v2820 = vsel %vm2144, %v2804, %v2533
    %v2821 = vsel %vm2144, %v2805, %v2535
    %v2822 = vsel %vm2144, %v2806, %v2537
    %v2823 = vsel %vm2144, %v2807, %v2539
    %v2824 = vsel %vm2144, %v2808, %v2541
    %v2825 = vsel %vm2144, %v2809, %v2543
    %v2826 = vsel %vm2144, %v2810, %v2545
    %v2827 = vsel %vm2144, %v2811, %v2547
    %v2828 = vsel %vm2144, %v2812, %v2549
    %v2829 = vsel %vm2144, %v2813, %v2551
    %v2830 = vsel %vm2144, %v2814, %v2553
    %v2831 = vsel %vm2144, %v2815, %v2555
    %v2832 = vsel %vm2144, %v2816, %v2557
    %v2833 = vsel %vm2144, %v2817, %v2559
    %v2834 = vsel %vm2144, %v2818, %v2561
    %v2835 = vsel %vm2144, %v2819, %v2563
    %v2836 = vsel %vm2161, %v2820, %v2597
    %v2837 = vsel %vm2161, %v2821, %v2599
    %v2838 = vsel %vm2161, %v2822, %v2601
    %v2839 = vsel %vm2161, %v2823, %v2603
    %v2840 = vsel %vm2161, %v2824, %v2605
    %v2841 = vsel %vm2161, %v2825, %v2607
    %v2842 = vsel %vm2161, %v2826, %v2609
    %v2843 = vsel %vm2161, %v2827, %v2611
    %v2844 = vsel %vm2161, %v2828, %v2613
    %v2845 = vsel %vm2161, %v2829, %v2615
    %v2846 = vsel %vm2161, %v2830, %v2617
    %v2847 = vsel %vm2161, %v2831, %v2619
    %v2848 = vsel %vm2161, %v2832, %v2621
    %v2849 = vsel %vm2161, %v2833, %v2623
    %v2850 = vsel %vm2161, %v2834, %v2625
    %v2851 = vsel %vm2161, %v2835, %v2627
    %v2852 = vsel %vm2178, %v2836, %v2661
    %v2853 = vsel %vm2178, %v2837, %v2663
    %v2854 = vsel %vm2178, %v2838, %v2665
    %v2855 = vsel %vm2178, %v2839, %v2667
    %v2856 = vsel %vm2178, %v2840, %v2669
    %v2857 = vsel %vm2178, %v2841, %v2671
    %v2858 = vsel %vm2178, %v2842, %v2673
    %v2859 = vsel %vm2178, %v2843, %v2675
    %v2860 = vsel %vm2178, %v2844, %v2677
    %v2861 = vsel %vm2178, %v2845, %v2679
    %v2862 = vsel %vm2178, %v2846, %v2681
    %v2863 = vsel %vm2178, %v2847, %v2683
    %v2864 = vsel %vm2178, %v2848, %v2685
    %v2865 = vsel %vm2178, %v2849, %v2687
    %v2866 = vsel %vm2178, %v2850, %v2689
    %v2867 = vsel %vm2178, %v2851, %v2691
    %v2868 = vsel %vm2195, %v2852, %v2725
    %v2869 = vsel %vm2195, %v2853, %v2727
    %v2870 = vsel %vm2195, %v2854, %v2729
    %v2871 = vsel %vm2195, %v2855, %v2731
    %v2872 = vsel %vm2195, %v2856, %v2733
    %v2873 = vsel %vm2195, %v2857, %v2735
    %v2874 = vsel %vm2195, %v2858, %v2737
    %v2875 = vsel %vm2195, %v2859, %v2739
    %v2876 = vsel %vm2195, %v2860, %v2741
    %v2877 = vsel %vm2195, %v2861, %v2743
    %v2878 = vsel %vm2195, %v2862, %v2745
    %v2879 = vsel %vm2195, %v2863, %v2747
    %v2880 = vsel %vm2195, %v2864, %v2749
    %v2881 = vsel %vm2195, %v2865, %v2751
    %v2882 = vsel %vm2195, %v2866, %v2753
    %v2883 = vsel %vm2195, %v2867, %v2755
    %v2884 = vpack.c.bf16 %v2197, %v2196
    %v2885 = vpack.c.bf16 %v2309, %v2308
    %v2886 = vpack.c.bf16 %v2869, %v2868
    %v2887 = vpack.c.bf16 %v1183, %v1182
    %v2888 = vpack.c.bf16 %v2199, %v2198
    %v2889 = vpack.c.bf16 %v2311, %v2310
    %v2890 = vpack.c.bf16 %v2871, %v2870
    %v2891 = vpack.c.bf16 %v1185, %v1184
    %v2892 = vpack.c.bf16 %v2201, %v2200
    %v2893 = vpack.c.bf16 %v2313, %v2312
    %v2894 = vpack.c.bf16 %v2873, %v2872
    %v2895 = vpack.c.bf16 %v1187, %v1186
    %v2896 = vpack.c.bf16 %v2203, %v2202
    %v2897 = vpack.c.bf16 %v2315, %v2314
    %v2898 = vpack.c.bf16 %v2875, %v2874
    %v2899 = vpack.c.bf16 %v1189, %v1188
    %v2900 = vpack.c.bf16 %v2205, %v2204
    %v2901 = vpack.c.bf16 %v2317, %v2316
    %v2902 = vpack.c.bf16 %v2877, %v2876
    %v2903 = vpack.c.bf16 %v1191, %v1190
    %v2904 = vpack.c.bf16 %v2207, %v2206
    %v2905 = vpack.c.bf16 %v2319, %v2318
    %v2906 = vpack.c.bf16 %v2879, %v2878
    %v2907 = vpack.c.bf16 %v1193, %v1192
    %v2908 = vpack.c.bf16 %v2209, %v2208
    %v2909 = vpack.c.bf16 %v2321, %v2320
    %v2910 = vpack.c.bf16 %v2881, %v2880
    %v2911 = vpack.c.bf16 %v1195, %v1194
    %v2912 = vpack.c.bf16 %v2211, %v2210
    %v2913 = vpack.c.bf16 %v2323, %v2322
    %v2914 = vpack.c.bf16 %v2883, %v2882
    %v2915 = vpack.c.bf16 %v1197, %v1196
    %v2916 = vld [vmem:[%s3] sm:$0xf]
    %v2917 = vld [vmem:[%s3 + $0x4] sm:$0xf]
    %v2918 = vld [vmem:[%s3 + $0x8] sm:$0xf]
    %v2919 = vld [vmem:[%s3 + $0xc] sm:$0xf]
    %v2920 = vld [vmem:[%s3 + $0x10] sm:$0xf]
    %v2921 = vld [vmem:[%s3 + $0x14] sm:$0xf]
    %v2922 = vld [vmem:[%s3 + $0x18] sm:$0xf]
    %v2923 = vld [vmem:[%s3 + $0x1c] sm:$0xf]
    %v2924 = vld [vmem:[%s3 + $0x20] sm:$0xf]
    %v2925 = vld [vmem:[%s3 + $0x24] sm:$0xf]
    %v2926 = vld [vmem:[%s3 + $0x28] sm:$0xf]
    %v2927 = vld [vmem:[%s3 + $0x2c] sm:$0xf]
    %v2928 = vld [vmem:[%s3 + $0x30] sm:$0xf]
    %v2929 = vld [vmem:[%s3 + $0x34] sm:$0xf]
    %v2930 = vld [vmem:[%s3 + $0x38] sm:$0xf]
    %v2931 = vld [vmem:[%s3 + $0x3c] sm:$0xf]
    %v2932 = vld [vmem:[%s3 + $0x40] sm:$0xf]
    %v2933 = vld [vmem:[%s3 + $0x44] sm:$0xf]
    %v2934 = vld [vmem:[%s3 + $0x48] sm:$0xf]
    %v2935 = vld [vmem:[%s3 + $0x4c] sm:$0xf]
    %v2936 = vld [vmem:[%s3 + $0x50] sm:$0xf]
    %v2937 = vld [vmem:[%s3 + $0x54] sm:$0xf]
    %v2938 = vld [vmem:[%s3 + $0x58] sm:$0xf]
    %v2939 = vld [vmem:[%s3 + $0x5c] sm:$0xf]
    %v2940 = vld [vmem:[%s3 + $0x60] sm:$0xf]
    %v2941 = vld [vmem:[%s3 + $0x64] sm:$0xf]
    %v2942 = vld [vmem:[%s3 + $0x68] sm:$0xf]
    %v2943 = vld [vmem:[%s3 + $0x6c] sm:$0xf]
    %v2944 = vld [vmem:[%s3 + $0x70] sm:$0xf]
    %v2945 = vld [vmem:[%s3 + $0x74] sm:$0xf]
    %v2946 = vld [vmem:[%s3 + $0x78] sm:$0xf]
    %v2947 = vld [vmem:[%s3 + $0x7c] sm:$0xf]
    %v2948 = vld [vmem:[%s3 + $0x80] sm:$0xf]
    %v2949 = vld [vmem:[%s3 + $0x84] sm:$0xf]
    %v2950 = vld [vmem:[%s3 + $0x88] sm:$0xf]
    %v2951 = vld [vmem:[%s3 + $0x8c] sm:$0xf]
    %v2952 = vld [vmem:[%s3 + $0x90] sm:$0xf]
    %v2953 = vld [vmem:[%s3 + $0x94] sm:$0xf]
    %v2954 = vld [vmem:[%s3 + $0x98] sm:$0xf]
    %v2955 = vld [vmem:[%s3 + $0x9c] sm:$0xf]
    %v2956 = vld [vmem:[%s3 + $0xa0] sm:$0xf]
    %v2957 = vld [vmem:[%s3 + $0xa4] sm:$0xf]
    %v2958 = vld [vmem:[%s3 + $0xa8] sm:$0xf]
    %v2959 = vld [vmem:[%s3 + $0xac] sm:$0xf]
    %v2960 = vld [vmem:[%s3 + $0xb0] sm:$0xf]
    %v2961 = vld [vmem:[%s3 + $0xb4] sm:$0xf]
    %v2962 = vld [vmem:[%s3 + $0xb8] sm:$0xf]
    %v2963 = vld [vmem:[%s3 + $0xbc] sm:$0xf]
    %v2964 = vld [vmem:[%s3 + $0xc0] sm:$0xf]
    %v2965 = vld [vmem:[%s3 + $0xc4] sm:$0xf]
    %v2966 = vld [vmem:[%s4] sm:$0x1]
    %v2968 = vperm.slane %v2966, 0
    %v3020 = vunpack.c.l.b16 %v2916
    %v3021 = vunpack.c.l.b16 %v2917
    %v3022 = vunpack.c.l.b16 %v2918
    %v3023 = vunpack.c.l.b16 %v2919
    %v3024 = vunpack.c.l.b16 %v2920
    %v3025 = vunpack.c.l.b16 %v2921
    %v3026 = vunpack.c.l.b16 %v2922
    %v3027 = vunpack.c.l.b16 %v2923
    %v3028 = vunpack.c.l.b16 %v2924
    %v3029 = vunpack.c.l.b16 %v2925
    %v3030 = vunpack.c.l.b16 %v2926
    %v3031 = vunpack.c.l.b16 %v2927
    %v3032 = vunpack.c.l.b16 %v2928
    %v3033 = vunpack.c.l.b16 %v2929
    %v3034 = vunpack.c.l.b16 %v2930
    %v3035 = vunpack.c.l.b16 %v2931
    %v3036 = vunpack.c.l.b16 %v2932
    %v3037 = vunpack.c.l.b16 %v2933
    %v3038 = vunpack.c.l.b16 %v2934
    %v3039 = vunpack.c.l.b16 %v2935
    %v3040 = vunpack.c.l.b16 %v2936
    %v3041 = vunpack.c.l.b16 %v2937
    %v3042 = vunpack.c.l.b16 %v2938
    %v3043 = vunpack.c.l.b16 %v2939
    %v3044 = vunpack.c.l.b16 %v2940
    %v3045 = vunpack.c.l.b16 %v2941
    %v3046 = vunpack.c.l.b16 %v2942
    %v3047 = vunpack.c.l.b16 %v2943
    %v3048 = vunpack.c.l.b16 %v2944
    %v3049 = vunpack.c.l.b16 %v2945
    %v3050 = vunpack.c.l.b16 %v2946
    %v3051 = vunpack.c.l.b16 %v2947
    %v3052 = vunpack.c.l.b16 %v2948
    %v3053 = vunpack.c.l.b16 %v2949
    %v3054 = vunpack.c.l.b16 %v2950
    %v3055 = vunpack.c.l.b16 %v2951
    %v3056 = vunpack.c.l.b16 %v2952
    %v3057 = vunpack.c.l.b16 %v2953
    %v3058 = vunpack.c.l.b16 %v2954
    %v3059 = vunpack.c.l.b16 %v2955
    %v3060 = vunpack.c.l.b16 %v2956
    %v3061 = vunpack.c.l.b16 %v2957
    %v3062 = vunpack.c.l.b16 %v2958
    %v3063 = vunpack.c.l.b16 %v2959
    %v3064 = vunpack.c.l.b16 %v2960
    %v3065 = vunpack.c.l.b16 %v2961
    %v3066 = vunpack.c.l.b16 %v2962
    %v3067 = vunpack.c.l.b16 %v2963
    %v3068 = vunpack.c.l.b16 %v2964
    %v3069 = vunpack.c.l.b16 %v2965
    %v3070 = vpack.c.b16 %v3021, %v3020
    %v3071 = vpack.c.b16 %v3023, %v3022
    %v3072 = vpack.c.b16 %v3025, %v3024
    %v3073 = vpack.c.b16 %v3027, %v3026
    %v3074 = vpack.c.b16 %v3029, %v3028
    %v3075 = vpack.c.b16 %v3031, %v3030
    %v3076 = vpack.c.b16 %v3033, %v3032
    %v3077 = vpack.c.b16 %v3035, %v3034
    %v3078 = vpack.c.b16 %v3037, %v3036
    %v3079 = vpack.c.b16 %v3039, %v3038
    %v3080 = vpack.c.b16 %v3041, %v3040
    %v3081 = vpack.c.b16 %v3043, %v3042
    %v3082 = vpack.c.b16 %v3045, %v3044
    %v3083 = vpack.c.b16 %v3047, %v3046
    %v3084 = vpack.c.b16 %v3049, %v3048
    %v3085 = vpack.c.b16 %v3051, %v3050
    %v3086 = vpack.c.b16 %v3053, %v3052
    %v3087 = vpack.c.b16 %v3055, %v3054
    %v3088 = vpack.c.b16 %v3057, %v3056
    %v3089 = vpack.c.b16 %v3059, %v3058
    %v3090 = vpack.c.b16 %v3061, %v3060
    %v3091 = vpack.c.b16 %v3063, %v3062
    %v3092 = vpack.c.b16 %v3065, %v3064
    %v3093 = vpack.c.b16 %v3067, %v3066
    %v3094 = vpack.c.b16 %v3069, %v3068
    %v3121 = vsel %vm744, %v2887, 0
    %v3124 = vsel %vm744, %v2891, 0
    %v3127 = vsel %vm744, %v2895, 0
    %v3130 = vsel %vm744, %v2899, 0
    %v3133 = vsel %vm744, %v2903, 0
    %v3136 = vsel %vm744, %v2907, 0
    %v3139 = vsel %vm744, %v2911, 0
    %v3142 = vsel %vm744, %v2915, 0
    %3144 = vmatpush.bf16.msra.mxu0 %v3077
    %3145 = vmatpush.bf16.msra.mxu0 %v3076
    %3146 = vmatpush.bf16.msra.mxu0 %v3075
    %3147 = vmatpush.bf16.msra.mxu0 %v3074
    %3148 = vmatpush.bf16.msra.mxu0 %v3073
    %3149 = vmatpush.bf16.msra.mxu0 %v3072
    %3150 = vmatpush.bf16.msra.mxu0 %v3071
    %3151 = vmatpush.bf16.msra.mxu0 %v3070
    %3152 = vmatmul.bf16.gmra.mxu0 %v2884
    %v3153 = vpop.f32.mrf.mxu0
    %v3154 = vadd.f32 %v2968, %v3153
    %v3155 = vpop.f32.mrf.mxu0
    %v3156 = vadd.f32 %v2968, %v3155
    %3157 = vmatmul.bf16.gmra.mxu0 %v2888
    %v3158 = vpop.f32.mrf.mxu0
    %v3159 = vadd.f32 %v2968, %v3158
    %v3160 = vpop.f32.mrf.mxu0
    %v3161 = vadd.f32 %v2968, %v3160
    %3162 = vmatmul.bf16.gmra.mxu0 %v2892
    %v3163 = vpop.f32.mrf.mxu0
    %v3164 = vadd.f32 %v2968, %v3163
    %v3165 = vpop.f32.mrf.mxu0
    %v3166 = vadd.f32 %v2968, %v3165
    %3167 = vmatmul.bf16.gmra.mxu0 %v2896
    %v3168 = vpop.f32.mrf.mxu0
    %v3169 = vadd.f32 %v2968, %v3168
    %v3170 = vpop.f32.mrf.mxu0
    %v3171 = vadd.f32 %v2968, %v3170
    %3172 = vmatmul.bf16.gmra.mxu0 %v2900
    %v3173 = vpop.f32.mrf.mxu0
    %v3174 = vadd.f32 %v2968, %v3173
    %v3175 = vpop.f32.mrf.mxu0
    %v3176 = vadd.f32 %v2968, %v3175
    %3177 = vmatmul.bf16.gmra.mxu0 %v2904
    %v3178 = vpop.f32.mrf.mxu0
    %v3179 = vadd.f32 %v2968, %v3178
    %v3180 = vpop.f32.mrf.mxu0
    %v3181 = vadd.f32 %v2968, %v3180
    %3182 = vmatmul.bf16.gmra.mxu0 %v2908
    %v3183 = vpop.f32.mrf.mxu0
    %v3184 = vadd.f32 %v2968, %v3183
    %v3185 = vpop.f32.mrf.mxu0
    %v3186 = vadd.f32 %v2968, %v3185
    %3187 = vmatmul.bf16.gmra.mxu0 %v2912
    %v3188 = vpop.f32.mrf.mxu0
    %v3189 = vadd.f32 %v2968, %v3188
    %v3190 = vpop.f32.mrf.mxu0
    %v3191 = vadd.f32 %v2968, %v3190
    %3192 = vdwg.mxu0
    %3193 = vmatpush.bf16.msra.mxu0 %v3085
    %3194 = vmatpush.bf16.msra.mxu0 %v3084
    %3195 = vmatpush.bf16.msra.mxu0 %v3083
    %3196 = vmatpush.bf16.msra.mxu0 %v3082
    %3197 = vmatpush.bf16.msra.mxu0 %v3081
    %3198 = vmatpush.bf16.msra.mxu0 %v3080
    %3199 = vmatpush.bf16.msra.mxu0 %v3079
    %3200 = vmatpush.bf16.msra.mxu0 %v3078
    %3201 = vmatmul.bf16.gmra.mxu0 %v2885
    %v3202 = vpop.f32.mrf.mxu0
    %v3203 = vadd.f32 %v3154, %v3202
    %v3204 = vpop.f32.mrf.mxu0
    %v3205 = vadd.f32 %v3156, %v3204
    %3206 = vmatmul.bf16.gmra.mxu0 %v2889
    %v3207 = vpop.f32.mrf.mxu0
    %v3208 = vadd.f32 %v3159, %v3207
    %v3209 = vpop.f32.mrf.mxu0
    %v3210 = vadd.f32 %v3161, %v3209
    %3211 = vmatmul.bf16.gmra.mxu0 %v2893
    %v3212 = vpop.f32.mrf.mxu0
    %v3213 = vadd.f32 %v3164, %v3212
    %v3214 = vpop.f32.mrf.mxu0
    %v3215 = vadd.f32 %v3166, %v3214
    %3216 = vmatmul.bf16.gmra.mxu0 %v2897
    %v3217 = vpop.f32.mrf.mxu0
    %v3218 = vadd.f32 %v3169, %v3217
    %v3219 = vpop.f32.mrf.mxu0
    %v3220 = vadd.f32 %v3171, %v3219
    %3221 = vmatmul.bf16.gmra.mxu0 %v2901
    %v3222 = vpop.f32.mrf.mxu0
    %v3223 = vadd.f32 %v3174, %v3222
    %v3224 = vpop.f32.mrf.mxu0
    %v3225 = vadd.f32 %v3176, %v3224
    %3226 = vmatmul.bf16.gmra.mxu0 %v2905
    %v3227 = vpop.f32.mrf.mxu0
    %v3228 = vadd.f32 %v3179, %v3227
    %v3229 = vpop.f32.mrf.mxu0
    %v3230 = vadd.f32 %v3181, %v3229
    %3231 = vmatmul.bf16.gmra.mxu0 %v2909
    %v3232 = vpop.f32.mrf.mxu0
    %v3233 = vadd.f32 %v3184, %v3232
    %v3234 = vpop.f32.mrf.mxu0
    %v3235 = vadd.f32 %v3186, %v3234
    %3236 = vmatmul.bf16.gmra.mxu0 %v2913
    %v3237 = vpop.f32.mrf.mxu0
    %v3238 = vadd.f32 %v3189, %v3237
    %v3239 = vpop.f32.mrf.mxu0
    %v3240 = vadd.f32 %v3191, %v3239
    %3241 = vdwg.mxu0
    %3242 = vmatpush.bf16.msra.mxu0 %v3093
    %3243 = vmatpush.bf16.msra.mxu0 %v3092
    %3244 = vmatpush.bf16.msra.mxu0 %v3091
    %3245 = vmatpush.bf16.msra.mxu0 %v3090
    %3246 = vmatpush.bf16.msra.mxu0 %v3089
    %3247 = vmatpush.bf16.msra.mxu0 %v3088
    %3248 = vmatpush.bf16.msra.mxu0 %v3087
    %3249 = vmatpush.bf16.msra.mxu0 %v3086
    %3250 = vmatmul.bf16.gmra.mxu0 %v2886
    %v3251 = vpop.f32.mrf.mxu0
    %v3252 = vadd.f32 %v3203, %v3251
    %v3253 = vpop.f32.mrf.mxu0
    %v3254 = vadd.f32 %v3205, %v3253
    %3255 = vmatmul.bf16.gmra.mxu0 %v2890
    %v3256 = vpop.f32.mrf.mxu0
    %v3257 = vadd.f32 %v3208, %v3256
    %v3258 = vpop.f32.mrf.mxu0
    %v3259 = vadd.f32 %v3210, %v3258
    %3260 = vmatmul.bf16.gmra.mxu0 %v2894
    %v3261 = vpop.f32.mrf.mxu0
    %v3262 = vadd.f32 %v3213, %v3261
    %v3263 = vpop.f32.mrf.mxu0
    %v3264 = vadd.f32 %v3215, %v3263
    %3265 = vmatmul.bf16.gmra.mxu0 %v2898
    %v3266 = vpop.f32.mrf.mxu0
    %v3267 = vadd.f32 %v3218, %v3266
    %v3268 = vpop.f32.mrf.mxu0
    %v3269 = vadd.f32 %v3220, %v3268
    %3270 = vmatmul.bf16.gmra.mxu0 %v2902
    %v3271 = vpop.f32.mrf.mxu0
    %v3272 = vadd.f32 %v3223, %v3271
    %v3273 = vpop.f32.mrf.mxu0
    %v3274 = vadd.f32 %v3225, %v3273
    %3275 = vmatmul.bf16.gmra.mxu0 %v2906
    %v3276 = vpop.f32.mrf.mxu0
    %v3277 = vadd.f32 %v3228, %v3276
    %v3278 = vpop.f32.mrf.mxu0
    %v3279 = vadd.f32 %v3230, %v3278
    %3280 = vmatmul.bf16.gmra.mxu0 %v2910
    %v3281 = vpop.f32.mrf.mxu0
    %v3282 = vadd.f32 %v3233, %v3281
    %v3283 = vpop.f32.mrf.mxu0
    %v3284 = vadd.f32 %v3235, %v3283
    %3285 = vmatmul.bf16.gmra.mxu0 %v2914
    %v3286 = vpop.f32.mrf.mxu0
    %v3287 = vadd.f32 %v3238, %v3286
    %v3288 = vpop.f32.mrf.mxu0
    %v3289 = vadd.f32 %v3240, %v3288
    %3290 = vdwg.mxu0
    %3291 = vmatpush.bf16.msra.mxu0 0
    %3292 = vmatpush.bf16.msra.mxu0 0
    %3293 = vmatpush.bf16.msra.mxu0 0
    %3294 = vmatpush.bf16.msra.mxu0 0
    %3295 = vmatpush.bf16.msra.mxu0 0
    %3296 = vmatpush.bf16.msra.mxu0 0
    %3297 = vmatpush.bf16.msra.mxu0 0
    %3298 = vmatpush.bf16.msra.mxu0 %v3094
    %3299 = vmatmul.bf16.gmra.mxu0 %v3121
    %v3300 = vpop.f32.mrf.mxu0
    %v3301 = vadd.f32 %v3252, %v3300
    %v3302 = vpop.f32.mrf.mxu0
    %v3303 = vadd.f32 %v3254, %v3302
    %3304 = vmatmul.bf16.gmra.mxu0 %v3124
    %v3305 = vpop.f32.mrf.mxu0
    %v3306 = vadd.f32 %v3257, %v3305
    %v3307 = vpop.f32.mrf.mxu0
    %v3308 = vadd.f32 %v3259, %v3307
    %3309 = vmatmul.bf16.gmra.mxu0 %v3127
    %v3310 = vpop.f32.mrf.mxu0
    %v3311 = vadd.f32 %v3262, %v3310
    %v3312 = vpop.f32.mrf.mxu0
    %v3313 = vadd.f32 %v3264, %v3312
    %3314 = vmatmul.bf16.gmra.mxu0 %v3130
    %v3315 = vpop.f32.mrf.mxu0
    %v3316 = vadd.f32 %v3267, %v3315
    %v3317 = vpop.f32.mrf.mxu0
    %v3318 = vadd.f32 %v3269, %v3317
    %3319 = vmatmul.bf16.gmra.mxu0 %v3133
    %v3320 = vpop.f32.mrf.mxu0
    %v3321 = vadd.f32 %v3272, %v3320
    %v3322 = vpop.f32.mrf.mxu0
    %v3323 = vadd.f32 %v3274, %v3322
    %3324 = vmatmul.bf16.gmra.mxu0 %v3136
    %v3325 = vpop.f32.mrf.mxu0
    %v3326 = vadd.f32 %v3277, %v3325
    %v3327 = vpop.f32.mrf.mxu0
    %v3328 = vadd.f32 %v3279, %v3327
    %3329 = vmatmul.bf16.gmra.mxu0 %v3139
    %v3330 = vpop.f32.mrf.mxu0
    %v3331 = vadd.f32 %v3282, %v3330
    %v3332 = vpop.f32.mrf.mxu0
    %v3333 = vadd.f32 %v3284, %v3332
    %3334 = vmatmul.bf16.gmra.mxu0 %v3142
    %v3335 = vpop.f32.mrf.mxu0
    %v3336 = vadd.f32 %v3287, %v3335
    %v3337 = vpop.f32.mrf.mxu0
    %v3338 = vadd.f32 %v3289, %v3337
    %3339 = vdwg.mxu0
    %v3340 = vmax.f32 %v3301, 0.0
    %v3341 = vmax.f32 %v3303, 0.0
    %v3342 = vmax.f32 %v3306, 0.0
    %v3343 = vmax.f32 %v3308, 0.0
    %v3344 = vmax.f32 %v3311, 0.0
    %v3345 = vmax.f32 %v3313, 0.0
    %v3346 = vmax.f32 %v3316, 0.0
    %v3347 = vmax.f32 %v3318, 0.0
    %v3348 = vmax.f32 %v3321, 0.0
    %v3349 = vmax.f32 %v3323, 0.0
    %v3350 = vmax.f32 %v3326, 0.0
    %v3351 = vmax.f32 %v3328, 0.0
    %v3352 = vmax.f32 %v3331, 0.0
    %v3353 = vmax.f32 %v3333, 0.0
    %v3354 = vmax.f32 %v3336, 0.0
    %v3355 = vmax.f32 %v3338, 0.0
    %v3356 = vmax.f32 %v3340, %v3341
    %v3357 = vmax.f32 %v3342, %v3343
    %v3358 = vmax.f32 %v3344, %v3345
    %v3359 = vmax.f32 %v3346, %v3347
    %v3360 = vmax.f32 %v3348, %v3349
    %v3361 = vmax.f32 %v3350, %v3351
    %v3362 = vmax.f32 %v3352, %v3353
    %v3363 = vmax.f32 %v3354, %v3355
    %v3364 = vrot.slane %v3356, 1
    %v3365 = vrot.slane %v3357, 1
    %v3366 = vrot.slane %v3358, 1
    %v3367 = vrot.slane %v3359, 1
    %v3368 = vrot.slane %v3360, 1
    %v3369 = vrot.slane %v3361, 1
    %v3370 = vrot.slane %v3362, 1
    %v3371 = vrot.slane %v3363, 1
    %v3372 = vmax.f32 %v3356, %v3364
    %v3373 = vmax.f32 %v3357, %v3365
    %v3374 = vmax.f32 %v3358, %v3366
    %v3375 = vmax.f32 %v3359, %v3367
    %v3376 = vmax.f32 %v3360, %v3368
    %v3377 = vmax.f32 %v3361, %v3369
    %v3378 = vmax.f32 %v3362, %v3370
    %v3379 = vmax.f32 %v3363, %v3371
    %v3380 = vld [vmem:[%s5] sm:$0xff]
    %v3381 = vld [vmem:[%s5 + $0x8] sm:$0xff]
    %v3382 = vld [vmem:[%s5 + $0x10] sm:$0xff]
    %v3383 = vld [vmem:[%s5 + $0x18] sm:$0xff]
    %v3384 = vmul.f32 %v3372, %v3380
    %v3385 = vmul.f32 %v3373, %v3381
    %v3386 = vmul.f32 %v3374, %v3382
    %v3387 = vmul.f32 %v3375, %v3383
    %v3388 = vmul.f32 %v3376, %v3380
    %v3389 = vmul.f32 %v3377, %v3381
    %v3390 = vmul.f32 %v3378, %v3382
    %v3391 = vmul.f32 %v3379, %v3383
    %v3392 = vsel %vm2110, %v3384, 0.0
    %3393 = vadd.xlane.f32.xlu0 %v3392
    %v3394 = vpop.xlane.xlu0 %3393
    %v3395 = vsel %vm2110, %v3385, 0.0
    %3396 = vadd.xlane.f32.xlu0 %v3395
    %v3397 = vpop.xlane.xlu0 %3396
    %v3398 = vsel %vm2110, %v3386, 0.0
    %3399 = vadd.xlane.f32.xlu0 %v3398
    %v3400 = vpop.xlane.xlu0 %3399
    %v3401 = vsel %vm2110, %v3387, 0.0
    %3402 = vadd.xlane.f32.xlu0 %v3401
    %v3403 = vpop.xlane.xlu0 %3402
    %v3404 = vsel %vm2110, %v3388, 0.0
    %3405 = vadd.xlane.f32.xlu0 %v3404
    %v3406 = vpop.xlane.xlu0 %3405
    %v3407 = vsel %vm2110, %v3389, 0.0
    %3408 = vadd.xlane.f32.xlu0 %v3407
    %v3409 = vpop.xlane.xlu0 %3408
    %v3410 = vsel %vm2110, %v3390, 0.0
    %3411 = vadd.xlane.f32.xlu0 %v3410
    %v3412 = vpop.xlane.xlu0 %3411
    %v3413 = vsel %vm2110, %v3391, 0.0
    %3414 = vadd.xlane.f32.xlu0 %v3413
    %v3415 = vpop.xlane.xlu0 %3414
    %v3424 = vlaneseq
    %v3425 = vand.u32 %v3424, 127
    %v3426 = vperm.slane %v3394, %v3425
    %v3427 = vperm.slane %v3397, %v3425
    %v3428 = vperm.slane %v3400, %v3425
    %v3429 = vperm.slane %v3403, %v3425
    %v3430 = vperm.slane %v3406, %v3425
    %v3431 = vperm.slane %v3409, %v3425
    %v3432 = vperm.slane %v3412, %v3425
    %v3433 = vperm.slane %v3415, %v3425
    %vm3434 = vcmask 1041409
    %v3435 = vsel %vm3434, %v3427, %v3426
    %vm3436 = vcmask 1042434
    %v3437 = vsel %vm3436, %v3428, %v3435
    %vm3438 = vcmask 1043459
    %v3439 = vsel %vm3438, %v3429, %v3437
    %v3440 = vsel %vm3434, %v3431, %v3430
    %v3441 = vsel %vm3436, %v3432, %v3440
    %v3442 = vsel %vm3438, %v3433, %v3441
    %vm3445 = vcmask 60416
    %v3446 = vsel %vm3445, %v3439, 0.0
    %3447 = vadd.xlane.f32.xlu0 %v3446
    %v3448 = vpop.xlane.xlu0 %3447
    %v3449 = vsel %vm3445, %v3442, 0.0
    %3450 = vadd.xlane.f32.xlu0 %v3449
    %v3451 = vpop.xlane.xlu0 %3450
    %v3454 = vperm.slane %v3448, %v3425
    %v3455 = vperm.slane %v3451, %v3425
    %v3456 = vsel %vm3434, %v3455, %v3454
    %vm3458 = vcmask 25600
    %v3459 = vsel %vm3458, %v3456, 0.0
    %3460 = vadd.xlane.f32.xlu0 %v3459
    %v3461 = vpop.xlane.xlu0 %3460
    %v3462 = vld [vmem:[#allocation3] sm:$0x1]
    %3464 = vset.pattern.permute.xlu0 0
    %3465 = vperm.xlu0 %3464, %v3462
    %v3466 = vpop.permute.xlu0 %3465
    %v3468 = vperm.slane %v3466, 0
    %v3469 = vadd.f32 %v3461, %v3468
    %v3471 = vperm.slane %v3469, %v3425
    %vm3473 = vcmask 8192
    %3474 = vst.msk [vmem:[#allocation4] sm:$0x1] %vm3473, %v3471
    // Predicated region
    $region30: #{cnn_forward.1} parent=1 // pred_check
      _
    $region31: #{cnn_forward.1} parent=1 // pred_check_branch
      %3476 = sbr.rel (0) target = $region33
    $region32: #{cnn_forward.1} parent=1 // pred_region
      %3478 = vsyncadd [#allocation5], 0
      %s3480 = sshll.u32 [#allocation4], 4
      %s3481 = int_to_ptr.vmem [resolvable:$true] %s3480
      %s3482 = sshll.u32 %s7, 4
      %s3483 = int_to_ptr.hbm [resolvable:$true] %s3482
      %3485 = dma.vmem_to_hbm [thread:$0]  %s3481, 16, %s3483, [#allocation5]
    $region33: #{cnn_forward.1} parent=1 // pred_fallthru
      _
    // Predicated region
    $region34: #{cnn_forward.1} parent=1 // pred_check
      _
    $region35: #{cnn_forward.1} parent=1 // pred_check_branch
      %3487 = sbr.rel (0) target = $region37
    $region36: #{cnn_forward.1} parent=1 // pred_region
      %3489 = dma.done [#allocation5], 16
    $region37: #{cnn_forward.1} parent=1 // pred_fallthru
      _
    %3490 = vsyncpa [#allocation5], 1

</llo_original>
